<compile_context>
chip_gen: v5e
topology: v5e:2x2
jax: 0.10.0
libtpu: 0.0.40
codegen_flags: <defaults>
</compile_context>

<pallas_src>
import functools
import math

import jax
import jax.numpy as jnp
from jax.experimental import pallas as pl
from jax.experimental.pallas import tpu as pltpu

# ---- small stand-in config for bert-base-uncased ----
VOCAB = 32
HIDDEN = 32
N_HEADS = 4
HEAD_DIM = HIDDEN // N_HEADS
N_LAYERS = 4          # >= 3 so hidden_states[-3] is a real encoder layer output
INTERMEDIATE = 64
MAX_POS = 16
TYPE_VOCAB = 2
LN_EPS = 1e-12
NEG_BIG = -1e9        # cross-sequence mask value (exp underflows to exactly 0)


# ---------------- fused Pallas kernel ----------------

def _encoder_qa_kernel(emb_ref, mask_ref, head_mask_ref,
                       emb_ln_g_ref, emb_ln_b_ref,
                       wqkv_ref, bqkv_ref, wo_ref, bo_ref,
                       ln1_g_ref, ln1_b_ref,
                       w1_ref, b1_ref, w2_ref, b2_ref,
                       ln2_g_ref, ln2_b_ref,
                       fc1_wa_ref, fc1_wb_ref, fc1_b_ref,
                       fc2_wt_ref, fc2_bt_ref,
                       out_ref):
    H, d, NH = HIDDEN, HEAD_DIM, N_HEADS
    BS = emb_ref.shape[0]
    scale = 1.0 / math.sqrt(d)
    inv_sqrt2 = 1.0 / math.sqrt(2.0)

    def layer_norm(y, g, b):
        mu = jnp.mean(y, axis=-1, keepdims=True)
        var = jnp.mean(jnp.square(y - mu), axis=-1, keepdims=True)
        return (y - mu) * jax.lax.rsqrt(var + LN_EPS) * g + b

    # hoisted once (outside the layer loop):
    head_mask = head_mask_ref[...]                       # (NH*BS, H)  0/1 per-head column select
    head_mask_q = head_mask * scale                      # fold 1/sqrt(d) into the query mask
    mask_t = jnp.tile(mask_ref[...], (NH, 1))            # (NH*BS, BS) additive attention mask

    # embeddings LayerNorm (dropout(0.1) -> identity in eval mode)
    x = layer_norm(emb_ref[...], emb_ln_g_ref[...], emb_ln_b_ref[...])  # (BS, H)

    h_minus3 = x
    for l in range(N_LAYERS):
        # ---- self-attention: fused QKV, all heads batched along sublanes ----
        qkv = (jnp.dot(x, wqkv_ref[l], preferred_element_type=jnp.float32)
               + bqkv_ref[l])                            # (BS, 3H)
        q = qkv[:, :H]                                   # per-tensor 32-lane slices only
        k = qkv[:, H:2 * H]
        v = qkv[:, 2 * H:3 * H]

        # queries stacked per head along sublanes: row h*BS+n = q[n] masked to head h cols
        q_stack = jnp.tile(q, (NH, 1)) * head_mask_q     # (NH*BS, H)

        # all heads' scores in ONE matmul (contract hidden dim, trans_b form)
        s = jax.lax.dot_general(q_stack, k, (((1,), (1,)), ((), ())),
                                preferred_element_type=jnp.float32)     # (NH*BS, BS)
        s = s + mask_t
        s = s - jnp.max(s, axis=-1, keepdims=True)
        p = jnp.exp(s)
        p = p / jnp.sum(p, axis=-1, keepdims=True)       # exact softmax (no approx recip)

        # all heads' contexts in ONE matmul; mask then fold the head blocks back
        ctx_full = (jnp.dot(p, v, preferred_element_type=jnp.float32)
                    * head_mask)                          # (NH*BS, H)
        ctx = ctx_full[0:BS]
        for h in range(1, NH):
            ctx = ctx + ctx_full[h * BS:(h + 1) * BS]     # (BS, H) lane-concat of heads

        # single full output projection (was 4 K=8 matmuls)
        attn = (jnp.dot(ctx, wo_ref[l], preferred_element_type=jnp.float32)
                + bo_ref[l])
        # Add & LayerNorm
        x = layer_norm(attn + x, ln1_g_ref[l], ln1_b_ref[l])

        # ---- feed-forward: GELU(x @ w1 + b1) @ w2 + b2, Add & LayerNorm ----
        inter = (jnp.dot(x, w1_ref[l], preferred_element_type=jnp.float32)
                 + b1_ref[l])
        inter = 0.5 * inter * (1.0 + jax.lax.erf(inter * inv_sqrt2))    # exact GELU
        ff = (jnp.dot(inter, w2_ref[l], preferred_element_type=jnp.float32)
              + b2_ref[l])
        x = layer_norm(ff + x, ln2_g_ref[l], ln2_b_ref[l])

        if l == N_LAYERS - 3:          # hidden_states[-3] (output of layer idx 1)
            h_minus3 = x

    # ---- QA head: cat([h[-1], h[-3]], -1) @ fc1 == h[-1]@fc1_wa + h[-3]@fc1_wb ----
    hqa = (jnp.dot(x, fc1_wa_ref[...], preferred_element_type=jnp.float32)
           + jnp.dot(h_minus3, fc1_wb_ref[...], preferred_element_type=jnp.float32)
           + fc1_b_ref[...])
    hqa = jnp.where(hqa >= 0.0, hqa, 0.01 * hqa)                      # LeakyReLU(0.01)
    # lane-major logits: (2, BS) via fc2^T @ hqa^T (trans_b dot_general, no transposes)
    logits_t = jax.lax.dot_general(fc2_wt_ref[...], hqa, (((1,), (1,)), ((), ())),
                                   preferred_element_type=jnp.float32) + fc2_bt_ref[...]
    out_ref[...] = logits_t.astype(out_ref.dtype)


def _zero_index_map(i, *, ndim):
    return (0,) * ndim


# ---------------- parameters (synthetic, deterministic) ----------------

def init_params(key):
    def dense(k, fi, fo):
        return (jax.random.normal(k, (fi, fo), jnp.float32) * 0.02,
                jnp.zeros((fo,), jnp.float32))

    H, I = HIDDEN, INTERMEDIATE
    keys = iter(jax.random.split(key, 6 + N_LAYERS))
    p = {
        "word_emb": jax.random.normal(next(keys), (VOCAB, H), jnp.float32) * 0.02,
        "pos_emb": jax.random.normal(next(keys), (MAX_POS, H), jnp.float32) * 0.02,
        "type_emb": jax.random.normal(next(keys), (TYPE_VOCAB, H), jnp.float32) * 0.02,
        "emb_ln_g": jnp.ones((1, H), jnp.float32),
        "emb_ln_b": jnp.zeros((1, H), jnp.float32),
    }
    names = ["wqkv", "bqkv", "wo", "bo", "ln1_g", "ln1_b",
             "w1", "b1", "w2", "b2", "ln2_g", "ln2_b"]
    stacks = {n: [] for n in names}
    for _ in range(N_LAYERS):
        lk = iter(jax.random.split(next(keys), 6))
        wq, bq = dense(next(lk), H, H)
        wk, bk = dense(next(lk), H, H)
        wv, bv = dense(next(lk), H, H)
        wo, bo = dense(next(lk), H, H)
        w1, b1 = dense(next(lk), H, I)
        w2, b2 = dense(next(lk), I, H)
        stacks["wqkv"].append(jnp.concatenate([wq, wk, wv], axis=1))   # (H, 3H)
        stacks["bqkv"].append(jnp.concatenate([bq, bk, bv]).reshape(1, 3 * H))
        stacks["wo"].append(wo)
        stacks["bo"].append(bo.reshape(1, H))
        stacks["ln1_g"].append(jnp.ones((1, H), jnp.float32))
        stacks["ln1_b"].append(jnp.zeros((1, H), jnp.float32))
        stacks["w1"].append(w1)
        stacks["b1"].append(b1.reshape(1, I))
        stacks["w2"].append(w2)
        stacks["b2"].append(b2.reshape(1, H))
        stacks["ln2_g"].append(jnp.ones((1, H), jnp.float32))
        stacks["ln2_b"].append(jnp.zeros((1, H), jnp.float32))
    for n in names:
        p[n] = jnp.stack(stacks[n])                                    # (L, ...)

    fc1_w, fc1_b = dense(next(keys), 2 * H, 2 * H)
    fc2_w, fc2_b = dense(next(keys), 2 * H, 2)
    p["fc1_wa"] = fc1_w[:H]          # rows acting on hidden[-1]
    p["fc1_wb"] = fc1_w[H:]          # rows acting on hidden[-3]
    p["fc1_b"] = fc1_b.reshape(1, 2 * H)
    p["fc2_wt"] = fc2_w.T            # (2, 2H): lane-major logits in-kernel
    p["fc2_bt"] = fc2_b.reshape(2, 1)
    return p


# ---------------- forward pass ----------------

def bert_qa_forward(params, input_ids, attention_mask, token_type_ids):
    B, S = input_ids.shape
    H = HIDDEN
    BS = B * S

    # --- embeddings (table gathers are plain-JAX glue; LN happens in-kernel) ---
    pos_ids = jnp.arange(S)
    emb = (params["word_emb"][input_ids]
           + params["pos_emb"][pos_ids][None, :, :]
           + params["type_emb"][token_type_ids])                      # (B, S, H)
    emb2d = emb.reshape(BS, H).astype(jnp.float32)

    # block-diagonal additive mask over the flattened token axis:
    #   same sequence   -> HF padding mask (1 - mask) * -10000
    #   cross sequence  -> -1e9 (softmax weight underflows to exactly 0)
    pad = (1.0 - attention_mask.astype(jnp.float32)) * -10000.0       # (B, S)
    batch_idx = jnp.repeat(jnp.arange(B), S)                          # (BS,)
    same = batch_idx[:, None] == batch_idx[None, :]
    full_mask = jnp.where(same, 0.0, NEG_BIG) + pad.reshape(1, BS)    # (BS, BS)

    # per-head column-selection mask for the sublane-stacked head layout:
    # row block h (rows h*BS..(h+1)*BS-1) keeps only columns h*d..(h+1)*d-1
    row_head = jnp.repeat(jnp.arange(N_HEADS), BS)                    # (NH*BS,)
    col_head = jnp.arange(H) // HEAD_DIM                              # (H,)
    head_mask = (row_head[:, None] == col_head[None, :]).astype(jnp.float32)

    operands = (
        emb2d, full_mask, head_mask,
        params["emb_ln_g"], params["emb_ln_b"],
        params["wqkv"], params["bqkv"], params["wo"], params["bo"],
        params["ln1_g"], params["ln1_b"],
        params["w1"], params["b1"], params["w2"], params["b2"],
        params["ln2_g"], params["ln2_b"],
        params["fc1_wa"], params["fc1_wb"], params["fc1_b"],
        params["fc2_wt"], params["fc2_bt"],
    )
    in_specs = [
        pl.BlockSpec(op.shape, functools.partial(_zero_index_map, ndim=op.ndim))
        for op in operands
    ]

    logits_t = pl.pallas_call(
        _encoder_qa_kernel,
        out_shape=jax.ShapeDtypeStruct((2, BS), jnp.float32),         # lane-major logits
        grid=(1,),
        in_specs=in_specs,
        out_specs=pl.BlockSpec((2, BS), lambda i: (0, 0)),
        compiler_params=pltpu.CompilerParams(dimension_semantics=("arbitrary",)),
    )(*operands)

    start_logits = logits_t[0].reshape(B, S)   # torch.split(1, dim=-1) + squeeze(-1)
    end_logits = logits_t[1].reshape(B, S)
    return start_logits, end_logits


if __name__ == "__main__":
    key = jax.random.PRNGKey(0)
    kp, kd = jax.random.split(key)
    params = init_params(kp)

    B, S = 2, 8
    k1, _ = jax.random.split(kd)
    input_ids = jax.random.randint(k1, (B, S), 0, VOCAB, dtype=jnp.int32)
    attention_mask = jnp.ones((B, S), jnp.int32).at[:, -2:].set(0)   # last 2 tokens padded
    token_type_ids = jnp.concatenate(
        [jnp.zeros((B, S // 2), jnp.int32), jnp.ones((B, S // 2), jnp.int32)], axis=1)

    fwd = jax.jit(functools.partial(bert_qa_forward, params))
    start_logits, end_logits = fwd(input_ids, attention_mask, token_type_ids)
    jax.block_until_ready((start_logits, end_logits))
    assert start_logits.shape == (B, S) and end_logits.shape == (B, S)
    assert start_logits.dtype == jnp.float32 and end_logits.dtype == jnp.float32
    assert bool(jnp.all(jnp.isfinite(start_logits))) and bool(jnp.all(jnp.isfinite(end_logits)))
    print("KERNEL_OK")
</pallas_src>

<mosaic_0001>
module attributes {stable_mosaic.version = 11 : i64} {
  func.func @_encoder_qa_kernel(%arg0: i32, %arg1: memref<16x32xf32, #tpu.memory_space<vmem>>, %arg2: memref<16x16xf32, #tpu.memory_space<vmem>>, %arg3: memref<64x32xf32, #tpu.memory_space<vmem>>, %arg4: memref<1x32xf32, #tpu.memory_space<vmem>>, %arg5: memref<1x32xf32, #tpu.memory_space<vmem>>, %arg6: memref<4x32x96xf32, #tpu.memory_space<vmem>>, %arg7: memref<4x1x96xf32, #tpu.memory_space<vmem>>, %arg8: memref<4x32x32xf32, #tpu.memory_space<vmem>>, %arg9: memref<4x1x32xf32, #tpu.memory_space<vmem>>, %arg10: memref<4x1x32xf32, #tpu.memory_space<vmem>>, %arg11: memref<4x1x32xf32, #tpu.memory_space<vmem>>, %arg12: memref<4x32x64xf32, #tpu.memory_space<vmem>>, %arg13: memref<4x1x64xf32, #tpu.memory_space<vmem>>, %arg14: memref<4x64x32xf32, #tpu.memory_space<vmem>>, %arg15: memref<4x1x32xf32, #tpu.memory_space<vmem>>, %arg16: memref<4x1x32xf32, #tpu.memory_space<vmem>>, %arg17: memref<4x1x32xf32, #tpu.memory_space<vmem>>, %arg18: memref<32x64xf32, #tpu.memory_space<vmem>>, %arg19: memref<32x64xf32, #tpu.memory_space<vmem>>, %arg20: memref<1x64xf32, #tpu.memory_space<vmem>>, %arg21: memref<2x64xf32, #tpu.memory_space<vmem>>, %arg22: memref<2x1xf32, #tpu.memory_space<vmem>>, %arg23: memref<2x16xf32, #tpu.memory_space<vmem>>) attributes {dimension_semantics = [#tpu.dimension_semantics<arbitrary>], iteration_bounds = array<i64: 1>, scalar_prefetch = 0 : i64, scratch_operands = 0 : i64, tpu.core_type = #tpu.core_type<tc>, window_params = [{pipeline_mode = #tpu.pipeline_mode<synchronous>, transform_indices = @transform_0, window_bounds = array<i64: 16, 32>}, {pipeline_mode = #tpu.pipeline_mode<synchronous>, transform_indices = @transform_1, window_bounds = array<i64: 16, 16>}, {pipeline_mode = #tpu.pipeline_mode<synchronous>, transform_indices = @transform_2, window_bounds = array<i64: 64, 32>}, {pipeline_mode = #tpu.pipeline_mode<synchronous>, transform_indices = @transform_3, window_bounds = array<i64: 1, 32>}, {pipeline_mode = #tpu.pipeline_mode<synchronous>, transform_indices = @transform_4, window_bounds = array<i64: 1, 32>}, {pipeline_mode = #tpu.pipeline_mode<synchronous>, transform_indices = @transform_5, window_bounds = array<i64: 4, 32, 96>}, {pipeline_mode = #tpu.pipeline_mode<synchronous>, transform_indices = @transform_6, window_bounds = array<i64: 4, 1, 96>}, {pipeline_mode = #tpu.pipeline_mode<synchronous>, transform_indices = @transform_7, window_bounds = array<i64: 4, 32, 32>}, {pipeline_mode = #tpu.pipeline_mode<synchronous>, transform_indices = @transform_8, window_bounds = array<i64: 4, 1, 32>}, {pipeline_mode = #tpu.pipeline_mode<synchronous>, transform_indices = @transform_9, window_bounds = array<i64: 4, 1, 32>}, {pipeline_mode = #tpu.pipeline_mode<synchronous>, transform_indices = @transform_10, window_bounds = array<i64: 4, 1, 32>}, {pipeline_mode = #tpu.pipeline_mode<synchronous>, transform_indices = @transform_11, window_bounds = array<i64: 4, 32, 64>}, {pipeline_mode = #tpu.pipeline_mode<synchronous>, transform_indices = @transform_12, window_bounds = array<i64: 4, 1, 64>}, {pipeline_mode = #tpu.pipeline_mode<synchronous>, transform_indices = @transform_13, window_bounds = array<i64: 4, 64, 32>}, {pipeline_mode = #tpu.pipeline_mode<synchronous>, transform_indices = @transform_14, window_bounds = array<i64: 4, 1, 32>}, {pipeline_mode = #tpu.pipeline_mode<synchronous>, transform_indices = @transform_15, window_bounds = array<i64: 4, 1, 32>}, {pipeline_mode = #tpu.pipeline_mode<synchronous>, transform_indices = @transform_16, window_bounds = array<i64: 4, 1, 32>}, {pipeline_mode = #tpu.pipeline_mode<synchronous>, transform_indices = @transform_17, window_bounds = array<i64: 32, 64>}, {pipeline_mode = #tpu.pipeline_mode<synchronous>, transform_indices = @transform_18, window_bounds = array<i64: 32, 64>}, {pipeline_mode = #tpu.pipeline_mode<synchronous>, transform_indices = @transform_19, window_bounds = array<i64: 1, 64>}, {pipeline_mode = #tpu.pipeline_mode<synchronous>, transform_indices = @transform_20, window_bounds = array<i64: 2, 64>}, {pipeline_mode = #tpu.pipeline_mode<synchronous>, transform_indices = @transform_21, window_bounds = array<i64: 2, 1>}, {pipeline_mode = #tpu.pipeline_mode<synchronous>, transform_indices = @transform_22, window_bounds = array<i64: 2, 16>}]} {
    %c0 = arith.constant 0 : index
    %c0_0 = arith.constant 0 : index
    %0 = vector.load %arg3[%c0, %c0_0] : memref<64x32xf32, #tpu.memory_space<vmem>>, vector<64x32xf32>
    %cst = arith.constant 0.353553385 : f32
    %1 = vector.broadcast %cst : f32 to vector<64x32xf32>
    %2 = arith.mulf %0, %1 : vector<64x32xf32>
    %c0_1 = arith.constant 0 : index
    %c0_2 = arith.constant 0 : index
    %3 = vector.load %arg2[%c0_1, %c0_2] : memref<16x16xf32, #tpu.memory_space<vmem>>, vector<16x16xf32>
    %4 = tpu.concatenate %3, %3, %3, %3 in 0 : vector<16x16xf32>, vector<16x16xf32>, vector<16x16xf32>, vector<16x16xf32> -> vector<64x16xf32>
    %c0_3 = arith.constant 0 : index
    %c0_4 = arith.constant 0 : index
    %5 = vector.load %arg1[%c0_3, %c0_4] : memref<16x32xf32, #tpu.memory_space<vmem>>, vector<16x32xf32>
    %c0_5 = arith.constant 0 : index
    %c0_6 = arith.constant 0 : index
    %6 = vector.load %arg4[%c0_5, %c0_6] : memref<1x32xf32, #tpu.memory_space<vmem>>, vector<1x32xf32>
    %c0_7 = arith.constant 0 : index
    %c0_8 = arith.constant 0 : index
    %7 = vector.load %arg5[%c0_7, %c0_8] : memref<1x32xf32, #tpu.memory_space<vmem>>, vector<1x32xf32>
    %cst_9 = arith.constant dense<0.000000e+00> : vector<16xf32>
    %8 = vector.multi_reduction <add>, %5, %cst_9 [1] : vector<16x32xf32> to vector<16xf32>
    %9 = vector.shape_cast %8 : vector<16xf32> to vector<16x1xf32>
    %cst_10 = arith.constant 3.200000e+01 : f32
    %10 = vector.broadcast %cst_10 : f32 to vector<16x1xf32>
    %11 = arith.divf %9, %10 : vector<16x1xf32>
    %12 = vector.broadcast %11 : vector<16x1xf32> to vector<16x32xf32>
    %13 = arith.subf %5, %12 : vector<16x32xf32>
    %14 = arith.mulf %13, %13 : vector<16x32xf32>
    %cst_11 = arith.constant dense<0.000000e+00> : vector<16xf32>
    %15 = vector.multi_reduction <add>, %14, %cst_11 [1] : vector<16x32xf32> to vector<16xf32>
    %16 = vector.shape_cast %15 : vector<16xf32> to vector<16x1xf32>
    %cst_12 = arith.constant 3.200000e+01 : f32
    %17 = vector.broadcast %cst_12 : f32 to vector<16x1xf32>
    %18 = arith.divf %16, %17 : vector<16x1xf32>
    %19 = vector.broadcast %11 : vector<16x1xf32> to vector<16x32xf32>
    %20 = arith.subf %5, %19 : vector<16x32xf32>
    %cst_13 = arith.constant 9.99999996E-13 : f32
    %21 = vector.broadcast %cst_13 : f32 to vector<16x1xf32>
    %22 = arith.addf %18, %21 : vector<16x1xf32>
    %23 = math.rsqrt %22 : vector<16x1xf32>
    %24 = vector.broadcast %23 : vector<16x1xf32> to vector<16x32xf32>
    %25 = arith.mulf %20, %24 : vector<16x32xf32>
    %26 = vector.broadcast %6 : vector<1x32xf32> to vector<16x32xf32>
    %27 = arith.mulf %25, %26 : vector<16x32xf32>
    %28 = vector.broadcast %7 : vector<1x32xf32> to vector<16x32xf32>
    %29 = arith.addf %27, %28 : vector<16x32xf32>
    %c0_14 = arith.constant 0 : index
    %c0_15 = arith.constant 0 : index
    %c0_16 = arith.constant 0 : index
    %30 = vector.load %arg6[%c0_14, %c0_15, %c0_16] : memref<4x32x96xf32, #tpu.memory_space<vmem>>, vector<1x32x96xf32>
    %31 = vector.shape_cast %30 : vector<1x32x96xf32> to vector<32x96xf32>
    %cst_17 = arith.constant dense<0.000000e+00> : vector<16x96xf32>
    %32 = tpu.matmul %29, %31, %cst_17 {dimension_numbers = #tpu.dot_dimension_numbers<[1], [0], [0], [1], [0, 0, 1, 1], [], []>} : vector<16x32xf32>, vector<32x96xf32>, vector<16x96xf32> -> vector<16x96xf32>
    %c0_18 = arith.constant 0 : index
    %c0_19 = arith.constant 0 : index
    %c0_20 = arith.constant 0 : index
    %33 = vector.load %arg7[%c0_18, %c0_19, %c0_20] : memref<4x1x96xf32, #tpu.memory_space<vmem>>, vector<1x1x96xf32>
    %34 = vector.shape_cast %33 : vector<1x1x96xf32> to vector<1x96xf32>
    %35 = vector.broadcast %34 : vector<1x96xf32> to vector<16x96xf32>
    %36 = arith.addf %32, %35 : vector<16x96xf32>
    %37 = vector.extract_strided_slice %36 {offsets = [0, 0], sizes = [16, 32], strides = [1, 1]} : vector<16x96xf32> to vector<16x32xf32>
    %38 = vector.extract_strided_slice %36 {offsets = [0, 32], sizes = [16, 32], strides = [1, 1]} : vector<16x96xf32> to vector<16x32xf32>
    %39 = vector.extract_strided_slice %36 {offsets = [0, 64], sizes = [16, 32], strides = [1, 1]} : vector<16x96xf32> to vector<16x32xf32>
    %40 = tpu.concatenate %37, %37, %37, %37 in 0 : vector<16x32xf32>, vector<16x32xf32>, vector<16x32xf32>, vector<16x32xf32> -> vector<64x32xf32>
    %41 = arith.mulf %40, %2 : vector<64x32xf32>
    %cst_21 = arith.constant dense<0.000000e+00> : vector<64x16xf32>
    %42 = tpu.matmul %41, %38, %cst_21 {dimension_numbers = #tpu.dot_dimension_numbers<[1], [1], [0], [0], [0, 0, 1, 0], [], []>} : vector<64x32xf32>, vector<16x32xf32>, vector<64x16xf32> -> vector<64x16xf32>
    %43 = arith.addf %42, %4 : vector<64x16xf32>
    %cst_22 = arith.constant dense<0xFF800000> : vector<64xf32>
    %44 = vector.multi_reduction <maximumf>, %43, %cst_22 [1] : vector<64x16xf32> to vector<64xf32>
    %45 = vector.shape_cast %44 : vector<64xf32> to vector<64x1xf32>
    %46 = vector.broadcast %45 : vector<64x1xf32> to vector<64x16xf32>
    %47 = arith.subf %43, %46 : vector<64x16xf32>
    %48 = math.exp %47 : vector<64x16xf32>
    %cst_23 = arith.constant dense<0.000000e+00> : vector<64xf32>
    %49 = vector.multi_reduction <add>, %48, %cst_23 [1] : vector<64x16xf32> to vector<64xf32>
    %50 = vector.shape_cast %49 : vector<64xf32> to vector<64x1xf32>
    %51 = vector.broadcast %50 : vector<64x1xf32> to vector<64x16xf32>
    %52 = arith.divf %48, %51 : vector<64x16xf32>
    %cst_24 = arith.constant dense<0.000000e+00> : vector<64x32xf32>
    %53 = tpu.matmul %52, %39, %cst_24 {dimension_numbers = #tpu.dot_dimension_numbers<[1], [0], [0], [1], [0, 0, 1, 1], [], []>} : vector<64x16xf32>, vector<16x32xf32>, vector<64x32xf32> -> vector<64x32xf32>
    %54 = arith.mulf %53, %0 : vector<64x32xf32>
    %55 = vector.extract_strided_slice %54 {offsets = [0, 0], sizes = [16, 32], strides = [1, 1]} : vector<64x32xf32> to vector<16x32xf32>
    %56 = vector.extract_strided_slice %54 {offsets = [16, 0], sizes = [16, 32], strides = [1, 1]} : vector<64x32xf32> to vector<16x32xf32>
    %57 = arith.addf %55, %56 : vector<16x32xf32>
    %58 = vector.extract_strided_slice %54 {offsets = [32, 0], sizes = [16, 32], strides = [1, 1]} : vector<64x32xf32> to vector<16x32xf32>
    %59 = arith.addf %57, %58 : vector<16x32xf32>
    %60 = vector.extract_strided_slice %54 {offsets = [48, 0], sizes = [16, 32], strides = [1, 1]} : vector<64x32xf32> to vector<16x32xf32>
    %61 = arith.addf %59, %60 : vector<16x32xf32>
    %c0_25 = arith.constant 0 : index
    %c0_26 = arith.constant 0 : index
    %c0_27 = arith.constant 0 : index
    %62 = vector.load %arg8[%c0_25, %c0_26, %c0_27] : memref<4x32x32xf32, #tpu.memory_space<vmem>>, vector<1x32x32xf32>
    %63 = vector.shape_cast %62 : vector<1x32x32xf32> to vector<32x32xf32>
    %cst_28 = arith.constant dense<0.000000e+00> : vector<16x32xf32>
    %64 = tpu.matmul %61, %63, %cst_28 {dimension_numbers = #tpu.dot_dimension_numbers<[1], [0], [0], [1], [0, 0, 1, 1], [], []>} : vector<16x32xf32>, vector<32x32xf32>, vector<16x32xf32> -> vector<16x32xf32>
    %c0_29 = arith.constant 0 : index
    %c0_30 = arith.constant 0 : index
    %c0_31 = arith.constant 0 : index
    %65 = vector.load %arg9[%c0_29, %c0_30, %c0_31] : memref<4x1x32xf32, #tpu.memory_space<vmem>>, vector<1x1x32xf32>
    %66 = vector.shape_cast %65 : vector<1x1x32xf32> to vector<1x32xf32>
    %67 = vector.broadcast %66 : vector<1x32xf32> to vector<16x32xf32>
    %68 = arith.addf %64, %67 : vector<16x32xf32>
    %69 = arith.addf %68, %29 : vector<16x32xf32>
    %c0_32 = arith.constant 0 : index
    %c0_33 = arith.constant 0 : index
    %c0_34 = arith.constant 0 : index
    %70 = vector.load %arg10[%c0_32, %c0_33, %c0_34] : memref<4x1x32xf32, #tpu.memory_space<vmem>>, vector<1x1x32xf32>
    %71 = vector.shape_cast %70 : vector<1x1x32xf32> to vector<1x32xf32>
    %c0_35 = arith.constant 0 : index
    %c0_36 = arith.constant 0 : index
    %c0_37 = arith.constant 0 : index
    %72 = vector.load %arg11[%c0_35, %c0_36, %c0_37] : memref<4x1x32xf32, #tpu.memory_space<vmem>>, vector<1x1x32xf32>
    %73 = vector.shape_cast %72 : vector<1x1x32xf32> to vector<1x32xf32>
    %cst_38 = arith.constant dense<0.000000e+00> : vector<16xf32>
    %74 = vector.multi_reduction <add>, %69, %cst_38 [1] : vector<16x32xf32> to vector<16xf32>
    %75 = vector.shape_cast %74 : vector<16xf32> to vector<16x1xf32>
    %cst_39 = arith.constant 3.200000e+01 : f32
    %76 = vector.broadcast %cst_39 : f32 to vector<16x1xf32>
    %77 = arith.divf %75, %76 : vector<16x1xf32>
    %78 = vector.broadcast %77 : vector<16x1xf32> to vector<16x32xf32>
    %79 = arith.subf %69, %78 : vector<16x32xf32>
    %80 = arith.mulf %79, %79 : vector<16x32xf32>
    %cst_40 = arith.constant dense<0.000000e+00> : vector<16xf32>
    %81 = vector.multi_reduction <add>, %80, %cst_40 [1] : vector<16x32xf32> to vector<16xf32>
    %82 = vector.shape_cast %81 : vector<16xf32> to vector<16x1xf32>
    %cst_41 = arith.constant 3.200000e+01 : f32
    %83 = vector.broadcast %cst_41 : f32 to vector<16x1xf32>
    %84 = arith.divf %82, %83 : vector<16x1xf32>
    %85 = vector.broadcast %77 : vector<16x1xf32> to vector<16x32xf32>
    %86 = arith.subf %69, %85 : vector<16x32xf32>
    %cst_42 = arith.constant 9.99999996E-13 : f32
    %87 = vector.broadcast %cst_42 : f32 to vector<16x1xf32>
    %88 = arith.addf %84, %87 : vector<16x1xf32>
    %89 = math.rsqrt %88 : vector<16x1xf32>
    %90 = vector.broadcast %89 : vector<16x1xf32> to vector<16x32xf32>
    %91 = arith.mulf %86, %90 : vector<16x32xf32>
    %92 = vector.broadcast %71 : vector<1x32xf32> to vector<16x32xf32>
    %93 = arith.mulf %91, %92 : vector<16x32xf32>
    %94 = vector.broadcast %73 : vector<1x32xf32> to vector<16x32xf32>
    %95 = arith.addf %93, %94 : vector<16x32xf32>
    %c0_43 = arith.constant 0 : index
    %c0_44 = arith.constant 0 : index
    %c0_45 = arith.constant 0 : index
    %96 = vector.load %arg12[%c0_43, %c0_44, %c0_45] : memref<4x32x64xf32, #tpu.memory_space<vmem>>, vector<1x32x64xf32>
    %97 = vector.shape_cast %96 : vector<1x32x64xf32> to vector<32x64xf32>
    %cst_46 = arith.constant dense<0.000000e+00> : vector<16x64xf32>
    %98 = tpu.matmul %95, %97, %cst_46 {dimension_numbers = #tpu.dot_dimension_numbers<[1], [0], [0], [1], [0, 0, 1, 1], [], []>} : vector<16x32xf32>, vector<32x64xf32>, vector<16x64xf32> -> vector<16x64xf32>
    %c0_47 = arith.constant 0 : index
    %c0_48 = arith.constant 0 : index
    %c0_49 = arith.constant 0 : index
    %99 = vector.load %arg13[%c0_47, %c0_48, %c0_49] : memref<4x1x64xf32, #tpu.memory_space<vmem>>, vector<1x1x64xf32>
    %100 = vector.shape_cast %99 : vector<1x1x64xf32> to vector<1x64xf32>
    %101 = vector.broadcast %100 : vector<1x64xf32> to vector<16x64xf32>
    %102 = arith.addf %98, %101 : vector<16x64xf32>
    %cst_50 = arith.constant 5.000000e-01 : f32
    %103 = vector.broadcast %cst_50 : f32 to vector<16x64xf32>
    %104 = arith.mulf %103, %102 : vector<16x64xf32>
    %cst_51 = arith.constant 0.707106769 : f32
    %105 = vector.broadcast %cst_51 : f32 to vector<16x64xf32>
    %106 = arith.mulf %102, %105 : vector<16x64xf32>
    %107 = math.erf %106 : vector<16x64xf32>
    %cst_52 = arith.constant 1.000000e+00 : f32
    %108 = vector.broadcast %cst_52 : f32 to vector<16x64xf32>
    %109 = arith.addf %108, %107 : vector<16x64xf32>
    %110 = arith.mulf %104, %109 : vector<16x64xf32>
    %c0_53 = arith.constant 0 : index
    %c0_54 = arith.constant 0 : index
    %c0_55 = arith.constant 0 : index
    %111 = vector.load %arg14[%c0_53, %c0_54, %c0_55] : memref<4x64x32xf32, #tpu.memory_space<vmem>>, vector<1x64x32xf32>
    %112 = vector.shape_cast %111 : vector<1x64x32xf32> to vector<64x32xf32>
    %cst_56 = arith.constant dense<0.000000e+00> : vector<16x32xf32>
    %113 = tpu.matmul %110, %112, %cst_56 {dimension_numbers = #tpu.dot_dimension_numbers<[1], [0], [0], [1], [0, 0, 1, 1], [], []>} : vector<16x64xf32>, vector<64x32xf32>, vector<16x32xf32> -> vector<16x32xf32>
    %c0_57 = arith.constant 0 : index
    %c0_58 = arith.constant 0 : index
    %c0_59 = arith.constant 0 : index
    %114 = vector.load %arg15[%c0_57, %c0_58, %c0_59] : memref<4x1x32xf32, #tpu.memory_space<vmem>>, vector<1x1x32xf32>
    %115 = vector.shape_cast %114 : vector<1x1x32xf32> to vector<1x32xf32>
    %116 = vector.broadcast %115 : vector<1x32xf32> to vector<16x32xf32>
    %117 = arith.addf %113, %116 : vector<16x32xf32>
    %118 = arith.addf %117, %95 : vector<16x32xf32>
    %c0_60 = arith.constant 0 : index
    %c0_61 = arith.constant 0 : index
    %c0_62 = arith.constant 0 : index
    %119 = vector.load %arg16[%c0_60, %c0_61, %c0_62] : memref<4x1x32xf32, #tpu.memory_space<vmem>>, vector<1x1x32xf32>
    %120 = vector.shape_cast %119 : vector<1x1x32xf32> to vector<1x32xf32>
    %c0_63 = arith.constant 0 : index
    %c0_64 = arith.constant 0 : index
    %c0_65 = arith.constant 0 : index
    %121 = vector.load %arg17[%c0_63, %c0_64, %c0_65] : memref<4x1x32xf32, #tpu.memory_space<vmem>>, vector<1x1x32xf32>
    %122 = vector.shape_cast %121 : vector<1x1x32xf32> to vector<1x32xf32>
    %cst_66 = arith.constant dense<0.000000e+00> : vector<16xf32>
    %123 = vector.multi_reduction <add>, %118, %cst_66 [1] : vector<16x32xf32> to vector<16xf32>
    %124 = vector.shape_cast %123 : vector<16xf32> to vector<16x1xf32>
    %cst_67 = arith.constant 3.200000e+01 : f32
    %125 = vector.broadcast %cst_67 : f32 to vector<16x1xf32>
    %126 = arith.divf %124, %125 : vector<16x1xf32>
    %127 = vector.broadcast %126 : vector<16x1xf32> to vector<16x32xf32>
    %128 = arith.subf %118, %127 : vector<16x32xf32>
    %129 = arith.mulf %128, %128 : vector<16x32xf32>
    %cst_68 = arith.constant dense<0.000000e+00> : vector<16xf32>
    %130 = vector.multi_reduction <add>, %129, %cst_68 [1] : vector<16x32xf32> to vector<16xf32>
    %131 = vector.shape_cast %130 : vector<16xf32> to vector<16x1xf32>
    %cst_69 = arith.constant 3.200000e+01 : f32
    %132 = vector.broadcast %cst_69 : f32 to vector<16x1xf32>
    %133 = arith.divf %131, %132 : vector<16x1xf32>
    %134 = vector.broadcast %126 : vector<16x1xf32> to vector<16x32xf32>
    %135 = arith.subf %118, %134 : vector<16x32xf32>
    %cst_70 = arith.constant 9.99999996E-13 : f32
    %136 = vector.broadcast %cst_70 : f32 to vector<16x1xf32>
    %137 = arith.addf %133, %136 : vector<16x1xf32>
    %138 = math.rsqrt %137 : vector<16x1xf32>
    %139 = vector.broadcast %138 : vector<16x1xf32> to vector<16x32xf32>
    %140 = arith.mulf %135, %139 : vector<16x32xf32>
    %141 = vector.broadcast %120 : vector<1x32xf32> to vector<16x32xf32>
    %142 = arith.mulf %140, %141 : vector<16x32xf32>
    %143 = vector.broadcast %122 : vector<1x32xf32> to vector<16x32xf32>
    %144 = arith.addf %142, %143 : vector<16x32xf32>
    %c1 = arith.constant 1 : index
    %c0_71 = arith.constant 0 : index
    %c0_72 = arith.constant 0 : index
    %145 = vector.load %arg6[%c1, %c0_71, %c0_72] : memref<4x32x96xf32, #tpu.memory_space<vmem>>, vector<1x32x96xf32>
    %146 = vector.shape_cast %145 : vector<1x32x96xf32> to vector<32x96xf32>
    %cst_73 = arith.constant dense<0.000000e+00> : vector<16x96xf32>
    %147 = tpu.matmul %144, %146, %cst_73 {dimension_numbers = #tpu.dot_dimension_numbers<[1], [0], [0], [1], [0, 0, 1, 1], [], []>} : vector<16x32xf32>, vector<32x96xf32>, vector<16x96xf32> -> vector<16x96xf32>
    %c1_74 = arith.constant 1 : index
    %c0_75 = arith.constant 0 : index
    %c0_76 = arith.constant 0 : index
    %148 = vector.load %arg7[%c1_74, %c0_75, %c0_76] : memref<4x1x96xf32, #tpu.memory_space<vmem>>, vector<1x1x96xf32>
    %149 = vector.shape_cast %148 : vector<1x1x96xf32> to vector<1x96xf32>
    %150 = vector.broadcast %149 : vector<1x96xf32> to vector<16x96xf32>
    %151 = arith.addf %147, %150 : vector<16x96xf32>
    %152 = vector.extract_strided_slice %151 {offsets = [0, 0], sizes = [16, 32], strides = [1, 1]} : vector<16x96xf32> to vector<16x32xf32>
    %153 = vector.extract_strided_slice %151 {offsets = [0, 32], sizes = [16, 32], strides = [1, 1]} : vector<16x96xf32> to vector<16x32xf32>
    %154 = vector.extract_strided_slice %151 {offsets = [0, 64], sizes = [16, 32], strides = [1, 1]} : vector<16x96xf32> to vector<16x32xf32>
    %155 = tpu.concatenate %152, %152, %152, %152 in 0 : vector<16x32xf32>, vector<16x32xf32>, vector<16x32xf32>, vector<16x32xf32> -> vector<64x32xf32>
    %156 = arith.mulf %155, %2 : vector<64x32xf32>
    %cst_77 = arith.constant dense<0.000000e+00> : vector<64x16xf32>
    %157 = tpu.matmul %156, %153, %cst_77 {dimension_numbers = #tpu.dot_dimension_numbers<[1], [1], [0], [0], [0, 0, 1, 0], [], []>} : vector<64x32xf32>, vector<16x32xf32>, vector<64x16xf32> -> vector<64x16xf32>
    %158 = arith.addf %157, %4 : vector<64x16xf32>
    %cst_78 = arith.constant dense<0xFF800000> : vector<64xf32>
    %159 = vector.multi_reduction <maximumf>, %158, %cst_78 [1] : vector<64x16xf32> to vector<64xf32>
    %160 = vector.shape_cast %159 : vector<64xf32> to vector<64x1xf32>
    %161 = vector.broadcast %160 : vector<64x1xf32> to vector<64x16xf32>
    %162 = arith.subf %158, %161 : vector<64x16xf32>
    %163 = math.exp %162 : vector<64x16xf32>
    %cst_79 = arith.constant dense<0.000000e+00> : vector<64xf32>
    %164 = vector.multi_reduction <add>, %163, %cst_79 [1] : vector<64x16xf32> to vector<64xf32>
    %165 = vector.shape_cast %164 : vector<64xf32> to vector<64x1xf32>
    %166 = vector.broadcast %165 : vector<64x1xf32> to vector<64x16xf32>
    %167 = arith.divf %163, %166 : vector<64x16xf32>
    %cst_80 = arith.constant dense<0.000000e+00> : vector<64x32xf32>
    %168 = tpu.matmul %167, %154, %cst_80 {dimension_numbers = #tpu.dot_dimension_numbers<[1], [0], [0], [1], [0, 0, 1, 1], [], []>} : vector<64x16xf32>, vector<16x32xf32>, vector<64x32xf32> -> vector<64x32xf32>
    %169 = arith.mulf %168, %0 : vector<64x32xf32>
    %170 = vector.extract_strided_slice %169 {offsets = [0, 0], sizes = [16, 32], strides = [1, 1]} : vector<64x32xf32> to vector<16x32xf32>
    %171 = vector.extract_strided_slice %169 {offsets = [16, 0], sizes = [16, 32], strides = [1, 1]} : vector<64x32xf32> to vector<16x32xf32>
    %172 = arith.addf %170, %171 : vector<16x32xf32>
    %173 = vector.extract_strided_slice %169 {offsets = [32, 0], sizes = [16, 32], strides = [1, 1]} : vector<64x32xf32> to vector<16x32xf32>
    %174 = arith.addf %172, %173 : vector<16x32xf32>
    %175 = vector.extract_strided_slice %169 {offsets = [48, 0], sizes = [16, 32], strides = [1, 1]} : vector<64x32xf32> to vector<16x32xf32>
    %176 = arith.addf %174, %175 : vector<16x32xf32>
    %c1_81 = arith.constant 1 : index
    %c0_82 = arith.constant 0 : index
    %c0_83 = arith.constant 0 : index
    %177 = vector.load %arg8[%c1_81, %c0_82, %c0_83] : memref<4x32x32xf32, #tpu.memory_space<vmem>>, vector<1x32x32xf32>
    %178 = vector.shape_cast %177 : vector<1x32x32xf32> to vector<32x32xf32>
    %cst_84 = arith.constant dense<0.000000e+00> : vector<16x32xf32>
    %179 = tpu.matmul %176, %178, %cst_84 {dimension_numbers = #tpu.dot_dimension_numbers<[1], [0], [0], [1], [0, 0, 1, 1], [], []>} : vector<16x32xf32>, vector<32x32xf32>, vector<16x32xf32> -> vector<16x32xf32>
    %c1_85 = arith.constant 1 : index
    %c0_86 = arith.constant 0 : index
    %c0_87 = arith.constant 0 : index
    %180 = vector.load %arg9[%c1_85, %c0_86, %c0_87] : memref<4x1x32xf32, #tpu.memory_space<vmem>>, vector<1x1x32xf32>
    %181 = vector.shape_cast %180 : vector<1x1x32xf32> to vector<1x32xf32>
    %182 = vector.broadcast %181 : vector<1x32xf32> to vector<16x32xf32>
    %183 = arith.addf %179, %182 : vector<16x32xf32>
    %184 = arith.addf %183, %144 : vector<16x32xf32>
    %c1_88 = arith.constant 1 : index
    %c0_89 = arith.constant 0 : index
    %c0_90 = arith.constant 0 : index
    %185 = vector.load %arg10[%c1_88, %c0_89, %c0_90] : memref<4x1x32xf32, #tpu.memory_space<vmem>>, vector<1x1x32xf32>
    %186 = vector.shape_cast %185 : vector<1x1x32xf32> to vector<1x32xf32>
    %c1_91 = arith.constant 1 : index
    %c0_92 = arith.constant 0 : index
    %c0_93 = arith.constant 0 : index
    %187 = vector.load %arg11[%c1_91, %c0_92, %c0_93] : memref<4x1x32xf32, #tpu.memory_space<vmem>>, vector<1x1x32xf32>
    %188 = vector.shape_cast %187 : vector<1x1x32xf32> to vector<1x32xf32>
    %cst_94 = arith.constant dense<0.000000e+00> : vector<16xf32>
    %189 = vector.multi_reduction <add>, %184, %cst_94 [1] : vector<16x32xf32> to vector<16xf32>
    %190 = vector.shape_cast %189 : vector<16xf32> to vector<16x1xf32>
    %cst_95 = arith.constant 3.200000e+01 : f32
    %191 = vector.broadcast %cst_95 : f32 to vector<16x1xf32>
    %192 = arith.divf %190, %191 : vector<16x1xf32>
    %193 = vector.broadcast %192 : vector<16x1xf32> to vector<16x32xf32>
    %194 = arith.subf %184, %193 : vector<16x32xf32>
    %195 = arith.mulf %194, %194 : vector<16x32xf32>
    %cst_96 = arith.constant dense<0.000000e+00> : vector<16xf32>
    %196 = vector.multi_reduction <add>, %195, %cst_96 [1] : vector<16x32xf32> to vector<16xf32>
    %197 = vector.shape_cast %196 : vector<16xf32> to vector<16x1xf32>
    %cst_97 = arith.constant 3.200000e+01 : f32
    %198 = vector.broadcast %cst_97 : f32 to vector<16x1xf32>
    %199 = arith.divf %197, %198 : vector<16x1xf32>
    %200 = vector.broadcast %192 : vector<16x1xf32> to vector<16x32xf32>
    %201 = arith.subf %184, %200 : vector<16x32xf32>
    %cst_98 = arith.constant 9.99999996E-13 : f32
    %202 = vector.broadcast %cst_98 : f32 to vector<16x1xf32>
    %203 = arith.addf %199, %202 : vector<16x1xf32>
    %204 = math.rsqrt %203 : vector<16x1xf32>
    %205 = vector.broadcast %204 : vector<16x1xf32> to vector<16x32xf32>
    %206 = arith.mulf %201, %205 : vector<16x32xf32>
    %207 = vector.broadcast %186 : vector<1x32xf32> to vector<16x32xf32>
    %208 = arith.mulf %206, %207 : vector<16x32xf32>
    %209 = vector.broadcast %188 : vector<1x32xf32> to vector<16x32xf32>
    %210 = arith.addf %208, %209 : vector<16x32xf32>
    %c1_99 = arith.constant 1 : index
    %c0_100 = arith.constant 0 : index
    %c0_101 = arith.constant 0 : index
    %211 = vector.load %arg12[%c1_99, %c0_100, %c0_101] : memref<4x32x64xf32, #tpu.memory_space<vmem>>, vector<1x32x64xf32>
    %212 = vector.shape_cast %211 : vector<1x32x64xf32> to vector<32x64xf32>
    %cst_102 = arith.constant dense<0.000000e+00> : vector<16x64xf32>
    %213 = tpu.matmul %210, %212, %cst_102 {dimension_numbers = #tpu.dot_dimension_numbers<[1], [0], [0], [1], [0, 0, 1, 1], [], []>} : vector<16x32xf32>, vector<32x64xf32>, vector<16x64xf32> -> vector<16x64xf32>
    %c1_103 = arith.constant 1 : index
    %c0_104 = arith.constant 0 : index
    %c0_105 = arith.constant 0 : index
    %214 = vector.load %arg13[%c1_103, %c0_104, %c0_105] : memref<4x1x64xf32, #tpu.memory_space<vmem>>, vector<1x1x64xf32>
    %215 = vector.shape_cast %214 : vector<1x1x64xf32> to vector<1x64xf32>
    %216 = vector.broadcast %215 : vector<1x64xf32> to vector<16x64xf32>
    %217 = arith.addf %213, %216 : vector<16x64xf32>
    %cst_106 = arith.constant 5.000000e-01 : f32
    %218 = vector.broadcast %cst_106 : f32 to vector<16x64xf32>
    %219 = arith.mulf %218, %217 : vector<16x64xf32>
    %cst_107 = arith.constant 0.707106769 : f32
    %220 = vector.broadcast %cst_107 : f32 to vector<16x64xf32>
    %221 = arith.mulf %217, %220 : vector<16x64xf32>
    %222 = math.erf %221 : vector<16x64xf32>
    %cst_108 = arith.constant 1.000000e+00 : f32
    %223 = vector.broadcast %cst_108 : f32 to vector<16x64xf32>
    %224 = arith.addf %223, %222 : vector<16x64xf32>
    %225 = arith.mulf %219, %224 : vector<16x64xf32>
    %c1_109 = arith.constant 1 : index
    %c0_110 = arith.constant 0 : index
    %c0_111 = arith.constant 0 : index
    %226 = vector.load %arg14[%c1_109, %c0_110, %c0_111] : memref<4x64x32xf32, #tpu.memory_space<vmem>>, vector<1x64x32xf32>
    %227 = vector.shape_cast %226 : vector<1x64x32xf32> to vector<64x32xf32>
    %cst_112 = arith.constant dense<0.000000e+00> : vector<16x32xf32>
    %228 = tpu.matmul %225, %227, %cst_112 {dimension_numbers = #tpu.dot_dimension_numbers<[1], [0], [0], [1], [0, 0, 1, 1], [], []>} : vector<16x64xf32>, vector<64x32xf32>, vector<16x32xf32> -> vector<16x32xf32>
    %c1_113 = arith.constant 1 : index
    %c0_114 = arith.constant 0 : index
    %c0_115 = arith.constant 0 : index
    %229 = vector.load %arg15[%c1_113, %c0_114, %c0_115] : memref<4x1x32xf32, #tpu.memory_space<vmem>>, vector<1x1x32xf32>
    %230 = vector.shape_cast %229 : vector<1x1x32xf32> to vector<1x32xf32>
    %231 = vector.broadcast %230 : vector<1x32xf32> to vector<16x32xf32>
    %232 = arith.addf %228, %231 : vector<16x32xf32>
    %233 = arith.addf %232, %210 : vector<16x32xf32>
    %c1_116 = arith.constant 1 : index
    %c0_117 = arith.constant 0 : index
    %c0_118 = arith.constant 0 : index
    %234 = vector.load %arg16[%c1_116, %c0_117, %c0_118] : memref<4x1x32xf32, #tpu.memory_space<vmem>>, vector<1x1x32xf32>
    %235 = vector.shape_cast %234 : vector<1x1x32xf32> to vector<1x32xf32>
    %c1_119 = arith.constant 1 : index
    %c0_120 = arith.constant 0 : index
    %c0_121 = arith.constant 0 : index
    %236 = vector.load %arg17[%c1_119, %c0_120, %c0_121] : memref<4x1x32xf32, #tpu.memory_space<vmem>>, vector<1x1x32xf32>
    %237 = vector.shape_cast %236 : vector<1x1x32xf32> to vector<1x32xf32>
    %cst_122 = arith.constant dense<0.000000e+00> : vector<16xf32>
    %238 = vector.multi_reduction <add>, %233, %cst_122 [1] : vector<16x32xf32> to vector<16xf32>
    %239 = vector.shape_cast %238 : vector<16xf32> to vector<16x1xf32>
    %cst_123 = arith.constant 3.200000e+01 : f32
    %240 = vector.broadcast %cst_123 : f32 to vector<16x1xf32>
    %241 = arith.divf %239, %240 : vector<16x1xf32>
    %242 = vector.broadcast %241 : vector<16x1xf32> to vector<16x32xf32>
    %243 = arith.subf %233, %242 : vector<16x32xf32>
    %244 = arith.mulf %243, %243 : vector<16x32xf32>
    %cst_124 = arith.constant dense<0.000000e+00> : vector<16xf32>
    %245 = vector.multi_reduction <add>, %244, %cst_124 [1] : vector<16x32xf32> to vector<16xf32>
    %246 = vector.shape_cast %245 : vector<16xf32> to vector<16x1xf32>
    %cst_125 = arith.constant 3.200000e+01 : f32
    %247 = vector.broadcast %cst_125 : f32 to vector<16x1xf32>
    %248 = arith.divf %246, %247 : vector<16x1xf32>
    %249 = vector.broadcast %241 : vector<16x1xf32> to vector<16x32xf32>
    %250 = arith.subf %233, %249 : vector<16x32xf32>
    %cst_126 = arith.constant 9.99999996E-13 : f32
    %251 = vector.broadcast %cst_126 : f32 to vector<16x1xf32>
    %252 = arith.addf %248, %251 : vector<16x1xf32>
    %253 = math.rsqrt %252 : vector<16x1xf32>
    %254 = vector.broadcast %253 : vector<16x1xf32> to vector<16x32xf32>
    %255 = arith.mulf %250, %254 : vector<16x32xf32>
    %256 = vector.broadcast %235 : vector<1x32xf32> to vector<16x32xf32>
    %257 = arith.mulf %255, %256 : vector<16x32xf32>
    %258 = vector.broadcast %237 : vector<1x32xf32> to vector<16x32xf32>
    %259 = arith.addf %257, %258 : vector<16x32xf32>
    %c2 = arith.constant 2 : index
    %c0_127 = arith.constant 0 : index
    %c0_128 = arith.constant 0 : index
    %260 = vector.load %arg6[%c2, %c0_127, %c0_128] : memref<4x32x96xf32, #tpu.memory_space<vmem>>, vector<1x32x96xf32>
    %261 = vector.shape_cast %260 : vector<1x32x96xf32> to vector<32x96xf32>
    %cst_129 = arith.constant dense<0.000000e+00> : vector<16x96xf32>
    %262 = tpu.matmul %259, %261, %cst_129 {dimension_numbers = #tpu.dot_dimension_numbers<[1], [0], [0], [1], [0, 0, 1, 1], [], []>} : vector<16x32xf32>, vector<32x96xf32>, vector<16x96xf32> -> vector<16x96xf32>
    %c2_130 = arith.constant 2 : index
    %c0_131 = arith.constant 0 : index
    %c0_132 = arith.constant 0 : index
    %263 = vector.load %arg7[%c2_130, %c0_131, %c0_132] : memref<4x1x96xf32, #tpu.memory_space<vmem>>, vector<1x1x96xf32>
    %264 = vector.shape_cast %263 : vector<1x1x96xf32> to vector<1x96xf32>
    %265 = vector.broadcast %264 : vector<1x96xf32> to vector<16x96xf32>
    %266 = arith.addf %262, %265 : vector<16x96xf32>
    %267 = vector.extract_strided_slice %266 {offsets = [0, 0], sizes = [16, 32], strides = [1, 1]} : vector<16x96xf32> to vector<16x32xf32>
    %268 = vector.extract_strided_slice %266 {offsets = [0, 32], sizes = [16, 32], strides = [1, 1]} : vector<16x96xf32> to vector<16x32xf32>
    %269 = vector.extract_strided_slice %266 {offsets = [0, 64], sizes = [16, 32], strides = [1, 1]} : vector<16x96xf32> to vector<16x32xf32>
    %270 = tpu.concatenate %267, %267, %267, %267 in 0 : vector<16x32xf32>, vector<16x32xf32>, vector<16x32xf32>, vector<16x32xf32> -> vector<64x32xf32>
    %271 = arith.mulf %270, %2 : vector<64x32xf32>
    %cst_133 = arith.constant dense<0.000000e+00> : vector<64x16xf32>
    %272 = tpu.matmul %271, %268, %cst_133 {dimension_numbers = #tpu.dot_dimension_numbers<[1], [1], [0], [0], [0, 0, 1, 0], [], []>} : vector<64x32xf32>, vector<16x32xf32>, vector<64x16xf32> -> vector<64x16xf32>
    %273 = arith.addf %272, %4 : vector<64x16xf32>
    %cst_134 = arith.constant dense<0xFF800000> : vector<64xf32>
    %274 = vector.multi_reduction <maximumf>, %273, %cst_134 [1] : vector<64x16xf32> to vector<64xf32>
    %275 = vector.shape_cast %274 : vector<64xf32> to vector<64x1xf32>
    %276 = vector.broadcast %275 : vector<64x1xf32> to vector<64x16xf32>
    %277 = arith.subf %273, %276 : vector<64x16xf32>
    %278 = math.exp %277 : vector<64x16xf32>
    %cst_135 = arith.constant dense<0.000000e+00> : vector<64xf32>
    %279 = vector.multi_reduction <add>, %278, %cst_135 [1] : vector<64x16xf32> to vector<64xf32>
    %280 = vector.shape_cast %279 : vector<64xf32> to vector<64x1xf32>
    %281 = vector.broadcast %280 : vector<64x1xf32> to vector<64x16xf32>
    %282 = arith.divf %278, %281 : vector<64x16xf32>
    %cst_136 = arith.constant dense<0.000000e+00> : vector<64x32xf32>
    %283 = tpu.matmul %282, %269, %cst_136 {dimension_numbers = #tpu.dot_dimension_numbers<[1], [0], [0], [1], [0, 0, 1, 1], [], []>} : vector<64x16xf32>, vector<16x32xf32>, vector<64x32xf32> -> vector<64x32xf32>
    %284 = arith.mulf %283, %0 : vector<64x32xf32>
    %285 = vector.extract_strided_slice %284 {offsets = [0, 0], sizes = [16, 32], strides = [1, 1]} : vector<64x32xf32> to vector<16x32xf32>
    %286 = vector.extract_strided_slice %284 {offsets = [16, 0], sizes = [16, 32], strides = [1, 1]} : vector<64x32xf32> to vector<16x32xf32>
    %287 = arith.addf %285, %286 : vector<16x32xf32>
    %288 = vector.extract_strided_slice %284 {offsets = [32, 0], sizes = [16, 32], strides = [1, 1]} : vector<64x32xf32> to vector<16x32xf32>
    %289 = arith.addf %287, %288 : vector<16x32xf32>
    %290 = vector.extract_strided_slice %284 {offsets = [48, 0], sizes = [16, 32], strides = [1, 1]} : vector<64x32xf32> to vector<16x32xf32>
    %291 = arith.addf %289, %290 : vector<16x32xf32>
    %c2_137 = arith.constant 2 : index
    %c0_138 = arith.constant 0 : index
    %c0_139 = arith.constant 0 : index
    %292 = vector.load %arg8[%c2_137, %c0_138, %c0_139] : memref<4x32x32xf32, #tpu.memory_space<vmem>>, vector<1x32x32xf32>
    %293 = vector.shape_cast %292 : vector<1x32x32xf32> to vector<32x32xf32>
    %cst_140 = arith.constant dense<0.000000e+00> : vector<16x32xf32>
    %294 = tpu.matmul %291, %293, %cst_140 {dimension_numbers = #tpu.dot_dimension_numbers<[1], [0], [0], [1], [0, 0, 1, 1], [], []>} : vector<16x32xf32>, vector<32x32xf32>, vector<16x32xf32> -> vector<16x32xf32>
    %c2_141 = arith.constant 2 : index
    %c0_142 = arith.constant 0 : index
    %c0_143 = arith.constant 0 : index
    %295 = vector.load %arg9[%c2_141, %c0_142, %c0_143] : memref<4x1x32xf32, #tpu.memory_space<vmem>>, vector<1x1x32xf32>
    %296 = vector.shape_cast %295 : vector<1x1x32xf32> to vector<1x32xf32>
    %297 = vector.broadcast %296 : vector<1x32xf32> to vector<16x32xf32>
    %298 = arith.addf %294, %297 : vector<16x32xf32>
    %299 = arith.addf %298, %259 : vector<16x32xf32>
    %c2_144 = arith.constant 2 : index
    %c0_145 = arith.constant 0 : index
    %c0_146 = arith.constant 0 : index
    %300 = vector.load %arg10[%c2_144, %c0_145, %c0_146] : memref<4x1x32xf32, #tpu.memory_space<vmem>>, vector<1x1x32xf32>
    %301 = vector.shape_cast %300 : vector<1x1x32xf32> to vector<1x32xf32>
    %c2_147 = arith.constant 2 : index
    %c0_148 = arith.constant 0 : index
    %c0_149 = arith.constant 0 : index
    %302 = vector.load %arg11[%c2_147, %c0_148, %c0_149] : memref<4x1x32xf32, #tpu.memory_space<vmem>>, vector<1x1x32xf32>
    %303 = vector.shape_cast %302 : vector<1x1x32xf32> to vector<1x32xf32>
    %cst_150 = arith.constant dense<0.000000e+00> : vector<16xf32>
    %304 = vector.multi_reduction <add>, %299, %cst_150 [1] : vector<16x32xf32> to vector<16xf32>
    %305 = vector.shape_cast %304 : vector<16xf32> to vector<16x1xf32>
    %cst_151 = arith.constant 3.200000e+01 : f32
    %306 = vector.broadcast %cst_151 : f32 to vector<16x1xf32>
    %307 = arith.divf %305, %306 : vector<16x1xf32>
    %308 = vector.broadcast %307 : vector<16x1xf32> to vector<16x32xf32>
    %309 = arith.subf %299, %308 : vector<16x32xf32>
    %310 = arith.mulf %309, %309 : vector<16x32xf32>
    %cst_152 = arith.constant dense<0.000000e+00> : vector<16xf32>
    %311 = vector.multi_reduction <add>, %310, %cst_152 [1] : vector<16x32xf32> to vector<16xf32>
    %312 = vector.shape_cast %311 : vector<16xf32> to vector<16x1xf32>
    %cst_153 = arith.constant 3.200000e+01 : f32
    %313 = vector.broadcast %cst_153 : f32 to vector<16x1xf32>
    %314 = arith.divf %312, %313 : vector<16x1xf32>
    %315 = vector.broadcast %307 : vector<16x1xf32> to vector<16x32xf32>
    %316 = arith.subf %299, %315 : vector<16x32xf32>
    %cst_154 = arith.constant 9.99999996E-13 : f32
    %317 = vector.broadcast %cst_154 : f32 to vector<16x1xf32>
    %318 = arith.addf %314, %317 : vector<16x1xf32>
    %319 = math.rsqrt %318 : vector<16x1xf32>
    %320 = vector.broadcast %319 : vector<16x1xf32> to vector<16x32xf32>
    %321 = arith.mulf %316, %320 : vector<16x32xf32>
    %322 = vector.broadcast %301 : vector<1x32xf32> to vector<16x32xf32>
    %323 = arith.mulf %321, %322 : vector<16x32xf32>
    %324 = vector.broadcast %303 : vector<1x32xf32> to vector<16x32xf32>
    %325 = arith.addf %323, %324 : vector<16x32xf32>
    %c2_155 = arith.constant 2 : index
    %c0_156 = arith.constant 0 : index
    %c0_157 = arith.constant 0 : index
    %326 = vector.load %arg12[%c2_155, %c0_156, %c0_157] : memref<4x32x64xf32, #tpu.memory_space<vmem>>, vector<1x32x64xf32>
    %327 = vector.shape_cast %326 : vector<1x32x64xf32> to vector<32x64xf32>
    %cst_158 = arith.constant dense<0.000000e+00> : vector<16x64xf32>
    %328 = tpu.matmul %325, %327, %cst_158 {dimension_numbers = #tpu.dot_dimension_numbers<[1], [0], [0], [1], [0, 0, 1, 1], [], []>} : vector<16x32xf32>, vector<32x64xf32>, vector<16x64xf32> -> vector<16x64xf32>
    %c2_159 = arith.constant 2 : index
    %c0_160 = arith.constant 0 : index
    %c0_161 = arith.constant 0 : index
    %329 = vector.load %arg13[%c2_159, %c0_160, %c0_161] : memref<4x1x64xf32, #tpu.memory_space<vmem>>, vector<1x1x64xf32>
    %330 = vector.shape_cast %329 : vector<1x1x64xf32> to vector<1x64xf32>
    %331 = vector.broadcast %330 : vector<1x64xf32> to vector<16x64xf32>
    %332 = arith.addf %328, %331 : vector<16x64xf32>
    %cst_162 = arith.constant 5.000000e-01 : f32
    %333 = vector.broadcast %cst_162 : f32 to vector<16x64xf32>
    %334 = arith.mulf %333, %332 : vector<16x64xf32>
    %cst_163 = arith.constant 0.707106769 : f32
    %335 = vector.broadcast %cst_163 : f32 to vector<16x64xf32>
    %336 = arith.mulf %332, %335 : vector<16x64xf32>
    %337 = math.erf %336 : vector<16x64xf32>
    %cst_164 = arith.constant 1.000000e+00 : f32
    %338 = vector.broadcast %cst_164 : f32 to vector<16x64xf32>
    %339 = arith.addf %338, %337 : vector<16x64xf32>
    %340 = arith.mulf %334, %339 : vector<16x64xf32>
    %c2_165 = arith.constant 2 : index
    %c0_166 = arith.constant 0 : index
    %c0_167 = arith.constant 0 : index
    %341 = vector.load %arg14[%c2_165, %c0_166, %c0_167] : memref<4x64x32xf32, #tpu.memory_space<vmem>>, vector<1x64x32xf32>
    %342 = vector.shape_cast %341 : vector<1x64x32xf32> to vector<64x32xf32>
    %cst_168 = arith.constant dense<0.000000e+00> : vector<16x32xf32>
    %343 = tpu.matmul %340, %342, %cst_168 {dimension_numbers = #tpu.dot_dimension_numbers<[1], [0], [0], [1], [0, 0, 1, 1], [], []>} : vector<16x64xf32>, vector<64x32xf32>, vector<16x32xf32> -> vector<16x32xf32>
    %c2_169 = arith.constant 2 : index
    %c0_170 = arith.constant 0 : index
    %c0_171 = arith.constant 0 : index
    %344 = vector.load %arg15[%c2_169, %c0_170, %c0_171] : memref<4x1x32xf32, #tpu.memory_space<vmem>>, vector<1x1x32xf32>
    %345 = vector.shape_cast %344 : vector<1x1x32xf32> to vector<1x32xf32>
    %346 = vector.broadcast %345 : vector<1x32xf32> to vector<16x32xf32>
    %347 = arith.addf %343, %346 : vector<16x32xf32>
    %348 = arith.addf %347, %325 : vector<16x32xf32>
    %c2_172 = arith.constant 2 : index
    %c0_173 = arith.constant 0 : index
    %c0_174 = arith.constant 0 : index
    %349 = vector.load %arg16[%c2_172, %c0_173, %c0_174] : memref<4x1x32xf32, #tpu.memory_space<vmem>>, vector<1x1x32xf32>
    %350 = vector.shape_cast %349 : vector<1x1x32xf32> to vector<1x32xf32>
    %c2_175 = arith.constant 2 : index
    %c0_176 = arith.constant 0 : index
    %c0_177 = arith.constant 0 : index
    %351 = vector.load %arg17[%c2_175, %c0_176, %c0_177] : memref<4x1x32xf32, #tpu.memory_space<vmem>>, vector<1x1x32xf32>
    %352 = vector.shape_cast %351 : vector<1x1x32xf32> to vector<1x32xf32>
    %cst_178 = arith.constant dense<0.000000e+00> : vector<16xf32>
    %353 = vector.multi_reduction <add>, %348, %cst_178 [1] : vector<16x32xf32> to vector<16xf32>
    %354 = vector.shape_cast %353 : vector<16xf32> to vector<16x1xf32>
    %cst_179 = arith.constant 3.200000e+01 : f32
    %355 = vector.broadcast %cst_179 : f32 to vector<16x1xf32>
    %356 = arith.divf %354, %355 : vector<16x1xf32>
    %357 = vector.broadcast %356 : vector<16x1xf32> to vector<16x32xf32>
    %358 = arith.subf %348, %357 : vector<16x32xf32>
    %359 = arith.mulf %358, %358 : vector<16x32xf32>
    %cst_180 = arith.constant dense<0.000000e+00> : vector<16xf32>
    %360 = vector.multi_reduction <add>, %359, %cst_180 [1] : vector<16x32xf32> to vector<16xf32>
    %361 = vector.shape_cast %360 : vector<16xf32> to vector<16x1xf32>
    %cst_181 = arith.constant 3.200000e+01 : f32
    %362 = vector.broadcast %cst_181 : f32 to vector<16x1xf32>
    %363 = arith.divf %361, %362 : vector<16x1xf32>
    %364 = vector.broadcast %356 : vector<16x1xf32> to vector<16x32xf32>
    %365 = arith.subf %348, %364 : vector<16x32xf32>
    %cst_182 = arith.constant 9.99999996E-13 : f32
    %366 = vector.broadcast %cst_182 : f32 to vector<16x1xf32>
    %367 = arith.addf %363, %366 : vector<16x1xf32>
    %368 = math.rsqrt %367 : vector<16x1xf32>
    %369 = vector.broadcast %368 : vector<16x1xf32> to vector<16x32xf32>
    %370 = arith.mulf %365, %369 : vector<16x32xf32>
    %371 = vector.broadcast %350 : vector<1x32xf32> to vector<16x32xf32>
    %372 = arith.mulf %370, %371 : vector<16x32xf32>
    %373 = vector.broadcast %352 : vector<1x32xf32> to vector<16x32xf32>
    %374 = arith.addf %372, %373 : vector<16x32xf32>
    %c3 = arith.constant 3 : index
    %c0_183 = arith.constant 0 : index
    %c0_184 = arith.constant 0 : index
    %375 = vector.load %arg6[%c3, %c0_183, %c0_184] : memref<4x32x96xf32, #tpu.memory_space<vmem>>, vector<1x32x96xf32>
    %376 = vector.shape_cast %375 : vector<1x32x96xf32> to vector<32x96xf32>
    %cst_185 = arith.constant dense<0.000000e+00> : vector<16x96xf32>
    %377 = tpu.matmul %374, %376, %cst_185 {dimension_numbers = #tpu.dot_dimension_numbers<[1], [0], [0], [1], [0, 0, 1, 1], [], []>} : vector<16x32xf32>, vector<32x96xf32>, vector<16x96xf32> -> vector<16x96xf32>
    %c3_186 = arith.constant 3 : index
    %c0_187 = arith.constant 0 : index
    %c0_188 = arith.constant 0 : index
    %378 = vector.load %arg7[%c3_186, %c0_187, %c0_188] : memref<4x1x96xf32, #tpu.memory_space<vmem>>, vector<1x1x96xf32>
    %379 = vector.shape_cast %378 : vector<1x1x96xf32> to vector<1x96xf32>
    %380 = vector.broadcast %379 : vector<1x96xf32> to vector<16x96xf32>
    %381 = arith.addf %377, %380 : vector<16x96xf32>
    %382 = vector.extract_strided_slice %381 {offsets = [0, 0], sizes = [16, 32], strides = [1, 1]} : vector<16x96xf32> to vector<16x32xf32>
    %383 = vector.extract_strided_slice %381 {offsets = [0, 32], sizes = [16, 32], strides = [1, 1]} : vector<16x96xf32> to vector<16x32xf32>
    %384 = vector.extract_strided_slice %381 {offsets = [0, 64], sizes = [16, 32], strides = [1, 1]} : vector<16x96xf32> to vector<16x32xf32>
    %385 = tpu.concatenate %382, %382, %382, %382 in 0 : vector<16x32xf32>, vector<16x32xf32>, vector<16x32xf32>, vector<16x32xf32> -> vector<64x32xf32>
    %386 = arith.mulf %385, %2 : vector<64x32xf32>
    %cst_189 = arith.constant dense<0.000000e+00> : vector<64x16xf32>
    %387 = tpu.matmul %386, %383, %cst_189 {dimension_numbers = #tpu.dot_dimension_numbers<[1], [1], [0], [0], [0, 0, 1, 0], [], []>} : vector<64x32xf32>, vector<16x32xf32>, vector<64x16xf32> -> vector<64x16xf32>
    %388 = arith.addf %387, %4 : vector<64x16xf32>
    %cst_190 = arith.constant dense<0xFF800000> : vector<64xf32>
    %389 = vector.multi_reduction <maximumf>, %388, %cst_190 [1] : vector<64x16xf32> to vector<64xf32>
    %390 = vector.shape_cast %389 : vector<64xf32> to vector<64x1xf32>
    %391 = vector.broadcast %390 : vector<64x1xf32> to vector<64x16xf32>
    %392 = arith.subf %388, %391 : vector<64x16xf32>
    %393 = math.exp %392 : vector<64x16xf32>
    %cst_191 = arith.constant dense<0.000000e+00> : vector<64xf32>
    %394 = vector.multi_reduction <add>, %393, %cst_191 [1] : vector<64x16xf32> to vector<64xf32>
    %395 = vector.shape_cast %394 : vector<64xf32> to vector<64x1xf32>
    %396 = vector.broadcast %395 : vector<64x1xf32> to vector<64x16xf32>
    %397 = arith.divf %393, %396 : vector<64x16xf32>
    %cst_192 = arith.constant dense<0.000000e+00> : vector<64x32xf32>
    %398 = tpu.matmul %397, %384, %cst_192 {dimension_numbers = #tpu.dot_dimension_numbers<[1], [0], [0], [1], [0, 0, 1, 1], [], []>} : vector<64x16xf32>, vector<16x32xf32>, vector<64x32xf32> -> vector<64x32xf32>
    %399 = arith.mulf %398, %0 : vector<64x32xf32>
    %400 = vector.extract_strided_slice %399 {offsets = [0, 0], sizes = [16, 32], strides = [1, 1]} : vector<64x32xf32> to vector<16x32xf32>
    %401 = vector.extract_strided_slice %399 {offsets = [16, 0], sizes = [16, 32], strides = [1, 1]} : vector<64x32xf32> to vector<16x32xf32>
    %402 = arith.addf %400, %401 : vector<16x32xf32>
    %403 = vector.extract_strided_slice %399 {offsets = [32, 0], sizes = [16, 32], strides = [1, 1]} : vector<64x32xf32> to vector<16x32xf32>
    %404 = arith.addf %402, %403 : vector<16x32xf32>
    %405 = vector.extract_strided_slice %399 {offsets = [48, 0], sizes = [16, 32], strides = [1, 1]} : vector<64x32xf32> to vector<16x32xf32>
    %406 = arith.addf %404, %405 : vector<16x32xf32>
    %c3_193 = arith.constant 3 : index
    %c0_194 = arith.constant 0 : index
    %c0_195 = arith.constant 0 : index
    %407 = vector.load %arg8[%c3_193, %c0_194, %c0_195] : memref<4x32x32xf32, #tpu.memory_space<vmem>>, vector<1x32x32xf32>
    %408 = vector.shape_cast %407 : vector<1x32x32xf32> to vector<32x32xf32>
    %cst_196 = arith.constant dense<0.000000e+00> : vector<16x32xf32>
    %409 = tpu.matmul %406, %408, %cst_196 {dimension_numbers = #tpu.dot_dimension_numbers<[1], [0], [0], [1], [0, 0, 1, 1], [], []>} : vector<16x32xf32>, vector<32x32xf32>, vector<16x32xf32> -> vector<16x32xf32>
    %c3_197 = arith.constant 3 : index
    %c0_198 = arith.constant 0 : index
    %c0_199 = arith.constant 0 : index
    %410 = vector.load %arg9[%c3_197, %c0_198, %c0_199] : memref<4x1x32xf32, #tpu.memory_space<vmem>>, vector<1x1x32xf32>
    %411 = vector.shape_cast %410 : vector<1x1x32xf32> to vector<1x32xf32>
    %412 = vector.broadcast %411 : vector<1x32xf32> to vector<16x32xf32>
    %413 = arith.addf %409, %412 : vector<16x32xf32>
    %414 = arith.addf %413, %374 : vector<16x32xf32>
    %c3_200 = arith.constant 3 : index
    %c0_201 = arith.constant 0 : index
    %c0_202 = arith.constant 0 : index
    %415 = vector.load %arg10[%c3_200, %c0_201, %c0_202] : memref<4x1x32xf32, #tpu.memory_space<vmem>>, vector<1x1x32xf32>
    %416 = vector.shape_cast %415 : vector<1x1x32xf32> to vector<1x32xf32>
    %c3_203 = arith.constant 3 : index
    %c0_204 = arith.constant 0 : index
    %c0_205 = arith.constant 0 : index
    %417 = vector.load %arg11[%c3_203, %c0_204, %c0_205] : memref<4x1x32xf32, #tpu.memory_space<vmem>>, vector<1x1x32xf32>
    %418 = vector.shape_cast %417 : vector<1x1x32xf32> to vector<1x32xf32>
    %cst_206 = arith.constant dense<0.000000e+00> : vector<16xf32>
    %419 = vector.multi_reduction <add>, %414, %cst_206 [1] : vector<16x32xf32> to vector<16xf32>
    %420 = vector.shape_cast %419 : vector<16xf32> to vector<16x1xf32>
    %cst_207 = arith.constant 3.200000e+01 : f32
    %421 = vector.broadcast %cst_207 : f32 to vector<16x1xf32>
    %422 = arith.divf %420, %421 : vector<16x1xf32>
    %423 = vector.broadcast %422 : vector<16x1xf32> to vector<16x32xf32>
    %424 = arith.subf %414, %423 : vector<16x32xf32>
    %425 = arith.mulf %424, %424 : vector<16x32xf32>
    %cst_208 = arith.constant dense<0.000000e+00> : vector<16xf32>
    %426 = vector.multi_reduction <add>, %425, %cst_208 [1] : vector<16x32xf32> to vector<16xf32>
    %427 = vector.shape_cast %426 : vector<16xf32> to vector<16x1xf32>
    %cst_209 = arith.constant 3.200000e+01 : f32
    %428 = vector.broadcast %cst_209 : f32 to vector<16x1xf32>
    %429 = arith.divf %427, %428 : vector<16x1xf32>
    %430 = vector.broadcast %422 : vector<16x1xf32> to vector<16x32xf32>
    %431 = arith.subf %414, %430 : vector<16x32xf32>
    %cst_210 = arith.constant 9.99999996E-13 : f32
    %432 = vector.broadcast %cst_210 : f32 to vector<16x1xf32>
    %433 = arith.addf %429, %432 : vector<16x1xf32>
    %434 = math.rsqrt %433 : vector<16x1xf32>
    %435 = vector.broadcast %434 : vector<16x1xf32> to vector<16x32xf32>
    %436 = arith.mulf %431, %435 : vector<16x32xf32>
    %437 = vector.broadcast %416 : vector<1x32xf32> to vector<16x32xf32>
    %438 = arith.mulf %436, %437 : vector<16x32xf32>
    %439 = vector.broadcast %418 : vector<1x32xf32> to vector<16x32xf32>
    %440 = arith.addf %438, %439 : vector<16x32xf32>
    %c3_211 = arith.constant 3 : index
    %c0_212 = arith.constant 0 : index
    %c0_213 = arith.constant 0 : index
    %441 = vector.load %arg12[%c3_211, %c0_212, %c0_213] : memref<4x32x64xf32, #tpu.memory_space<vmem>>, vector<1x32x64xf32>
    %442 = vector.shape_cast %441 : vector<1x32x64xf32> to vector<32x64xf32>
    %cst_214 = arith.constant dense<0.000000e+00> : vector<16x64xf32>
    %443 = tpu.matmul %440, %442, %cst_214 {dimension_numbers = #tpu.dot_dimension_numbers<[1], [0], [0], [1], [0, 0, 1, 1], [], []>} : vector<16x32xf32>, vector<32x64xf32>, vector<16x64xf32> -> vector<16x64xf32>
    %c3_215 = arith.constant 3 : index
    %c0_216 = arith.constant 0 : index
    %c0_217 = arith.constant 0 : index
    %444 = vector.load %arg13[%c3_215, %c0_216, %c0_217] : memref<4x1x64xf32, #tpu.memory_space<vmem>>, vector<1x1x64xf32>
    %445 = vector.shape_cast %444 : vector<1x1x64xf32> to vector<1x64xf32>
    %446 = vector.broadcast %445 : vector<1x64xf32> to vector<16x64xf32>
    %447 = arith.addf %443, %446 : vector<16x64xf32>
    %cst_218 = arith.constant 5.000000e-01 : f32
    %448 = vector.broadcast %cst_218 : f32 to vector<16x64xf32>
    %449 = arith.mulf %448, %447 : vector<16x64xf32>
    %cst_219 = arith.constant 0.707106769 : f32
    %450 = vector.broadcast %cst_219 : f32 to vector<16x64xf32>
    %451 = arith.mulf %447, %450 : vector<16x64xf32>
    %452 = math.erf %451 : vector<16x64xf32>
    %cst_220 = arith.constant 1.000000e+00 : f32
    %453 = vector.broadcast %cst_220 : f32 to vector<16x64xf32>
    %454 = arith.addf %453, %452 : vector<16x64xf32>
    %455 = arith.mulf %449, %454 : vector<16x64xf32>
    %c3_221 = arith.constant 3 : index
    %c0_222 = arith.constant 0 : index
    %c0_223 = arith.constant 0 : index
    %456 = vector.load %arg14[%c3_221, %c0_222, %c0_223] : memref<4x64x32xf32, #tpu.memory_space<vmem>>, vector<1x64x32xf32>
    %457 = vector.shape_cast %456 : vector<1x64x32xf32> to vector<64x32xf32>
    %cst_224 = arith.constant dense<0.000000e+00> : vector<16x32xf32>
    %458 = tpu.matmul %455, %457, %cst_224 {dimension_numbers = #tpu.dot_dimension_numbers<[1], [0], [0], [1], [0, 0, 1, 1], [], []>} : vector<16x64xf32>, vector<64x32xf32>, vector<16x32xf32> -> vector<16x32xf32>
    %c3_225 = arith.constant 3 : index
    %c0_226 = arith.constant 0 : index
    %c0_227 = arith.constant 0 : index
    %459 = vector.load %arg15[%c3_225, %c0_226, %c0_227] : memref<4x1x32xf32, #tpu.memory_space<vmem>>, vector<1x1x32xf32>
    %460 = vector.shape_cast %459 : vector<1x1x32xf32> to vector<1x32xf32>
    %461 = vector.broadcast %460 : vector<1x32xf32> to vector<16x32xf32>
    %462 = arith.addf %458, %461 : vector<16x32xf32>
    %463 = arith.addf %462, %440 : vector<16x32xf32>
    %c3_228 = arith.constant 3 : index
    %c0_229 = arith.constant 0 : index
    %c0_230 = arith.constant 0 : index
    %464 = vector.load %arg16[%c3_228, %c0_229, %c0_230] : memref<4x1x32xf32, #tpu.memory_space<vmem>>, vector<1x1x32xf32>
    %465 = vector.shape_cast %464 : vector<1x1x32xf32> to vector<1x32xf32>
    %c3_231 = arith.constant 3 : index
    %c0_232 = arith.constant 0 : index
    %c0_233 = arith.constant 0 : index
    %466 = vector.load %arg17[%c3_231, %c0_232, %c0_233] : memref<4x1x32xf32, #tpu.memory_space<vmem>>, vector<1x1x32xf32>
    %467 = vector.shape_cast %466 : vector<1x1x32xf32> to vector<1x32xf32>
    %cst_234 = arith.constant dense<0.000000e+00> : vector<16xf32>
    %468 = vector.multi_reduction <add>, %463, %cst_234 [1] : vector<16x32xf32> to vector<16xf32>
    %469 = vector.shape_cast %468 : vector<16xf32> to vector<16x1xf32>
    %cst_235 = arith.constant 3.200000e+01 : f32
    %470 = vector.broadcast %cst_235 : f32 to vector<16x1xf32>
    %471 = arith.divf %469, %470 : vector<16x1xf32>
    %472 = vector.broadcast %471 : vector<16x1xf32> to vector<16x32xf32>
    %473 = arith.subf %463, %472 : vector<16x32xf32>
    %474 = arith.mulf %473, %473 : vector<16x32xf32>
    %cst_236 = arith.constant dense<0.000000e+00> : vector<16xf32>
    %475 = vector.multi_reduction <add>, %474, %cst_236 [1] : vector<16x32xf32> to vector<16xf32>
    %476 = vector.shape_cast %475 : vector<16xf32> to vector<16x1xf32>
    %cst_237 = arith.constant 3.200000e+01 : f32
    %477 = vector.broadcast %cst_237 : f32 to vector<16x1xf32>
    %478 = arith.divf %476, %477 : vector<16x1xf32>
    %479 = vector.broadcast %471 : vector<16x1xf32> to vector<16x32xf32>
    %480 = arith.subf %463, %479 : vector<16x32xf32>
    %cst_238 = arith.constant 9.99999996E-13 : f32
    %481 = vector.broadcast %cst_238 : f32 to vector<16x1xf32>
    %482 = arith.addf %478, %481 : vector<16x1xf32>
    %483 = math.rsqrt %482 : vector<16x1xf32>
    %484 = vector.broadcast %483 : vector<16x1xf32> to vector<16x32xf32>
    %485 = arith.mulf %480, %484 : vector<16x32xf32>
    %486 = vector.broadcast %465 : vector<1x32xf32> to vector<16x32xf32>
    %487 = arith.mulf %485, %486 : vector<16x32xf32>
    %488 = vector.broadcast %467 : vector<1x32xf32> to vector<16x32xf32>
    %489 = arith.addf %487, %488 : vector<16x32xf32>
    %c0_239 = arith.constant 0 : index
    %c0_240 = arith.constant 0 : index
    %490 = vector.load %arg18[%c0_239, %c0_240] : memref<32x64xf32, #tpu.memory_space<vmem>>, vector<32x64xf32>
    %cst_241 = arith.constant dense<0.000000e+00> : vector<16x64xf32>
    %491 = tpu.matmul %489, %490, %cst_241 {dimension_numbers = #tpu.dot_dimension_numbers<[1], [0], [0], [1], [0, 0, 1, 1], [], []>} : vector<16x32xf32>, vector<32x64xf32>, vector<16x64xf32> -> vector<16x64xf32>
    %c0_242 = arith.constant 0 : index
    %c0_243 = arith.constant 0 : index
    %492 = vector.load %arg19[%c0_242, %c0_243] : memref<32x64xf32, #tpu.memory_space<vmem>>, vector<32x64xf32>
    %cst_244 = arith.constant dense<0.000000e+00> : vector<16x64xf32>
    %493 = tpu.matmul %259, %492, %cst_244 {dimension_numbers = #tpu.dot_dimension_numbers<[1], [0], [0], [1], [0, 0, 1, 1], [], []>} : vector<16x32xf32>, vector<32x64xf32>, vector<16x64xf32> -> vector<16x64xf32>
    %494 = arith.addf %491, %493 : vector<16x64xf32>
    %c0_245 = arith.constant 0 : index
    %c0_246 = arith.constant 0 : index
    %495 = vector.load %arg20[%c0_245, %c0_246] : memref<1x64xf32, #tpu.memory_space<vmem>>, vector<1x64xf32>
    %496 = vector.broadcast %495 : vector<1x64xf32> to vector<16x64xf32>
    %497 = arith.addf %494, %496 : vector<16x64xf32>
    %cst_247 = arith.constant 0.000000e+00 : f32
    %498 = vector.broadcast %cst_247 : f32 to vector<16x64xf32>
    %499 = arith.cmpf oge, %497, %498 : vector<16x64xf32>
    %cst_248 = arith.constant 0.00999999977 : f32
    %500 = vector.broadcast %cst_248 : f32 to vector<16x64xf32>
    %501 = arith.mulf %500, %497 : vector<16x64xf32>
    %502 = arith.select %499, %497, %501 : vector<16x64xi1>, vector<16x64xf32>
    %c0_249 = arith.constant 0 : index
    %c0_250 = arith.constant 0 : index
    %503 = vector.load %arg21[%c0_249, %c0_250] : memref<2x64xf32, #tpu.memory_space<vmem>>, vector<2x64xf32>
    %cst_251 = arith.constant dense<0.000000e+00> : vector<2x16xf32>
    %504 = tpu.matmul %503, %502, %cst_251 {dimension_numbers = #tpu.dot_dimension_numbers<[1], [1], [0], [0], [0, 0, 1, 0], [], []>} : vector<2x64xf32>, vector<16x64xf32>, vector<2x16xf32> -> vector<2x16xf32>
    %c0_252 = arith.constant 0 : index
    %c0_253 = arith.constant 0 : index
    %505 = vector.load %arg22[%c0_252, %c0_253] : memref<2x1xf32, #tpu.memory_space<vmem>>, vector<2x1xf32>
    %506 = vector.broadcast %505 : vector<2x1xf32> to vector<2x16xf32>
    %507 = arith.addf %504, %506 : vector<2x16xf32>
    %c0_254 = arith.constant 0 : index
    %c0_255 = arith.constant 0 : index
    %508 = vector.load %arg23[%c0_254, %c0_255] : memref<2x16xf32, #tpu.memory_space<vmem>>, vector<2x16xf32>
    tpu.vector_store %arg23[%c0_254, %c0_255], %507 {strides = array<i32>} : memref<2x16xf32, #tpu.memory_space<vmem>>, vector<2x16xf32>,
    return
  }
  func.func @transform_0(%arg0: i32) -> (i32, i32) {
    %c0_i32 = arith.constant 0 : i32
    %c0_i32_0 = arith.constant 0 : i32
    %c0_i32_1 = arith.constant 0 : i32
    return %c0_i32, %c0_i32_0 : i32, i32
  }
  func.func @transform_1(%arg0: i32) -> (i32, i32) {
    %c0_i32 = arith.constant 0 : i32
    %c0_i32_0 = arith.constant 0 : i32
    %c0_i32_1 = arith.constant 0 : i32
    return %c0_i32, %c0_i32_0 : i32, i32
  }
  func.func @transform_2(%arg0: i32) -> (i32, i32) {
    %c0_i32 = arith.constant 0 : i32
    %c0_i32_0 = arith.constant 0 : i32
    %c0_i32_1 = arith.constant 0 : i32
    return %c0_i32, %c0_i32_0 : i32, i32
  }
  func.func @transform_3(%arg0: i32) -> (i32, i32) {
    %c0_i32 = arith.constant 0 : i32
    %c0_i32_0 = arith.constant 0 : i32
    %c0_i32_1 = arith.constant 0 : i32
    return %c0_i32, %c0_i32_0 : i32, i32
  }
  func.func @transform_4(%arg0: i32) -> (i32, i32) {
    %c0_i32 = arith.constant 0 : i32
    %c0_i32_0 = arith.constant 0 : i32
    %c0_i32_1 = arith.constant 0 : i32
    return %c0_i32, %c0_i32_0 : i32, i32
  }
  func.func @transform_5(%arg0: i32) -> (i32, i32, i32) {
    %c0_i32 = arith.constant 0 : i32
    %c0_i32_0 = arith.constant 0 : i32
    %c0_i32_1 = arith.constant 0 : i32
    %c0_i32_2 = arith.constant 0 : i32
    return %c0_i32, %c0_i32_0, %c0_i32_1 : i32, i32, i32
  }
  func.func @transform_6(%arg0: i32) -> (i32, i32, i32) {
    %c0_i32 = arith.constant 0 : i32
    %c0_i32_0 = arith.constant 0 : i32
    %c0_i32_1 = arith.constant 0 : i32
    %c0_i32_2 = arith.constant 0 : i32
    return %c0_i32, %c0_i32_0, %c0_i32_1 : i32, i32, i32
  }
  func.func @transform_7(%arg0: i32) -> (i32, i32, i32) {
    %c0_i32 = arith.constant 0 : i32
    %c0_i32_0 = arith.constant 0 : i32
    %c0_i32_1 = arith.constant 0 : i32
    %c0_i32_2 = arith.constant 0 : i32
    return %c0_i32, %c0_i32_0, %c0_i32_1 : i32, i32, i32
  }
  func.func @transform_8(%arg0: i32) -> (i32, i32, i32) {
    %c0_i32 = arith.constant 0 : i32
    %c0_i32_0 = arith.constant 0 : i32
    %c0_i32_1 = arith.constant 0 : i32
    %c0_i32_2 = arith.constant 0 : i32
    return %c0_i32, %c0_i32_0, %c0_i32_1 : i32, i32, i32
  }
  func.func @transform_9(%arg0: i32) -> (i32, i32, i32) {
    %c0_i32 = arith.constant 0 : i32
    %c0_i32_0 = arith.constant 0 : i32
    %c0_i32_1 = arith.constant 0 : i32
    %c0_i32_2 = arith.constant 0 : i32
    return %c0_i32, %c0_i32_0, %c0_i32_1 : i32, i32, i32
  }
  func.func @transform_10(%arg0: i32) -> (i32, i32, i32) {
    %c0_i32 = arith.constant 0 : i32
    %c0_i32_0 = arith.constant 0 : i32
    %c0_i32_1 = arith.constant 0 : i32
    %c0_i32_2 = arith.constant 0 : i32
    return %c0_i32, %c0_i32_0, %c0_i32_1 : i32, i32, i32
  }
  func.func @transform_11(%arg0: i32) -> (i32, i32, i32) {
    %c0_i32 = arith.constant 0 : i32
    %c0_i32_0 = arith.constant 0 : i32
    %c0_i32_1 = arith.constant 0 : i32
    %c0_i32_2 = arith.constant 0 : i32
    return %c0_i32, %c0_i32_0, %c0_i32_1 : i32, i32, i32
  }
  func.func @transform_12(%arg0: i32) -> (i32, i32, i32) {
    %c0_i32 = arith.constant 0 : i32
    %c0_i32_0 = arith.constant 0 : i32
    %c0_i32_1 = arith.constant 0 : i32
    %c0_i32_2 = arith.constant 0 : i32
    return %c0_i32, %c0_i32_0, %c0_i32_1 : i32, i32, i32
  }
  func.func @transform_13(%arg0: i32) -> (i32, i32, i32) {
    %c0_i32 = arith.constant 0 : i32
    %c0_i32_0 = arith.constant 0 : i32
    %c0_i32_1 = arith.constant 0 : i32
    %c0_i32_2 = arith.constant 0 : i32
    return %c0_i32, %c0_i32_0, %c0_i32_1 : i32, i32, i32
  }
  func.func @transform_14(%arg0: i32) -> (i32, i32, i32) {
    %c0_i32 = arith.constant 0 : i32
    %c0_i32_0 = arith.constant 0 : i32
    %c0_i32_1 = arith.constant 0 : i32
    %c0_i32_2 = arith.constant 0 : i32
    return %c0_i32, %c0_i32_0, %c0_i32_1 : i32, i32, i32
  }
  func.func @transform_15(%arg0: i32) -> (i32, i32, i32) {
    %c0_i32 = arith.constant 0 : i32
    %c0_i32_0 = arith.constant 0 : i32
    %c0_i32_1 = arith.constant 0 : i32
    %c0_i32_2 = arith.constant 0 : i32
    return %c0_i32, %c0_i32_0, %c0_i32_1 : i32, i32, i32
  }
  func.func @transform_16(%arg0: i32) -> (i32, i32, i32) {
    %c0_i32 = arith.constant 0 : i32
    %c0_i32_0 = arith.constant 0 : i32
    %c0_i32_1 = arith.constant 0 : i32
    %c0_i32_2 = arith.constant 0 : i32
    return %c0_i32, %c0_i32_0, %c0_i32_1 : i32, i32, i32
  }
  func.func @transform_17(%arg0: i32) -> (i32, i32) {
    %c0_i32 = arith.constant 0 : i32
    %c0_i32_0 = arith.constant 0 : i32
    %c0_i32_1 = arith.constant 0 : i32
    return %c0_i32, %c0_i32_0 : i32, i32
  }
  func.func @transform_18(%arg0: i32) -> (i32, i32) {
    %c0_i32 = arith.constant 0 : i32
    %c0_i32_0 = arith.constant 0 : i32
    %c0_i32_1 = arith.constant 0 : i32
    return %c0_i32, %c0_i32_0 : i32, i32
  }
  func.func @transform_19(%arg0: i32) -> (i32, i32) {
    %c0_i32 = arith.constant 0 : i32
    %c0_i32_0 = arith.constant 0 : i32
    %c0_i32_1 = arith.constant 0 : i32
    return %c0_i32, %c0_i32_0 : i32, i32
  }
  func.func @transform_20(%arg0: i32) -> (i32, i32) {
    %c0_i32 = arith.constant 0 : i32
    %c0_i32_0 = arith.constant 0 : i32
    %c0_i32_1 = arith.constant 0 : i32
    return %c0_i32, %c0_i32_0 : i32, i32
  }
  func.func @transform_21(%arg0: i32) -> (i32, i32) {
    %c0_i32 = arith.constant 0 : i32
    %c0_i32_0 = arith.constant 0 : i32
    %c0_i32_1 = arith.constant 0 : i32
    return %c0_i32, %c0_i32_0 : i32, i32
  }
  func.func @transform_22(%arg0: i32) -> (i32, i32) {
    %c0_i32 = arith.constant 0 : i32
    %c0_i32_0 = arith.constant 0 : i32
    %c0_i32_1 = arith.constant 0 : i32
    return %c0_i32, %c0_i32_0 : i32, i32
  }
}

</mosaic_0001>

<llo_original>
// kernel: eq.22
$region0: #{eq.22}
  %s0 = inlined_call_operand.vmem [shape: s32[4,16], index: 0, kind: input, shape index: {}]
  %s1 = inlined_call_operand.vmem [shape: s32[64], index: 1, kind: output, shape index: {}]
  $region1: #{eq.22} parent=0
    #allocation0 [shape = 'u8[4096]{0}', space=vmem, size = 0x1000, scoped, tag = 'scoped mem for output reshape']
    #allocation1 [shape = 'u8[4096]{0}', space=vmem, size = 0x1000, scoped, tag = 'scoped mem for input reshape']
    %s3 = ssub.s32 16, 1
    %v4 = vld [vmem:[%s0] sm:%s3]
    %5 = vst [vmem:[#allocation1] sm:%s3] %v4
    %v6 = vld [vmem:[#allocation1] sm:$0x1]
    %vm7 = vcmask 130048
    %8 = vst.msk [vmem:[#allocation0] sm:$0x1] %vm7, %v6
    %s9 = scalar_lea.vmem [#allocation1], 3
    %v10 = vld [vmem:[%s9] sm:$0x1]
    %11 = vrot.lane.b32.xlu0 %v10, 48
    %v12 = vpop.permute.xlu0 %11
    %vm13 = vcmask 523648
    %14 = vst.msk [vmem:[#allocation0] sm:$0x1] %vm13, %v12
    %s15 = scalar_lea.vmem [#allocation1], 2
    %v16 = vld [vmem:[%s15] sm:$0x1]
    %17 = vrot.lane.b32.xlu0 %v16, 32
    %v18 = vpop.permute.xlu0 %17
    %vm19 = vcmask 392448
    %20 = vst.msk [vmem:[#allocation0] sm:$0x1] %vm19, %v18
    %s21 = scalar_lea.vmem [#allocation1], 1
    %v22 = vld [vmem:[%s21] sm:$0x1]
    %23 = vrot.lane.b32.xlu0 %v22, 16
    %v24 = vpop.permute.xlu0 %23
    %vm25 = vcmask 261248
    %26 = vst.msk [vmem:[#allocation0] sm:$0x1] %vm25, %v24
    %s28 = ssub.s32 2, 1
    %v29 = vld [vmem:[#allocation0] sm:%s28]
    %s31 = ssub.s32 2, 1
    %32 = vst [vmem:[%s1] sm:%s31] %v29

// kernel: squeeze.3
$region0: #{squeeze.3}
  %s0 = inlined_call_operand.vmem [shape: f32[16], index: 0, kind: input, shape index: {}]
  %s1 = inlined_call_operand.hbm [shape: f32[2,8], index: 1, kind: output, shape index: {}]
  $region1: #{squeeze.3} parent=0
    #allocation0 [shape = 'u8[1024]{0}', space=vmem, size = 0x400, scoped, tag = 'operand span for operand 1']
    #allocation1 [shape = 's32[1]{0}', space=sflag, size = 0x4, scoped, tag = 'scoped memory for squeeze.3']
    #allocation2 [shape = 'u8[4096]{0}', space=vmem, size = 0x1000, scoped, tag = 'scoped mem for output reshape']
    #allocation3 [shape = 'u8[4096]{0}', space=vmem, size = 0x1000, scoped, tag = 'scoped mem for input reshape']
    %2 = vsyncpa [#allocation1], 0
    %s4 = ssub.s32 2, 1
    %v5 = vld [vmem:[%s0] sm:%s4]
    %6 = vst [vmem:[#allocation3] sm:%s4] %v5
    %v7 = vld [vmem:[#allocation3] sm:$0x1]
    %vm8 = vcmask 64512
    %9 = vst.msk [vmem:[#allocation2] sm:$0x1] %vm8, %v7
    %v10 = vld [vmem:[#allocation3] sm:$0x1]
    %11 = vrot.lane.b32.xlu0 %v10, 120
    %v12 = vpop.permute.xlu0 %11
    %vm13 = vcmask 64512
    %s14 = scalar_lea.vmem [#allocation2], 1
    %15 = vst.msk [vmem:[%s14] sm:$0x1] %vm13, %v12
    %s17 = ssub.s32 4, 1
    %v18 = vld [vmem:[#allocation2] sm:%s17]
    %s20 = ssub.s32 4, 1
    %21 = vst [vmem:[#allocation0] sm:%s20] %v18
    %23 = vsyncadd [#allocation1], 0
    %s25 = sshll.u32 [#allocation0], 4
    %s26 = int_to_ptr.vmem [resolvable:$true] %s25
    %s27 = sshll.u32 %s1, 4
    %s28 = int_to_ptr.hbm [resolvable:$true] %s27
    %30 = dma.vmem_to_hbm [thread:$0]  %s26, 32, %s28, [#allocation1]
    %32 = dma.done [#allocation1], 32
    %33 = vsyncpa [#allocation1], 1

// kernel: bert_qa_forward.1
$region0: #{bert_qa_forward.1}
  #allocation0 [shape = 'u32[]', space=smem, size = 0x4, offset = 0x4, fixed_abs, tag = 'smem constant byte address 0x4 - core index']
  #allocation1 [shape = 'u32[72,128]{1,0:T(1,128)}', space=vmem, size = 0x9000, scoped, tag = 'internal scratch']
  %s0 = inlined_call_operand.vmem [shape: f32[16,32], index: 0, kind: input, shape index: {}]
  %s1 = inlined_call_operand.vmem [shape: f32[16,16], index: 1, kind: input, shape index: {}]
  %s2 = inlined_call_operand.vmem [shape: f32[64,32], index: 2, kind: input, shape index: {}]
  %s3 = inlined_call_operand.vmem [shape: f32[1,32], index: 3, kind: input, shape index: {}]
  %s4 = inlined_call_operand.vmem [shape: f32[1,32], index: 4, kind: input, shape index: {}]
  %s5 = inlined_call_operand.hbm [shape: f32[4,32,96], index: 5, kind: input, shape index: {}]
  %s6 = inlined_call_operand.vmem [shape: f32[4,1,96], index: 6, kind: input, shape index: {}]
  %s7 = inlined_call_operand.hbm [shape: f32[4,32,32], index: 7, kind: input, shape index: {}]
  %s8 = inlined_call_operand.vmem [shape: f32[4,1,32], index: 8, kind: input, shape index: {}, may-alias: {8,10,14,16}]
  %s9 = inlined_call_operand.vmem [shape: f32[4,1,32], index: 9, kind: input, shape index: {}, may-alias: {9,15}]
  %s10 = inlined_call_operand.vmem [shape: f32[4,1,32], index: 10, kind: input, shape index: {}, may-alias: {8,10,14,16}]
  %s11 = inlined_call_operand.vmem [shape: f32[4,32,64], index: 11, kind: input, shape index: {}]
  %s12 = inlined_call_operand.vmem [shape: f32[4,1,64], index: 12, kind: input, shape index: {}]
  %s13 = inlined_call_operand.vmem [shape: f32[4,64,32], index: 13, kind: input, shape index: {}]
  %s14 = inlined_call_operand.vmem [shape: f32[4,1,32], index: 14, kind: input, shape index: {}, may-alias: {8,10,14,16}]
  %s15 = inlined_call_operand.vmem [shape: f32[4,1,32], index: 15, kind: input, shape index: {}, may-alias: {9,15}]
  %s16 = inlined_call_operand.vmem [shape: f32[4,1,32], index: 16, kind: input, shape index: {}, may-alias: {8,10,14,16}]
  %s17 = inlined_call_operand.vmem [shape: f32[32,64], index: 17, kind: input, shape index: {}]
  %s18 = inlined_call_operand.vmem [shape: f32[32,64], index: 18, kind: input, shape index: {}]
  %s19 = inlined_call_operand.vmem [shape: f32[1,64], index: 19, kind: input, shape index: {}]
  %s20 = inlined_call_operand.vmem [shape: f32[2,64], index: 20, kind: input, shape index: {}]
  %s21 = inlined_call_operand.vmem [shape: f32[2,1], index: 21, kind: input, shape index: {}]
  %s22 = inlined_call_operand.vmem [shape: f32[2,16], index: 22, kind: output, shape index: {}]
  %s23 = sld [smem:[#allocation0]]
  $region106: #{bert_qa_forward.1} parent=0
    _
  %s25 = ssub.s32 1, %s23
  %s26 = scalar_select 0, %s25, %s23
  $region1: #{bert_qa_forward.1} parent=0
    #allocation2 [shape = 'u8[65536]{0}', space=vmem, size = 0x10000, scoped, tag = 'input window, operand 5, single buffered']
    #allocation3 [shape = 's32[1]{0}', space=sflag, size = 0x4, scoped, tag = 'scoped memory for bert_qa_forward.1']
    #allocation4 [shape = 'u8[65536]{0}', space=vmem, size = 0x10000, scoped, tag = 'input window, operand 7, single buffered']
    #allocation5 [shape = 's32[1]{0}', space=sflag, size = 0x4, scoped, tag = 'scoped memory for bert_qa_forward.1']
    %27 = vsyncpa [#allocation3], 0
    %28 = vsyncpa [#allocation5], 0
    // Predicated region
    $region2: #{bert_qa_forward.1} parent=1 // pred_check
      _
    $region3: #{bert_qa_forward.1} parent=1 // pred_check_branch
      %30 = sbr.rel (0) target = $region5
    $region4: #{bert_qa_forward.1} parent=1 // pred_region
      _
    $region5: #{bert_qa_forward.1} parent=1 // pred_fallthru
      _
    // Predicated region
    $region6: #{bert_qa_forward.1} parent=1 // pred_check
      _
    $region7: #{bert_qa_forward.1} parent=1 // pred_check_branch
      %32 = sbr.rel (0) target = $region9
    $region8: #{bert_qa_forward.1} parent=1 // pred_region
      _
    $region9: #{bert_qa_forward.1} parent=1 // pred_fallthru
      _
    // Predicated region
    $region10: #{bert_qa_forward.1} parent=1 // pred_check
      _
    $region11: #{bert_qa_forward.1} parent=1 // pred_check_branch
      %34 = sbr.rel (0) target = $region13
    $region12: #{bert_qa_forward.1} parent=1 // pred_region
      _
    $region13: #{bert_qa_forward.1} parent=1 // pred_fallthru
      _
    // Predicated region
    $region14: #{bert_qa_forward.1} parent=1 // pred_check
      _
    $region15: #{bert_qa_forward.1} parent=1 // pred_check_branch
      %36 = sbr.rel (0) target = $region17
    $region16: #{bert_qa_forward.1} parent=1 // pred_region
      _
    $region17: #{bert_qa_forward.1} parent=1 // pred_fallthru
      _
    // Predicated region
    $region18: #{bert_qa_forward.1} parent=1 // pred_check
      _
    $region19: #{bert_qa_forward.1} parent=1 // pred_check_branch
      %38 = sbr.rel (0) target = $region21
    $region20: #{bert_qa_forward.1} parent=1 // pred_region
      _
    $region21: #{bert_qa_forward.1} parent=1 // pred_fallthru
      _
    // Predicated region
    $region22: #{bert_qa_forward.1} parent=1 // pred_check
      _
    $region23: #{bert_qa_forward.1} parent=1 // pred_check_branch
      %40 = sbr.rel (0) target = $region25
    $region24: #{bert_qa_forward.1} parent=1 // pred_region
      %42 = vsyncadd [#allocation3], 0
      %s43 = sshll.u32 %s5, 4
      %s44 = int_to_ptr.hbm [resolvable:$true] %s43
      %s45 = sshll.u32 [#allocation2], 4
      %s46 = int_to_ptr.vmem [resolvable:$true] %s45
      %51 = dma.hbm_to_vmem [thread:$0]  %s44, 2048, %s46, [#allocation3], 128, 128, 8
    $region25: #{bert_qa_forward.1} parent=1 // pred_fallthru
      _
    // Predicated region
    $region26: #{bert_qa_forward.1} parent=1 // pred_check
      _
    $region27: #{bert_qa_forward.1} parent=1 // pred_check_branch
      %53 = sbr.rel (0) target = $region29
    $region28: #{bert_qa_forward.1} parent=1 // pred_region
      _
    $region29: #{bert_qa_forward.1} parent=1 // pred_fallthru
      _
    // Predicated region
    $region30: #{bert_qa_forward.1} parent=1 // pred_check
      _
    $region31: #{bert_qa_forward.1} parent=1 // pred_check_branch
      %55 = sbr.rel (0) target = $region33
    $region32: #{bert_qa_forward.1} parent=1 // pred_region
      %57 = vsyncadd [#allocation5], 0
      %s58 = sshll.u32 %s7, 4
      %s59 = int_to_ptr.hbm [resolvable:$true] %s58
      %s60 = sshll.u32 [#allocation4], 4
      %s61 = int_to_ptr.vmem [resolvable:$true] %s60
      %66 = dma.hbm_to_vmem [thread:$0]  %s59, 2048, %s61, [#allocation5], 128, 128, 8
    $region33: #{bert_qa_forward.1} parent=1 // pred_fallthru
      _
    // Predicated region
    $region34: #{bert_qa_forward.1} parent=1 // pred_check
      _
    $region35: #{bert_qa_forward.1} parent=1 // pred_check_branch
      %68 = sbr.rel (0) target = $region37
    $region36: #{bert_qa_forward.1} parent=1 // pred_region
      _
    $region37: #{bert_qa_forward.1} parent=1 // pred_fallthru
      _
    // Predicated region
    $region38: #{bert_qa_forward.1} parent=1 // pred_check
      _
    $region39: #{bert_qa_forward.1} parent=1 // pred_check_branch
      %70 = sbr.rel (0) target = $region41
    $region40: #{bert_qa_forward.1} parent=1 // pred_region
      _
    $region41: #{bert_qa_forward.1} parent=1 // pred_fallthru
      _
    // Predicated region
    $region42: #{bert_qa_forward.1} parent=1 // pred_check
      _
    $region43: #{bert_qa_forward.1} parent=1 // pred_check_branch
      %72 = sbr.rel (0) target = $region45
    $region44: #{bert_qa_forward.1} parent=1 // pred_region
      _
    $region45: #{bert_qa_forward.1} parent=1 // pred_fallthru
      _
    // Predicated region
    $region46: #{bert_qa_forward.1} parent=1 // pred_check
      _
    $region47: #{bert_qa_forward.1} parent=1 // pred_check_branch
      %74 = sbr.rel (0) target = $region49
    $region48: #{bert_qa_forward.1} parent=1 // pred_region
      _
    $region49: #{bert_qa_forward.1} parent=1 // pred_fallthru
      _
    // Predicated region
    $region50: #{bert_qa_forward.1} parent=1 // pred_check
      _
    $region51: #{bert_qa_forward.1} parent=1 // pred_check_branch
      %76 = sbr.rel (0) target = $region53
    $region52: #{bert_qa_forward.1} parent=1 // pred_region
      _
    $region53: #{bert_qa_forward.1} parent=1 // pred_fallthru
      _
    // Predicated region
    $region54: #{bert_qa_forward.1} parent=1 // pred_check
      _
    $region55: #{bert_qa_forward.1} parent=1 // pred_check_branch
      %78 = sbr.rel (0) target = $region57
    $region56: #{bert_qa_forward.1} parent=1 // pred_region
      _
    $region57: #{bert_qa_forward.1} parent=1 // pred_fallthru
      _
    // Predicated region
    $region58: #{bert_qa_forward.1} parent=1 // pred_check
      _
    $region59: #{bert_qa_forward.1} parent=1 // pred_check_branch
      %80 = sbr.rel (0) target = $region61
    $region60: #{bert_qa_forward.1} parent=1 // pred_region
      _
    $region61: #{bert_qa_forward.1} parent=1 // pred_fallthru
      _
    // Predicated region
    $region62: #{bert_qa_forward.1} parent=1 // pred_check
      _
    $region63: #{bert_qa_forward.1} parent=1 // pred_check_branch
      %82 = sbr.rel (0) target = $region65
    $region64: #{bert_qa_forward.1} parent=1 // pred_region
      _
    $region65: #{bert_qa_forward.1} parent=1 // pred_fallthru
      _
    // Predicated region
    $region66: #{bert_qa_forward.1} parent=1 // pred_check
      _
    $region67: #{bert_qa_forward.1} parent=1 // pred_check_branch
      %84 = sbr.rel (0) target = $region69
    $region68: #{bert_qa_forward.1} parent=1 // pred_region
      _
    $region69: #{bert_qa_forward.1} parent=1 // pred_fallthru
      _
    // Predicated region
    $region70: #{bert_qa_forward.1} parent=1 // pred_check
      _
    $region71: #{bert_qa_forward.1} parent=1 // pred_check_branch
      %86 = sbr.rel (0) target = $region73
    $region72: #{bert_qa_forward.1} parent=1 // pred_region
      _
    $region73: #{bert_qa_forward.1} parent=1 // pred_fallthru
      _
    // Predicated region
    $region74: #{bert_qa_forward.1} parent=1 // pred_check
      _
    $region75: #{bert_qa_forward.1} parent=1 // pred_check_branch
      %88 = sbr.rel (0) target = $region77
    $region76: #{bert_qa_forward.1} parent=1 // pred_region
      _
    $region77: #{bert_qa_forward.1} parent=1 // pred_fallthru
      _
    // Predicated region
    $region78: #{bert_qa_forward.1} parent=1 // pred_check
      _
    $region79: #{bert_qa_forward.1} parent=1 // pred_check_branch
      %90 = sbr.rel (0) target = $region81
    $region80: #{bert_qa_forward.1} parent=1 // pred_region
      _
    $region81: #{bert_qa_forward.1} parent=1 // pred_fallthru
      _
    // Predicated region
    $region82: #{bert_qa_forward.1} parent=1 // pred_check
      _
    $region83: #{bert_qa_forward.1} parent=1 // pred_check_branch
      %92 = sbr.rel (0) target = $region85
    $region84: #{bert_qa_forward.1} parent=1 // pred_region
      _
    $region85: #{bert_qa_forward.1} parent=1 // pred_fallthru
      _
    // Predicated region
    $region86: #{bert_qa_forward.1} parent=1 // pred_check
      _
    $region87: #{bert_qa_forward.1} parent=1 // pred_check_branch
      %94 = sbr.rel (0) target = $region89
    $region88: #{bert_qa_forward.1} parent=1 // pred_region
      _
    $region89: #{bert_qa_forward.1} parent=1 // pred_fallthru
      _
    // Predicated region
    $region90: #{bert_qa_forward.1} parent=1 // pred_check
      _
    $region91: #{bert_qa_forward.1} parent=1 // pred_check_branch
      %96 = sbr.rel (0) target = $region93
    $region92: #{bert_qa_forward.1} parent=1 // pred_region
      %98 = dma.done [#allocation3], 2048
    $region93: #{bert_qa_forward.1} parent=1 // pred_fallthru
      _
    // Predicated region
    $region94: #{bert_qa_forward.1} parent=1 // pred_check
      _
    $region95: #{bert_qa_forward.1} parent=1 // pred_check_branch
      %100 = sbr.rel (0) target = $region97
    $region96: #{bert_qa_forward.1} parent=1 // pred_region
      %102 = dma.done [#allocation5], 2048
    $region97: #{bert_qa_forward.1} parent=1 // pred_fallthru
      _
    %v103 = vld [vmem:[%s2] sm:$0xff]
    %v104 = vld [vmem:[%s2 + $0x8] sm:$0xff]
    %v105 = vld [vmem:[%s2 + $0x10] sm:$0xff]
    %v106 = vld [vmem:[%s2 + $0x18] sm:$0xff]
    %v107 = vld [vmem:[%s2 + $0x20] sm:$0xff]
    %v108 = vld [vmem:[%s2 + $0x28] sm:$0xff]
    %v109 = vld [vmem:[%s2 + $0x30] sm:$0xff]
    %v110 = vld [vmem:[%s2 + $0x38] sm:$0xff]
    %v111 = vmul.f32 %v103, 0.35355338
    %v112 = vmul.f32 %v104, 0.35355338
    %v113 = vmul.f32 %v105, 0.35355338
    %v114 = vmul.f32 %v106, 0.35355338
    %v115 = vmul.f32 %v107, 0.35355338
    %v116 = vmul.f32 %v108, 0.35355338
    %v117 = vmul.f32 %v109, 0.35355338
    %v118 = vmul.f32 %v110, 0.35355338
    %v119 = vld [vmem:[%s1] sm:$0xff]
    %v120 = vld [vmem:[%s1 + $0x8] sm:$0xff]
    %v121 = vld [vmem:[%s0] sm:$0xff]
    %v122 = vld [vmem:[%s0 + $0x8] sm:$0xff]
    %v123 = vld [vmem:[%s3] sm:$0x1]
    %v124 = vld [vmem:[%s4] sm:$0x1]
    %vm125 = vcmask 261120
    %v126 = vsel %vm125, %v121, 0.0
    %127 = vadd.xlane.f32.xlu0 %v126
    %v128 = vpop.xlane.xlu0 %127
    %v129 = vsel %vm125, %v122, 0.0
    %130 = vadd.xlane.f32.xlu0 %v129
    %v131 = vpop.xlane.xlu0 %130
    %v132 = vrcp.pop 32.0
    %v133 = vmul.f32 32.0, %v132
    %v134 = vsub.f32 1.0, %v133
    %v135 = vmul.f32 %v132, %v134
    %v136 = vadd.f32 %v132, %v135
    %vm137 = vweird.f32 %v132
    %v138 = vsel %vm137, %v132, %v136
    %v139 = vmul.f32 %v128, %v138
    %v140 = vmul.f32 %v131, %v138
    %v141 = vsub.f32 %v121, %v139
    %v142 = vsub.f32 %v122, %v140
    %v143 = vmul.f32 %v141, %v141
    %v144 = vmul.f32 %v142, %v142
    %v145 = vsel %vm125, %v143, 0.0
    %146 = vadd.xlane.f32.xlu0 %v145
    %v147 = vpop.xlane.xlu0 %146
    %v148 = vsel %vm125, %v144, 0.0
    %149 = vadd.xlane.f32.xlu0 %v148
    %v150 = vpop.xlane.xlu0 %149
    %v151 = vmul.f32 %v147, %v138
    %v152 = vmul.f32 %v150, %v138
    %v153 = vadd.f32 %v151, 1e-12
    %v154 = vadd.f32 %v152, 1e-12
    %v155 = vrsqrt.pop %v153
    %v156 = vmul.f32 %v155, %v153
    %v157 = vmul.f32 %v156, %v155
    %v158 = vmul.f32 0.5, %v157
    %v159 = vsub.f32 1.5, %v158
    %v160 = vmul.f32 %v155, %v159
    %vm161 = vweird.f32 %v153
    %vm162 = vweird.f32 %v155
    %vm163 = vmor %vm161, %vm162
    %v164 = vsel %vm163, %v155, %v160
    %v165 = vrsqrt.pop %v154
    %v166 = vmul.f32 %v165, %v154
    %v167 = vmul.f32 %v166, %v165
    %v168 = vmul.f32 0.5, %v167
    %v169 = vsub.f32 1.5, %v168
    %v170 = vmul.f32 %v165, %v169
    %vm171 = vweird.f32 %v154
    %vm172 = vweird.f32 %v165
    %vm173 = vmor %vm171, %vm172
    %v174 = vsel %vm173, %v165, %v170
    %v175 = vmul.f32 %v141, %v164
    %v176 = vmul.f32 %v142, %v174
    %v178 = vperm.slane %v123, 0
    %v180 = vmul.f32 %v175, %v178
    %v181 = vmul.f32 %v176, %v178
    %v183 = vperm.slane %v124, 0
    %v185 = vadd.f32 %v180, %v183
    %v186 = vadd.f32 %v181, %v183
    %v187 = vld [vmem:[#allocation2] sm:$0xff]
    %v188 = vld [vmem:[#allocation2 + $0x8] sm:$0xff]
    %v189 = vld [vmem:[#allocation2 + $0x10] sm:$0xff]
    %v190 = vld [vmem:[#allocation2 + $0x18] sm:$0xff]
    %v191 = vld [vmem:[%s6] sm:$0x1]
    %v193 = vperm.slane %v191, 0
    %v196 = vsel %vm125, %v185, 0
    %v199 = vsel %vm125, %v186, 0
    %201 = vmatpush.msra.mxu0 0.0
    %202 = vmatpush.msra.mxu0 0.0
    %203 = vmatpush.msra.mxu0 0.0
    %204 = vmatpush.msra.mxu0 0.0
    %205 = vmatpush.msra.mxu0 0.0
    %206 = vmatpush.msra.mxu0 0.0
    %207 = vmatpush.msra.mxu0 0.0
    %208 = vmatpush.msra.mxu0 0.0
    %209 = vmatpush.msra.mxu0 0.0
    %210 = vmatpush.msra.mxu0 0.0
    %211 = vmatpush.msra.mxu0 0.0
    %212 = vmatpush.msra.mxu0 0.0
    %213 = vmatpush.msra.mxu0 %v190
    %214 = vmatpush.msra.mxu0 %v189
    %215 = vmatpush.msra.mxu0 %v188
    %216 = vmatpush.msra.mxu0 %v187
    %217 = vmatmul.f32.gmra.mxu0 %v196
    %v218 = vpop.f32.mrf.mxu0
    %v219 = vadd.f32 %v193, %v218
    %220 = vmatmul.f32.gmra.mxu0 %v199
    %v221 = vpop.f32.mrf.mxu0
    %v222 = vadd.f32 %v193, %v221
    %223 = vdwg.mxu0
    %v224 = vmul.f32 %v219, %v111
    %v225 = vmul.f32 %v222, %v112
    %v226 = vmul.f32 %v219, %v113
    %v227 = vmul.f32 %v222, %v114
    %v228 = vmul.f32 %v219, %v115
    %v229 = vmul.f32 %v222, %v116
    %v230 = vmul.f32 %v219, %v117
    %v231 = vmul.f32 %v222, %v118
    %234 = vrot.lane.b32.xlu0 %v219, 96
    %v235 = vpop.permute.xlu0 %234
    %236 = vrot.lane.b32.xlu0 %v222, 96
    %v237 = vpop.permute.xlu0 %236
    %v239 = vsel %vm125, %v224, 0
    %v242 = vsel %vm125, %v225, 0
    %v245 = vsel %vm125, %v226, 0
    %v248 = vsel %vm125, %v227, 0
    %v251 = vsel %vm125, %v228, 0
    %v254 = vsel %vm125, %v229, 0
    %v257 = vsel %vm125, %v230, 0
    %v260 = vsel %vm125, %v231, 0
    %v262 = vsel %vm125, %v235, 0
    %v264 = vsel %vm125, %v237, 0
    %266 = vmatpush.xpose.msra.mxu0 0.0
    %267 = vmatpush.xpose.msra.mxu0 0.0
    %268 = vmatpush.xpose.msra.mxu0 0.0
    %269 = vmatpush.xpose.msra.mxu0 0.0
    %270 = vmatpush.xpose.msra.mxu0 0.0
    %271 = vmatpush.xpose.msra.mxu0 0.0
    %272 = vmatpush.xpose.msra.mxu0 0.0
    %273 = vmatpush.xpose.msra.mxu0 0.0
    %274 = vmatpush.xpose.msra.mxu0 0.0
    %275 = vmatpush.xpose.msra.mxu0 0.0
    %276 = vmatpush.xpose.msra.mxu0 0.0
    %277 = vmatpush.xpose.msra.mxu0 0.0
    %278 = vmatpush.xpose.msra.mxu0 0.0
    %279 = vmatpush.xpose.msra.mxu0 0.0
    %280 = vmatpush.xpose.msra.mxu0 %v264
    %281 = vmatpush.xpose.msra.mxu0 %v262
    %282 = vmatmul.f32.gmra.mxu0 %v239
    %v283 = vpop.f32.mrf.mxu0
    %v284 = vadd.f32 %v119, %v283
    %285 = vmatmul.f32.gmra.mxu0 %v242
    %v286 = vpop.f32.mrf.mxu0
    %v287 = vadd.f32 %v120, %v286
    %288 = vmatmul.f32.gmra.mxu0 %v245
    %v289 = vpop.f32.mrf.mxu0
    %v290 = vadd.f32 %v119, %v289
    %291 = vmatmul.f32.gmra.mxu0 %v248
    %v292 = vpop.f32.mrf.mxu0
    %v293 = vadd.f32 %v120, %v292
    %294 = vmatmul.f32.gmra.mxu0 %v251
    %v295 = vpop.f32.mrf.mxu0
    %v296 = vadd.f32 %v119, %v295
    %297 = vmatmul.f32.gmra.mxu0 %v254
    %v298 = vpop.f32.mrf.mxu0
    %v299 = vadd.f32 %v120, %v298
    %300 = vmatmul.f32.gmra.mxu0 %v257
    %v301 = vpop.f32.mrf.mxu0
    %v302 = vadd.f32 %v119, %v301
    %303 = vmatmul.f32.gmra.mxu0 %v260
    %v304 = vpop.f32.mrf.mxu0
    %v305 = vadd.f32 %v120, %v304
    %306 = vdwg.mxu0
    %vm307 = vcmask 130048
    %v308 = vsel %vm307, %v284, -inf
    %309 = vmax.xlane.f32.xlu0 %v308
    %v310 = vpop.xlane.xlu0 %309
    %v311 = vsel %vm307, %v287, -inf
    %312 = vmax.xlane.f32.xlu0 %v311
    %v313 = vpop.xlane.xlu0 %312
    %v314 = vsel %vm307, %v290, -inf
    %315 = vmax.xlane.f32.xlu0 %v314
    %v316 = vpop.xlane.xlu0 %315
    %v317 = vsel %vm307, %v293, -inf
    %318 = vmax.xlane.f32.xlu0 %v317
    %v319 = vpop.xlane.xlu0 %318
    %v320 = vsel %vm307, %v296, -inf
    %321 = vmax.xlane.f32.xlu0 %v320
    %v322 = vpop.xlane.xlu0 %321
    %v323 = vsel %vm307, %v299, -inf
    %324 = vmax.xlane.f32.xlu0 %v323
    %v325 = vpop.xlane.xlu0 %324
    %v326 = vsel %vm307, %v302, -inf
    %327 = vmax.xlane.f32.xlu0 %v326
    %v328 = vpop.xlane.xlu0 %327
    %v329 = vsel %vm307, %v305, -inf
    %330 = vmax.xlane.f32.xlu0 %v329
    %v331 = vpop.xlane.xlu0 %330
    %v332 = vsub.f32 %v284, %v310
    %v333 = vsub.f32 %v287, %v313
    %v334 = vsub.f32 %v290, %v316
    %v335 = vsub.f32 %v293, %v319
    %v336 = vsub.f32 %v296, %v322
    %v337 = vsub.f32 %v299, %v325
    %v338 = vsub.f32 %v302, %v328
    %v339 = vsub.f32 %v305, %v331
    %v340 = vmul.f32 %v332, 1.442695
    %v341 = vpow.pop %v340
    %v342 = vmul.f32 %v333, 1.442695
    %v343 = vpow.pop %v342
    %v344 = vmul.f32 %v334, 1.442695
    %v345 = vpow.pop %v344
    %v346 = vmul.f32 %v335, 1.442695
    %v347 = vpow.pop %v346
    %v348 = vmul.f32 %v336, 1.442695
    %v349 = vpow.pop %v348
    %v350 = vmul.f32 %v337, 1.442695
    %v351 = vpow.pop %v350
    %v352 = vmul.f32 %v338, 1.442695
    %v353 = vpow.pop %v352
    %v354 = vmul.f32 %v339, 1.442695
    %v355 = vpow.pop %v354
    %v356 = vsel %vm307, %v341, 0.0
    %357 = vadd.xlane.f32.xlu0 %v356
    %v358 = vpop.xlane.xlu0 %357
    %v359 = vsel %vm307, %v343, 0.0
    %360 = vadd.xlane.f32.xlu0 %v359
    %v361 = vpop.xlane.xlu0 %360
    %v362 = vsel %vm307, %v345, 0.0
    %363 = vadd.xlane.f32.xlu0 %v362
    %v364 = vpop.xlane.xlu0 %363
    %v365 = vsel %vm307, %v347, 0.0
    %366 = vadd.xlane.f32.xlu0 %v365
    %v367 = vpop.xlane.xlu0 %366
    %v368 = vsel %vm307, %v349, 0.0
    %369 = vadd.xlane.f32.xlu0 %v368
    %v370 = vpop.xlane.xlu0 %369
    %v371 = vsel %vm307, %v351, 0.0
    %372 = vadd.xlane.f32.xlu0 %v371
    %v373 = vpop.xlane.xlu0 %372
    %v374 = vsel %vm307, %v353, 0.0
    %375 = vadd.xlane.f32.xlu0 %v374
    %v376 = vpop.xlane.xlu0 %375
    %v377 = vsel %vm307, %v355, 0.0
    %378 = vadd.xlane.f32.xlu0 %v377
    %v379 = vpop.xlane.xlu0 %378
    %v380 = vrcp.pop %v358
    %v381 = vmul.f32 %v358, %v380
    %v382 = vsub.f32 1.0, %v381
    %v383 = vmul.f32 %v380, %v382
    %v384 = vadd.f32 %v380, %v383
    %vm385 = vweird.f32 %v358
    %vm386 = vweird.f32 %v380
    %vm387 = vmor %vm385, %vm386
    %v388 = vsel %vm387, %v380, %v384
    %v389 = vand.u32 2147483647, %v358
    %vm390 = vcmp.eq.f32.partialorder %v389, 8.507059e+37
    %v391 = vand.u32 %v358, 2147483648
    %v392 = vor.u32 1.1754944e-38, %v391
    %v393 = vsel %vm390, %v392, %v388
    %v394 = vmul.f32 %v341, %v393
    %v395 = vrcp.pop %v361
    %v396 = vmul.f32 %v361, %v395
    %v397 = vsub.f32 1.0, %v396
    %v398 = vmul.f32 %v395, %v397
    %v399 = vadd.f32 %v395, %v398
    %vm400 = vweird.f32 %v361
    %vm401 = vweird.f32 %v395
    %vm402 = vmor %vm400, %vm401
    %v403 = vsel %vm402, %v395, %v399
    %v404 = vand.u32 2147483647, %v361
    %vm405 = vcmp.eq.f32.partialorder %v404, 8.507059e+37
    %v406 = vand.u32 %v361, 2147483648
    %v407 = vor.u32 1.1754944e-38, %v406
    %v408 = vsel %vm405, %v407, %v403
    %v409 = vmul.f32 %v343, %v408
    %v410 = vrcp.pop %v364
    %v411 = vmul.f32 %v364, %v410
    %v412 = vsub.f32 1.0, %v411
    %v413 = vmul.f32 %v410, %v412
    %v414 = vadd.f32 %v410, %v413
    %vm415 = vweird.f32 %v364
    %vm416 = vweird.f32 %v410
    %vm417 = vmor %vm415, %vm416
    %v418 = vsel %vm417, %v410, %v414
    %v419 = vand.u32 2147483647, %v364
    %vm420 = vcmp.eq.f32.partialorder %v419, 8.507059e+37
    %v421 = vand.u32 %v364, 2147483648
    %v422 = vor.u32 1.1754944e-38, %v421
    %v423 = vsel %vm420, %v422, %v418
    %v424 = vmul.f32 %v345, %v423
    %v425 = vrcp.pop %v367
    %v426 = vmul.f32 %v367, %v425
    %v427 = vsub.f32 1.0, %v426
    %v428 = vmul.f32 %v425, %v427
    %v429 = vadd.f32 %v425, %v428
    %vm430 = vweird.f32 %v367
    %vm431 = vweird.f32 %v425
    %vm432 = vmor %vm430, %vm431
    %v433 = vsel %vm432, %v425, %v429
    %v434 = vand.u32 2147483647, %v367
    %vm435 = vcmp.eq.f32.partialorder %v434, 8.507059e+37
    %v436 = vand.u32 %v367, 2147483648
    %v437 = vor.u32 1.1754944e-38, %v436
    %v438 = vsel %vm435, %v437, %v433
    %v439 = vmul.f32 %v347, %v438
    %v440 = vrcp.pop %v370
    %v441 = vmul.f32 %v370, %v440
    %v442 = vsub.f32 1.0, %v441
    %v443 = vmul.f32 %v440, %v442
    %v444 = vadd.f32 %v440, %v443
    %vm445 = vweird.f32 %v370
    %vm446 = vweird.f32 %v440
    %vm447 = vmor %vm445, %vm446
    %v448 = vsel %vm447, %v440, %v444
    %v449 = vand.u32 2147483647, %v370
    %vm450 = vcmp.eq.f32.partialorder %v449, 8.507059e+37
    %v451 = vand.u32 %v370, 2147483648
    %v452 = vor.u32 1.1754944e-38, %v451
    %v453 = vsel %vm450, %v452, %v448
    %v454 = vmul.f32 %v349, %v453
    %v455 = vrcp.pop %v373
    %v456 = vmul.f32 %v373, %v455
    %v457 = vsub.f32 1.0, %v456
    %v458 = vmul.f32 %v455, %v457
    %v459 = vadd.f32 %v455, %v458
    %vm460 = vweird.f32 %v373
    %vm461 = vweird.f32 %v455
    %vm462 = vmor %vm460, %vm461
    %v463 = vsel %vm462, %v455, %v459
    %v464 = vand.u32 2147483647, %v373
    %vm465 = vcmp.eq.f32.partialorder %v464, 8.507059e+37
    %v466 = vand.u32 %v373, 2147483648
    %v467 = vor.u32 1.1754944e-38, %v466
    %v468 = vsel %vm465, %v467, %v463
    %v469 = vmul.f32 %v351, %v468
    %v470 = vrcp.pop %v376
    %v471 = vmul.f32 %v376, %v470
    %v472 = vsub.f32 1.0, %v471
    %v473 = vmul.f32 %v470, %v472
    %v474 = vadd.f32 %v470, %v473
    %vm475 = vweird.f32 %v376
    %vm476 = vweird.f32 %v470
    %vm477 = vmor %vm475, %vm476
    %v478 = vsel %vm477, %v470, %v474
    %v479 = vand.u32 2147483647, %v376
    %vm480 = vcmp.eq.f32.partialorder %v479, 8.507059e+37
    %v481 = vand.u32 %v376, 2147483648
    %v482 = vor.u32 1.1754944e-38, %v481
    %v483 = vsel %vm480, %v482, %v478
    %v484 = vmul.f32 %v353, %v483
    %v485 = vrcp.pop %v379
    %v486 = vmul.f32 %v379, %v485
    %v487 = vsub.f32 1.0, %v486
    %v488 = vmul.f32 %v485, %v487
    %v489 = vadd.f32 %v485, %v488
    %vm490 = vweird.f32 %v379
    %vm491 = vweird.f32 %v485
    %vm492 = vmor %vm490, %vm491
    %v493 = vsel %vm492, %v485, %v489
    %v494 = vand.u32 2147483647, %v379
    %vm495 = vcmp.eq.f32.partialorder %v494, 8.507059e+37
    %v496 = vand.u32 %v379, 2147483648
    %v497 = vor.u32 1.1754944e-38, %v496
    %v498 = vsel %vm495, %v497, %v493
    %v499 = vmul.f32 %v355, %v498
    %500 = vrot.lane.b32.xlu0 %v219, 64
    %v501 = vpop.permute.xlu0 %500
    %502 = vrot.lane.b32.xlu0 %v222, 64
    %v503 = vpop.permute.xlu0 %502
    %v507 = vsel %vm307, %v394, 0
    %v510 = vsel %vm307, %v409, 0
    %v513 = vsel %vm307, %v424, 0
    %v516 = vsel %vm307, %v439, 0
    %v519 = vsel %vm307, %v454, 0
    %v522 = vsel %vm307, %v469, 0
    %v525 = vsel %vm307, %v484, 0
    %v528 = vsel %vm307, %v499, 0
    %530 = vmatpush.msra.mxu0 0.0
    %531 = vmatpush.msra.mxu0 0.0
    %532 = vmatpush.msra.mxu0 0.0
    %533 = vmatpush.msra.mxu0 0.0
    %534 = vmatpush.msra.mxu0 0.0
    %535 = vmatpush.msra.mxu0 0.0
    %536 = vmatpush.msra.mxu0 0.0
    %537 = vmatpush.msra.mxu0 0.0
    %538 = vmatpush.msra.mxu0 0.0
    %539 = vmatpush.msra.mxu0 0.0
    %540 = vmatpush.msra.mxu0 0.0
    %541 = vmatpush.msra.mxu0 0.0
    %542 = vmatpush.msra.mxu0 0.0
    %543 = vmatpush.msra.mxu0 0.0
    %544 = vmatpush.msra.mxu0 %v503
    %545 = vmatpush.msra.mxu0 %v501
    %546 = vmatmul.f32.gmra.mxu0 %v507
    %v547 = vpop.f32.mrf.mxu0
    %v548 = vadd.f32 0.0, %v547
    %549 = vmatmul.f32.gmra.mxu0 %v510
    %v550 = vpop.f32.mrf.mxu0
    %v551 = vadd.f32 0.0, %v550
    %552 = vmatmul.f32.gmra.mxu0 %v513
    %v553 = vpop.f32.mrf.mxu0
    %v554 = vadd.f32 0.0, %v553
    %555 = vmatmul.f32.gmra.mxu0 %v516
    %v556 = vpop.f32.mrf.mxu0
    %v557 = vadd.f32 0.0, %v556
    %558 = vmatmul.f32.gmra.mxu0 %v519
    %v559 = vpop.f32.mrf.mxu0
    %v560 = vadd.f32 0.0, %v559
    %561 = vmatmul.f32.gmra.mxu0 %v522
    %v562 = vpop.f32.mrf.mxu0
    %v563 = vadd.f32 0.0, %v562
    %564 = vmatmul.f32.gmra.mxu0 %v525
    %v565 = vpop.f32.mrf.mxu0
    %v566 = vadd.f32 0.0, %v565
    %567 = vmatmul.f32.gmra.mxu0 %v528
    %v568 = vpop.f32.mrf.mxu0
    %v569 = vadd.f32 0.0, %v568
    %570 = vdwg.mxu0
    %v571 = vmul.f32 %v548, %v103
    %v572 = vmul.f32 %v551, %v104
    %v573 = vmul.f32 %v554, %v105
    %v574 = vmul.f32 %v557, %v106
    %v575 = vmul.f32 %v560, %v107
    %v576 = vmul.f32 %v563, %v108
    %v577 = vmul.f32 %v566, %v109
    %v578 = vmul.f32 %v569, %v110
    %v579 = vadd.f32 %v571, %v573
    %v580 = vadd.f32 %v572, %v574
    %v581 = vadd.f32 %v579, %v575
    %v582 = vadd.f32 %v580, %v576
    %v583 = vadd.f32 %v581, %v577
    %v584 = vadd.f32 %v582, %v578
    %v585 = vld [vmem:[#allocation4] sm:$0xff]
    %v586 = vld [vmem:[#allocation4 + $0x8] sm:$0xff]
    %v587 = vld [vmem:[#allocation4 + $0x10] sm:$0xff]
    %v588 = vld [vmem:[#allocation4 + $0x18] sm:$0xff]
    %v589 = vld [vmem:[%s8] sm:$0x1]
    %v591 = vperm.slane %v589, 0
    %v594 = vsel %vm125, %v583, 0
    %v597 = vsel %vm125, %v584, 0
    %599 = vmatpush.msra.mxu0 0.0
    %600 = vmatpush.msra.mxu0 0.0
    %601 = vmatpush.msra.mxu0 0.0
    %602 = vmatpush.msra.mxu0 0.0
    %603 = vmatpush.msra.mxu0 0.0
    %604 = vmatpush.msra.mxu0 0.0
    %605 = vmatpush.msra.mxu0 0.0
    %606 = vmatpush.msra.mxu0 0.0
    %607 = vmatpush.msra.mxu0 0.0
    %608 = vmatpush.msra.mxu0 0.0
    %609 = vmatpush.msra.mxu0 0.0
    %610 = vmatpush.msra.mxu0 0.0
    %611 = vmatpush.msra.mxu0 %v588
    %612 = vmatpush.msra.mxu0 %v587
    %613 = vmatpush.msra.mxu0 %v586
    %614 = vmatpush.msra.mxu0 %v585
    %615 = vmatmul.f32.gmra.mxu0 %v594
    %v616 = vpop.f32.mrf.mxu0
    %v617 = vadd.f32 %v591, %v616
    %618 = vmatmul.f32.gmra.mxu0 %v597
    %v619 = vpop.f32.mrf.mxu0
    %v620 = vadd.f32 %v591, %v619
    %621 = vdwg.mxu0
    %v622 = vadd.f32 %v617, %v185
    %v623 = vadd.f32 %v620, %v186
    %v624 = vld [vmem:[%s9] sm:$0x1]
    %v625 = vld [vmem:[%s10] sm:$0x1]
    %v626 = vsel %vm125, %v622, 0.0
    %627 = vadd.xlane.f32.xlu0 %v626
    %v628 = vpop.xlane.xlu0 %627
    %v629 = vsel %vm125, %v623, 0.0
    %630 = vadd.xlane.f32.xlu0 %v629
    %v631 = vpop.xlane.xlu0 %630
    %v632 = vmul.f32 %v628, %v138
    %v633 = vmul.f32 %v631, %v138
    %v634 = vsub.f32 %v622, %v632
    %v635 = vsub.f32 %v623, %v633
    %v636 = vmul.f32 %v634, %v634
    %v637 = vmul.f32 %v635, %v635
    %v638 = vsel %vm125, %v636, 0.0
    %639 = vadd.xlane.f32.xlu0 %v638
    %v640 = vpop.xlane.xlu0 %639
    %v641 = vsel %vm125, %v637, 0.0
    %642 = vadd.xlane.f32.xlu0 %v641
    %v643 = vpop.xlane.xlu0 %642
    %v644 = vmul.f32 %v640, %v138
    %v645 = vmul.f32 %v643, %v138
    %v646 = vadd.f32 %v644, 1e-12
    %v647 = vadd.f32 %v645, 1e-12
    %v648 = vrsqrt.pop %v646
    %v649 = vmul.f32 %v648, %v646
    %v650 = vmul.f32 %v649, %v648
    %v651 = vmul.f32 0.5, %v650
    %v652 = vsub.f32 1.5, %v651
    %v653 = vmul.f32 %v648, %v652
    %vm654 = vweird.f32 %v646
    %vm655 = vweird.f32 %v648
    %vm656 = vmor %vm654, %vm655
    %v657 = vsel %vm656, %v648, %v653
    %v658 = vrsqrt.pop %v647
    %v659 = vmul.f32 %v658, %v647
    %v660 = vmul.f32 %v659, %v658
    %v661 = vmul.f32 0.5, %v660
    %v662 = vsub.f32 1.5, %v661
    %v663 = vmul.f32 %v658, %v662
    %vm664 = vweird.f32 %v647
    %vm665 = vweird.f32 %v658
    %vm666 = vmor %vm664, %vm665
    %v667 = vsel %vm666, %v658, %v663
    %v668 = vmul.f32 %v634, %v657
    %v669 = vmul.f32 %v635, %v667
    %v671 = vperm.slane %v624, 0
    %v673 = vmul.f32 %v668, %v671
    %v674 = vmul.f32 %v669, %v671
    %v676 = vperm.slane %v625, 0
    %v678 = vadd.f32 %v673, %v676
    %v679 = vadd.f32 %v674, %v676
    %v680 = vld [vmem:[%s11] sm:$0xff]
    %v681 = vld [vmem:[%s11 + $0x8] sm:$0xff]
    %v682 = vld [vmem:[%s11 + $0x10] sm:$0xff]
    %v683 = vld [vmem:[%s11 + $0x18] sm:$0xff]
    %v684 = vld [vmem:[%s12] sm:$0x1]
    %v686 = vperm.slane %v684, 0
    %v689 = vsel %vm125, %v678, 0
    %v692 = vsel %vm125, %v679, 0
    %694 = vmatpush.msra.mxu0 0.0
    %695 = vmatpush.msra.mxu0 0.0
    %696 = vmatpush.msra.mxu0 0.0
    %697 = vmatpush.msra.mxu0 0.0
    %698 = vmatpush.msra.mxu0 0.0
    %699 = vmatpush.msra.mxu0 0.0
    %700 = vmatpush.msra.mxu0 0.0
    %701 = vmatpush.msra.mxu0 0.0
    %702 = vmatpush.msra.mxu0 0.0
    %703 = vmatpush.msra.mxu0 0.0
    %704 = vmatpush.msra.mxu0 0.0
    %705 = vmatpush.msra.mxu0 0.0
    %706 = vmatpush.msra.mxu0 %v683
    %707 = vmatpush.msra.mxu0 %v682
    %708 = vmatpush.msra.mxu0 %v681
    %709 = vmatpush.msra.mxu0 %v680
    %710 = vmatmul.f32.gmra.mxu0 %v689
    %v711 = vpop.f32.mrf.mxu0
    %v712 = vadd.f32 %v686, %v711
    %713 = vmatmul.f32.gmra.mxu0 %v692
    %v714 = vpop.f32.mrf.mxu0
    %v715 = vadd.f32 %v686, %v714
    %716 = vdwg.mxu0
    %v717 = vmul.f32 %v712, 0.5
    %v718 = vmul.f32 %v715, 0.5
    %v719 = vmul.f32 %v712, 0.70710677
    %v720 = vmul.f32 %v715, 0.70710677
    %v721 = vmul.f32 %v719, %v719
    %v722 = vmin.f32 16.0, %v721
    %v723 = vmul.f32 %v722, 2.1237322e-06
    %v724 = vadd.f32 %v723, 0.00028619796
    %v725 = vmul.f32 %v722, %v724
    %v726 = vadd.f32 %v725, 0.0036580483
    %v727 = vmul.f32 %v722, %v726
    %v728 = vadd.f32 %v727, 0.05243302
    %v729 = vmul.f32 %v722, %v728
    %v730 = vadd.f32 %v729, 0.18741608
    %v731 = vmul.f32 %v722, %v730
    %v732 = vadd.f32 %v731, 1.1283791
    %v733 = vmul.f32 %v719, %v732
    %v734 = vmul.f32 %v722, 3.8918573e-05
    %v735 = vadd.f32 %v734, 0.001143296
    %v736 = vmul.f32 %v722, %v735
    %v737 = vadd.f32 %v736, 0.014752088
    %v738 = vmul.f32 %v722, %v737
    %v739 = vadd.f32 %v738, 0.112945676
    %v740 = vmul.f32 %v722, %v739
    %v741 = vadd.f32 %v740, 0.4994258
    %v742 = vmul.f32 %v722, %v741
    %v743 = vadd.f32 %v742, 1.0
    %v744 = vrcp.pop %v743
    %v745 = vmul.f32 %v743, %v744
    %v746 = vsub.f32 1.0, %v745
    %v747 = vmul.f32 %v744, %v746
    %v748 = vadd.f32 %v744, %v747
    %vm749 = vweird.f32 %v743
    %vm750 = vweird.f32 %v744
    %vm751 = vmor %vm749, %vm750
    %v752 = vsel %vm751, %v744, %v748
    %v753 = vand.u32 2147483647, %v743
    %vm754 = vcmp.eq.f32.partialorder %v753, 8.507059e+37
    %v755 = vand.u32 %v743, 2147483648
    %v756 = vor.u32 1.1754944e-38, %v755
    %v757 = vsel %vm754, %v756, %v752
    %v758 = vmul.f32 %v733, %v757
    %v759 = vmin.f32 %v758, 1.0
    %v760 = vmax.f32 %v759, -1.0
    %v761 = vmul.f32 %v720, %v720
    %v762 = vmin.f32 16.0, %v761
    %v763 = vmul.f32 %v762, 2.1237322e-06
    %v764 = vadd.f32 %v763, 0.00028619796
    %v765 = vmul.f32 %v762, %v764
    %v766 = vadd.f32 %v765, 0.0036580483
    %v767 = vmul.f32 %v762, %v766
    %v768 = vadd.f32 %v767, 0.05243302
    %v769 = vmul.f32 %v762, %v768
    %v770 = vadd.f32 %v769, 0.18741608
    %v771 = vmul.f32 %v762, %v770
    %v772 = vadd.f32 %v771, 1.1283791
    %v773 = vmul.f32 %v720, %v772
    %v774 = vmul.f32 %v762, 3.8918573e-05
    %v775 = vadd.f32 %v774, 0.001143296
    %v776 = vmul.f32 %v762, %v775
    %v777 = vadd.f32 %v776, 0.014752088
    %v778 = vmul.f32 %v762, %v777
    %v779 = vadd.f32 %v778, 0.112945676
    %v780 = vmul.f32 %v762, %v779
    %v781 = vadd.f32 %v780, 0.4994258
    %v782 = vmul.f32 %v762, %v781
    %v783 = vadd.f32 %v782, 1.0
    %v784 = vrcp.pop %v783
    %v785 = vmul.f32 %v783, %v784
    %v786 = vsub.f32 1.0, %v785
    %v787 = vmul.f32 %v784, %v786
    %v788 = vadd.f32 %v784, %v787
    %vm789 = vweird.f32 %v783
    %vm790 = vweird.f32 %v784
    %vm791 = vmor %vm789, %vm790
    %v792 = vsel %vm791, %v784, %v788
    %v793 = vand.u32 2147483647, %v783
    %vm794 = vcmp.eq.f32.partialorder %v793, 8.507059e+37
    %v795 = vand.u32 %v783, 2147483648
    %v796 = vor.u32 1.1754944e-38, %v795
    %v797 = vsel %vm794, %v796, %v792
    %v798 = vmul.f32 %v773, %v797
    %v799 = vmin.f32 %v798, 1.0
    %v800 = vmax.f32 %v799, -1.0
    %v801 = vadd.f32 %v760, 1.0
    %v802 = vadd.f32 %v800, 1.0
    %v803 = vmul.f32 %v717, %v801
    %v804 = vmul.f32 %v718, %v802
    %v805 = vld [vmem:[%s13] sm:$0xff]
    %v806 = vld [vmem:[%s13 + $0x8] sm:$0xff]
    %v807 = vld [vmem:[%s13 + $0x10] sm:$0xff]
    %v808 = vld [vmem:[%s13 + $0x18] sm:$0xff]
    %v809 = vld [vmem:[%s13 + $0x20] sm:$0xff]
    %v810 = vld [vmem:[%s13 + $0x28] sm:$0xff]
    %v811 = vld [vmem:[%s13 + $0x30] sm:$0xff]
    %v812 = vld [vmem:[%s13 + $0x38] sm:$0xff]
    %v813 = vld [vmem:[%s14] sm:$0x1]
    %v815 = vperm.slane %v813, 0
    %vm817 = vcmask 523264
    %v819 = vsel %vm817, %v803, 0
    %v822 = vsel %vm817, %v804, 0
    %824 = vmatpush.msra.mxu0 0.0
    %825 = vmatpush.msra.mxu0 0.0
    %826 = vmatpush.msra.mxu0 0.0
    %827 = vmatpush.msra.mxu0 0.0
    %828 = vmatpush.msra.mxu0 0.0
    %829 = vmatpush.msra.mxu0 0.0
    %830 = vmatpush.msra.mxu0 0.0
    %831 = vmatpush.msra.mxu0 0.0
    %832 = vmatpush.msra.mxu0 %v812
    %833 = vmatpush.msra.mxu0 %v811
    %834 = vmatpush.msra.mxu0 %v810
    %835 = vmatpush.msra.mxu0 %v809
    %836 = vmatpush.msra.mxu0 %v808
    %837 = vmatpush.msra.mxu0 %v807
    %838 = vmatpush.msra.mxu0 %v806
    %839 = vmatpush.msra.mxu0 %v805
    %840 = vmatmul.f32.gmra.mxu0 %v819
    %v841 = vpop.f32.mrf.mxu0
    %v842 = vadd.f32 %v815, %v841
    %843 = vmatmul.f32.gmra.mxu0 %v822
    %v844 = vpop.f32.mrf.mxu0
    %v845 = vadd.f32 %v815, %v844
    %846 = vdwg.mxu0
    %v847 = vadd.f32 %v842, %v678
    %v848 = vadd.f32 %v845, %v679
    %v849 = vld [vmem:[%s15] sm:$0x1]
    %v850 = vld [vmem:[%s16] sm:$0x1]
    %v851 = vsel %vm125, %v847, 0.0
    %852 = vadd.xlane.f32.xlu0 %v851
    %v853 = vpop.xlane.xlu0 %852
    %v854 = vsel %vm125, %v848, 0.0
    %855 = vadd.xlane.f32.xlu0 %v854
    %v856 = vpop.xlane.xlu0 %855
    %v857 = vmul.f32 %v853, %v138
    %v858 = vmul.f32 %v856, %v138
    %v859 = vsub.f32 %v847, %v857
    %v860 = vsub.f32 %v848, %v858
    %v861 = vmul.f32 %v859, %v859
    %v862 = vmul.f32 %v860, %v860
    %v863 = vsel %vm125, %v861, 0.0
    %864 = vadd.xlane.f32.xlu0 %v863
    %v865 = vpop.xlane.xlu0 %864
    %v866 = vsel %vm125, %v862, 0.0
    %867 = vadd.xlane.f32.xlu0 %v866
    %v868 = vpop.xlane.xlu0 %867
    %v869 = vmul.f32 %v865, %v138
    %v870 = vmul.f32 %v868, %v138
    %v871 = vadd.f32 %v869, 1e-12
    %v872 = vadd.f32 %v870, 1e-12
    %v873 = vrsqrt.pop %v871
    %v874 = vmul.f32 %v873, %v871
    %v875 = vmul.f32 %v874, %v873
    %v876 = vmul.f32 0.5, %v875
    %v877 = vsub.f32 1.5, %v876
    %v878 = vmul.f32 %v873, %v877
    %vm879 = vweird.f32 %v871
    %vm880 = vweird.f32 %v873
    %vm881 = vmor %vm879, %vm880
    %v882 = vsel %vm881, %v873, %v878
    %v883 = vrsqrt.pop %v872
    %v884 = vmul.f32 %v883, %v872
    %v885 = vmul.f32 %v884, %v883
    %v886 = vmul.f32 0.5, %v885
    %v887 = vsub.f32 1.5, %v886
    %v888 = vmul.f32 %v883, %v887
    %vm889 = vweird.f32 %v872
    %vm890 = vweird.f32 %v883
    %vm891 = vmor %vm889, %vm890
    %v892 = vsel %vm891, %v883, %v888
    %v893 = vmul.f32 %v859, %v882
    %v894 = vmul.f32 %v860, %v892
    %v896 = vperm.slane %v849, 0
    %v898 = vmul.f32 %v893, %v896
    %v899 = vmul.f32 %v894, %v896
    %v901 = vperm.slane %v850, 0
    %v903 = vadd.f32 %v898, %v901
    %v904 = vadd.f32 %v899, %v901
    %s905 = scalar_lea.vmem [#allocation2], 32
    %v906 = vld [vmem:[%s905] sm:$0xff]
    %v907 = vld [vmem:[%s905 + $0x8] sm:$0xff]
    %v908 = vld [vmem:[%s905 + $0x10] sm:$0xff]
    %v909 = vld [vmem:[%s905 + $0x18] sm:$0xff]
    %s910 = scalar_lea.vmem %s6, 1
    %v911 = vld [vmem:[%s910] sm:$0x1]
    %v913 = vperm.slane %v911, 0
    %v916 = vsel %vm125, %v903, 0
    %v919 = vsel %vm125, %v904, 0
    %921 = vmatpush.msra.mxu0 0.0
    %922 = vmatpush.msra.mxu0 0.0
    %923 = vmatpush.msra.mxu0 0.0
    %924 = vmatpush.msra.mxu0 0.0
    %925 = vmatpush.msra.mxu0 0.0
    %926 = vmatpush.msra.mxu0 0.0
    %927 = vmatpush.msra.mxu0 0.0
    %928 = vmatpush.msra.mxu0 0.0
    %929 = vmatpush.msra.mxu0 0.0
    %930 = vmatpush.msra.mxu0 0.0
    %931 = vmatpush.msra.mxu0 0.0
    %932 = vmatpush.msra.mxu0 0.0
    %933 = vmatpush.msra.mxu0 %v909
    %934 = vmatpush.msra.mxu0 %v908
    %935 = vmatpush.msra.mxu0 %v907
    %936 = vmatpush.msra.mxu0 %v906
    %937 = vmatmul.f32.gmra.mxu0 %v916
    %v938 = vpop.f32.mrf.mxu0
    %v939 = vadd.f32 %v913, %v938
    %940 = vmatmul.f32.gmra.mxu0 %v919
    %v941 = vpop.f32.mrf.mxu0
    %v942 = vadd.f32 %v913, %v941
    %943 = vdwg.mxu0
    %v944 = vmul.f32 %v939, %v111
    %v945 = vmul.f32 %v942, %v112
    %v946 = vmul.f32 %v939, %v113
    %v947 = vmul.f32 %v942, %v114
    %v948 = vmul.f32 %v939, %v115
    %v949 = vmul.f32 %v942, %v116
    %v950 = vmul.f32 %v939, %v117
    %v951 = vmul.f32 %v942, %v118
    %954 = vrot.lane.b32.xlu0 %v939, 96
    %v955 = vpop.permute.xlu0 %954
    %956 = vrot.lane.b32.xlu0 %v942, 96
    %v957 = vpop.permute.xlu0 %956
    %v959 = vsel %vm125, %v944, 0
    %v962 = vsel %vm125, %v945, 0
    %v965 = vsel %vm125, %v946, 0
    %v968 = vsel %vm125, %v947, 0
    %v971 = vsel %vm125, %v948, 0
    %v974 = vsel %vm125, %v949, 0
    %v977 = vsel %vm125, %v950, 0
    %v980 = vsel %vm125, %v951, 0
    %v982 = vsel %vm125, %v955, 0
    %v984 = vsel %vm125, %v957, 0
    %986 = vmatpush.xpose.msra.mxu0 0.0
    %987 = vmatpush.xpose.msra.mxu0 0.0
    %988 = vmatpush.xpose.msra.mxu0 0.0
    %989 = vmatpush.xpose.msra.mxu0 0.0
    %990 = vmatpush.xpose.msra.mxu0 0.0
    %991 = vmatpush.xpose.msra.mxu0 0.0
    %992 = vmatpush.xpose.msra.mxu0 0.0
    %993 = vmatpush.xpose.msra.mxu0 0.0
    %994 = vmatpush.xpose.msra.mxu0 0.0
    %995 = vmatpush.xpose.msra.mxu0 0.0
    %996 = vmatpush.xpose.msra.mxu0 0.0
    %997 = vmatpush.xpose.msra.mxu0 0.0
    %998 = vmatpush.xpose.msra.mxu0 0.0
    %999 = vmatpush.xpose.msra.mxu0 0.0
    %1000 = vmatpush.xpose.msra.mxu0 %v984
    %1001 = vmatpush.xpose.msra.mxu0 %v982
    %1002 = vmatmul.f32.gmra.mxu0 %v959
    %v1003 = vpop.f32.mrf.mxu0
    %v1004 = vadd.f32 %v119, %v1003
    %1005 = vmatmul.f32.gmra.mxu0 %v962
    %v1006 = vpop.f32.mrf.mxu0
    %v1007 = vadd.f32 %v120, %v1006
    %1008 = vmatmul.f32.gmra.mxu0 %v965
    %v1009 = vpop.f32.mrf.mxu0
    %v1010 = vadd.f32 %v119, %v1009
    %1011 = vmatmul.f32.gmra.mxu0 %v968
    %v1012 = vpop.f32.mrf.mxu0
    %v1013 = vadd.f32 %v120, %v1012
    %1014 = vmatmul.f32.gmra.mxu0 %v971
    %v1015 = vpop.f32.mrf.mxu0
    %v1016 = vadd.f32 %v119, %v1015
    %1017 = vmatmul.f32.gmra.mxu0 %v974
    %v1018 = vpop.f32.mrf.mxu0
    %v1019 = vadd.f32 %v120, %v1018
    %1020 = vmatmul.f32.gmra.mxu0 %v977
    %v1021 = vpop.f32.mrf.mxu0
    %v1022 = vadd.f32 %v119, %v1021
    %1023 = vmatmul.f32.gmra.mxu0 %v980
    %v1024 = vpop.f32.mrf.mxu0
    %v1025 = vadd.f32 %v120, %v1024
    %1026 = vdwg.mxu0
    %v1027 = vsel %vm307, %v1004, -inf
    %1028 = vmax.xlane.f32.xlu0 %v1027
    %v1029 = vpop.xlane.xlu0 %1028
    %v1030 = vsel %vm307, %v1007, -inf
    %1031 = vmax.xlane.f32.xlu0 %v1030
    %v1032 = vpop.xlane.xlu0 %1031
    %v1033 = vsel %vm307, %v1010, -inf
    %1034 = vmax.xlane.f32.xlu0 %v1033
    %v1035 = vpop.xlane.xlu0 %1034
    %v1036 = vsel %vm307, %v1013, -inf
    %1037 = vmax.xlane.f32.xlu0 %v1036
    %v1038 = vpop.xlane.xlu0 %1037
    %v1039 = vsel %vm307, %v1016, -inf
    %1040 = vmax.xlane.f32.xlu0 %v1039
    %v1041 = vpop.xlane.xlu0 %1040
    %v1042 = vsel %vm307, %v1019, -inf
    %1043 = vmax.xlane.f32.xlu0 %v1042
    %v1044 = vpop.xlane.xlu0 %1043
    %v1045 = vsel %vm307, %v1022, -inf
    %1046 = vmax.xlane.f32.xlu0 %v1045
    %v1047 = vpop.xlane.xlu0 %1046
    %v1048 = vsel %vm307, %v1025, -inf
    %1049 = vmax.xlane.f32.xlu0 %v1048
    %v1050 = vpop.xlane.xlu0 %1049
    %v1051 = vsub.f32 %v1004, %v1029
    %v1052 = vsub.f32 %v1007, %v1032
    %v1053 = vsub.f32 %v1010, %v1035
    %v1054 = vsub.f32 %v1013, %v1038
    %v1055 = vsub.f32 %v1016, %v1041
    %v1056 = vsub.f32 %v1019, %v1044
    %v1057 = vsub.f32 %v1022, %v1047
    %v1058 = vsub.f32 %v1025, %v1050
    %v1059 = vmul.f32 %v1051, 1.442695
    %v1060 = vpow.pop %v1059
    %v1061 = vmul.f32 %v1052, 1.442695
    %v1062 = vpow.pop %v1061
    %v1063 = vmul.f32 %v1053, 1.442695
    %v1064 = vpow.pop %v1063
    %v1065 = vmul.f32 %v1054, 1.442695
    %v1066 = vpow.pop %v1065
    %v1067 = vmul.f32 %v1055, 1.442695
    %v1068 = vpow.pop %v1067
    %v1069 = vmul.f32 %v1056, 1.442695
    %v1070 = vpow.pop %v1069
    %v1071 = vmul.f32 %v1057, 1.442695
    %v1072 = vpow.pop %v1071
    %v1073 = vmul.f32 %v1058, 1.442695
    %v1074 = vpow.pop %v1073
    %v1075 = vsel %vm307, %v1060, 0.0
    %1076 = vadd.xlane.f32.xlu0 %v1075
    %v1077 = vpop.xlane.xlu0 %1076
    %v1078 = vsel %vm307, %v1062, 0.0
    %1079 = vadd.xlane.f32.xlu0 %v1078
    %v1080 = vpop.xlane.xlu0 %1079
    %v1081 = vsel %vm307, %v1064, 0.0
    %1082 = vadd.xlane.f32.xlu0 %v1081
    %v1083 = vpop.xlane.xlu0 %1082
    %v1084 = vsel %vm307, %v1066, 0.0
    %1085 = vadd.xlane.f32.xlu0 %v1084
    %v1086 = vpop.xlane.xlu0 %1085
    %v1087 = vsel %vm307, %v1068, 0.0
    %1088 = vadd.xlane.f32.xlu0 %v1087
    %v1089 = vpop.xlane.xlu0 %1088
    %v1090 = vsel %vm307, %v1070, 0.0
    %1091 = vadd.xlane.f32.xlu0 %v1090
    %v1092 = vpop.xlane.xlu0 %1091
    %v1093 = vsel %vm307, %v1072, 0.0
    %1094 = vadd.xlane.f32.xlu0 %v1093
    %v1095 = vpop.xlane.xlu0 %1094
    %v1096 = vsel %vm307, %v1074, 0.0
    %1097 = vadd.xlane.f32.xlu0 %v1096
    %v1098 = vpop.xlane.xlu0 %1097
    %v1099 = vrcp.pop %v1077
    %v1100 = vmul.f32 %v1077, %v1099
    %v1101 = vsub.f32 1.0, %v1100
    %v1102 = vmul.f32 %v1099, %v1101
    %v1103 = vadd.f32 %v1099, %v1102
    %vm1104 = vweird.f32 %v1077
    %vm1105 = vweird.f32 %v1099
    %vm1106 = vmor %vm1104, %vm1105
    %v1107 = vsel %vm1106, %v1099, %v1103
    %v1108 = vand.u32 2147483647, %v1077
    %vm1109 = vcmp.eq.f32.partialorder %v1108, 8.507059e+37
    %v1110 = vand.u32 %v1077, 2147483648
    %v1111 = vor.u32 1.1754944e-38, %v1110
    %v1112 = vsel %vm1109, %v1111, %v1107
    %v1113 = vmul.f32 %v1060, %v1112
    %v1114 = vrcp.pop %v1080
    %v1115 = vmul.f32 %v1080, %v1114
    %v1116 = vsub.f32 1.0, %v1115
    %v1117 = vmul.f32 %v1114, %v1116
    %v1118 = vadd.f32 %v1114, %v1117
    %vm1119 = vweird.f32 %v1080
    %vm1120 = vweird.f32 %v1114
    %vm1121 = vmor %vm1119, %vm1120
    %v1122 = vsel %vm1121, %v1114, %v1118
    %v1123 = vand.u32 2147483647, %v1080
    %vm1124 = vcmp.eq.f32.partialorder %v1123, 8.507059e+37
    %v1125 = vand.u32 %v1080, 2147483648
    %v1126 = vor.u32 1.1754944e-38, %v1125
    %v1127 = vsel %vm1124, %v1126, %v1122
    %v1128 = vmul.f32 %v1062, %v1127
    %v1129 = vrcp.pop %v1083
    %v1130 = vmul.f32 %v1083, %v1129
    %v1131 = vsub.f32 1.0, %v1130
    %v1132 = vmul.f32 %v1129, %v1131
    %v1133 = vadd.f32 %v1129, %v1132
    %vm1134 = vweird.f32 %v1083
    %vm1135 = vweird.f32 %v1129
    %vm1136 = vmor %vm1134, %vm1135
    %v1137 = vsel %vm1136, %v1129, %v1133
    %v1138 = vand.u32 2147483647, %v1083
    %vm1139 = vcmp.eq.f32.partialorder %v1138, 8.507059e+37
    %v1140 = vand.u32 %v1083, 2147483648
    %v1141 = vor.u32 1.1754944e-38, %v1140
    %v1142 = vsel %vm1139, %v1141, %v1137
    %v1143 = vmul.f32 %v1064, %v1142
    %v1144 = vrcp.pop %v1086
    %v1145 = vmul.f32 %v1086, %v1144
    %v1146 = vsub.f32 1.0, %v1145
    %v1147 = vmul.f32 %v1144, %v1146
    %v1148 = vadd.f32 %v1144, %v1147
    %vm1149 = vweird.f32 %v1086
    %vm1150 = vweird.f32 %v1144
    %vm1151 = vmor %vm1149, %vm1150
    %v1152 = vsel %vm1151, %v1144, %v1148
    %v1153 = vand.u32 2147483647, %v1086
    %vm1154 = vcmp.eq.f32.partialorder %v1153, 8.507059e+37
    %v1155 = vand.u32 %v1086, 2147483648
    %v1156 = vor.u32 1.1754944e-38, %v1155
    %v1157 = vsel %vm1154, %v1156, %v1152
    %v1158 = vmul.f32 %v1066, %v1157
    %v1159 = vrcp.pop %v1089
    %v1160 = vmul.f32 %v1089, %v1159
    %v1161 = vsub.f32 1.0, %v1160
    %v1162 = vmul.f32 %v1159, %v1161
    %v1163 = vadd.f32 %v1159, %v1162
    %vm1164 = vweird.f32 %v1089
    %vm1165 = vweird.f32 %v1159
    %vm1166 = vmor %vm1164, %vm1165
    %v1167 = vsel %vm1166, %v1159, %v1163
    %v1168 = vand.u32 2147483647, %v1089
    %vm1169 = vcmp.eq.f32.partialorder %v1168, 8.507059e+37
    %v1170 = vand.u32 %v1089, 2147483648
    %v1171 = vor.u32 1.1754944e-38, %v1170
    %v1172 = vsel %vm1169, %v1171, %v1167
    %v1173 = vmul.f32 %v1068, %v1172
    %v1174 = vrcp.pop %v1092
    %v1175 = vmul.f32 %v1092, %v1174
    %v1176 = vsub.f32 1.0, %v1175
    %v1177 = vmul.f32 %v1174, %v1176
    %v1178 = vadd.f32 %v1174, %v1177
    %vm1179 = vweird.f32 %v1092
    %vm1180 = vweird.f32 %v1174
    %vm1181 = vmor %vm1179, %vm1180
    %v1182 = vsel %vm1181, %v1174, %v1178
    %v1183 = vand.u32 2147483647, %v1092
    %vm1184 = vcmp.eq.f32.partialorder %v1183, 8.507059e+37
    %v1185 = vand.u32 %v1092, 2147483648
    %v1186 = vor.u32 1.1754944e-38, %v1185
    %v1187 = vsel %vm1184, %v1186, %v1182
    %v1188 = vmul.f32 %v1070, %v1187
    %v1189 = vrcp.pop %v1095
    %v1190 = vmul.f32 %v1095, %v1189
    %v1191 = vsub.f32 1.0, %v1190
    %v1192 = vmul.f32 %v1189, %v1191
    %v1193 = vadd.f32 %v1189, %v1192
    %vm1194 = vweird.f32 %v1095
    %vm1195 = vweird.f32 %v1189
    %vm1196 = vmor %vm1194, %vm1195
    %v1197 = vsel %vm1196, %v1189, %v1193
    %v1198 = vand.u32 2147483647, %v1095
    %vm1199 = vcmp.eq.f32.partialorder %v1198, 8.507059e+37
    %v1200 = vand.u32 %v1095, 2147483648
    %v1201 = vor.u32 1.1754944e-38, %v1200
    %v1202 = vsel %vm1199, %v1201, %v1197
    %v1203 = vmul.f32 %v1072, %v1202
    %v1204 = vrcp.pop %v1098
    %v1205 = vmul.f32 %v1098, %v1204
    %v1206 = vsub.f32 1.0, %v1205
    %v1207 = vmul.f32 %v1204, %v1206
    %v1208 = vadd.f32 %v1204, %v1207
    %vm1209 = vweird.f32 %v1098
    %vm1210 = vweird.f32 %v1204
    %vm1211 = vmor %vm1209, %vm1210
    %v1212 = vsel %vm1211, %v1204, %v1208
    %v1213 = vand.u32 2147483647, %v1098
    %vm1214 = vcmp.eq.f32.partialorder %v1213, 8.507059e+37
    %v1215 = vand.u32 %v1098, 2147483648
    %v1216 = vor.u32 1.1754944e-38, %v1215
    %v1217 = vsel %vm1214, %v1216, %v1212
    %v1218 = vmul.f32 %v1074, %v1217
    %1219 = vrot.lane.b32.xlu0 %v939, 64
    %v1220 = vpop.permute.xlu0 %1219
    %1221 = vrot.lane.b32.xlu0 %v942, 64
    %v1222 = vpop.permute.xlu0 %1221
    %v1226 = vsel %vm307, %v1113, 0
    %v1229 = vsel %vm307, %v1128, 0
    %v1232 = vsel %vm307, %v1143, 0
    %v1235 = vsel %vm307, %v1158, 0
    %v1238 = vsel %vm307, %v1173, 0
    %v1241 = vsel %vm307, %v1188, 0
    %v1244 = vsel %vm307, %v1203, 0
    %v1247 = vsel %vm307, %v1218, 0
    %1249 = vmatpush.msra.mxu0 0.0
    %1250 = vmatpush.msra.mxu0 0.0
    %1251 = vmatpush.msra.mxu0 0.0
    %1252 = vmatpush.msra.mxu0 0.0
    %1253 = vmatpush.msra.mxu0 0.0
    %1254 = vmatpush.msra.mxu0 0.0
    %1255 = vmatpush.msra.mxu0 0.0
    %1256 = vmatpush.msra.mxu0 0.0
    %1257 = vmatpush.msra.mxu0 0.0
    %1258 = vmatpush.msra.mxu0 0.0
    %1259 = vmatpush.msra.mxu0 0.0
    %1260 = vmatpush.msra.mxu0 0.0
    %1261 = vmatpush.msra.mxu0 0.0
    %1262 = vmatpush.msra.mxu0 0.0
    %1263 = vmatpush.msra.mxu0 %v1222
    %1264 = vmatpush.msra.mxu0 %v1220
    %1265 = vmatmul.f32.gmra.mxu0 %v1226
    %v1266 = vpop.f32.mrf.mxu0
    %v1267 = vadd.f32 0.0, %v1266
    %1268 = vmatmul.f32.gmra.mxu0 %v1229
    %v1269 = vpop.f32.mrf.mxu0
    %v1270 = vadd.f32 0.0, %v1269
    %1271 = vmatmul.f32.gmra.mxu0 %v1232
    %v1272 = vpop.f32.mrf.mxu0
    %v1273 = vadd.f32 0.0, %v1272
    %1274 = vmatmul.f32.gmra.mxu0 %v1235
    %v1275 = vpop.f32.mrf.mxu0
    %v1276 = vadd.f32 0.0, %v1275
    %1277 = vmatmul.f32.gmra.mxu0 %v1238
    %v1278 = vpop.f32.mrf.mxu0
    %v1279 = vadd.f32 0.0, %v1278
    %1280 = vmatmul.f32.gmra.mxu0 %v1241
    %v1281 = vpop.f32.mrf.mxu0
    %v1282 = vadd.f32 0.0, %v1281
    %1283 = vmatmul.f32.gmra.mxu0 %v1244
    %v1284 = vpop.f32.mrf.mxu0
    %v1285 = vadd.f32 0.0, %v1284
    %1286 = vmatmul.f32.gmra.mxu0 %v1247
    %v1287 = vpop.f32.mrf.mxu0
    %v1288 = vadd.f32 0.0, %v1287
    %1289 = vdwg.mxu0
    %v1290 = vmul.f32 %v1267, %v103
    %v1291 = vmul.f32 %v1270, %v104
    %v1292 = vmul.f32 %v1273, %v105
    %v1293 = vmul.f32 %v1276, %v106
    %v1294 = vmul.f32 %v1279, %v107
    %v1295 = vmul.f32 %v1282, %v108
    %v1296 = vmul.f32 %v1285, %v109
    %v1297 = vmul.f32 %v1288, %v110
    %v1298 = vadd.f32 %v1290, %v1292
    %v1299 = vadd.f32 %v1291, %v1293
    %v1300 = vadd.f32 %v1298, %v1294
    %v1301 = vadd.f32 %v1299, %v1295
    %v1302 = vadd.f32 %v1300, %v1296
    %v1303 = vadd.f32 %v1301, %v1297
    %s1304 = scalar_lea.vmem [#allocation4], 32
    %v1305 = vld [vmem:[%s1304] sm:$0xff]
    %v1306 = vld [vmem:[%s1304 + $0x8] sm:$0xff]
    %v1307 = vld [vmem:[%s1304 + $0x10] sm:$0xff]
    %v1308 = vld [vmem:[%s1304 + $0x18] sm:$0xff]
    %s1309 = scalar_lea.vmem %s8, 1
    %v1310 = vld [vmem:[%s1309] sm:$0x1]
    %v1312 = vperm.slane %v1310, 0
    %v1315 = vsel %vm125, %v1302, 0
    %v1318 = vsel %vm125, %v1303, 0
    %1320 = vmatpush.msra.mxu0 0.0
    %1321 = vmatpush.msra.mxu0 0.0
    %1322 = vmatpush.msra.mxu0 0.0
    %1323 = vmatpush.msra.mxu0 0.0
    %1324 = vmatpush.msra.mxu0 0.0
    %1325 = vmatpush.msra.mxu0 0.0
    %1326 = vmatpush.msra.mxu0 0.0
    %1327 = vmatpush.msra.mxu0 0.0
    %1328 = vmatpush.msra.mxu0 0.0
    %1329 = vmatpush.msra.mxu0 0.0
    %1330 = vmatpush.msra.mxu0 0.0
    %1331 = vmatpush.msra.mxu0 0.0
    %1332 = vmatpush.msra.mxu0 %v1308
    %1333 = vmatpush.msra.mxu0 %v1307
    %1334 = vmatpush.msra.mxu0 %v1306
    %1335 = vmatpush.msra.mxu0 %v1305
    %1336 = vmatmul.f32.gmra.mxu0 %v1315
    %v1337 = vpop.f32.mrf.mxu0
    %v1338 = vadd.f32 %v1312, %v1337
    %1339 = vmatmul.f32.gmra.mxu0 %v1318
    %v1340 = vpop.f32.mrf.mxu0
    %v1341 = vadd.f32 %v1312, %v1340
    %1342 = vdwg.mxu0
    %v1343 = vadd.f32 %v1338, %v903
    %v1344 = vadd.f32 %v1341, %v904
    %s1345 = scalar_lea.vmem %s9, 1
    %v1346 = vld [vmem:[%s1345] sm:$0x1]
    %s1347 = scalar_lea.vmem %s10, 1
    %v1348 = vld [vmem:[%s1347] sm:$0x1]
    %v1349 = vsel %vm125, %v1343, 0.0
    %1350 = vadd.xlane.f32.xlu0 %v1349
    %v1351 = vpop.xlane.xlu0 %1350
    %v1352 = vsel %vm125, %v1344, 0.0
    %1353 = vadd.xlane.f32.xlu0 %v1352
    %v1354 = vpop.xlane.xlu0 %1353
    %v1355 = vmul.f32 %v1351, %v138
    %v1356 = vmul.f32 %v1354, %v138
    %v1357 = vsub.f32 %v1343, %v1355
    %v1358 = vsub.f32 %v1344, %v1356
    %v1359 = vmul.f32 %v1357, %v1357
    %v1360 = vmul.f32 %v1358, %v1358
    %v1361 = vsel %vm125, %v1359, 0.0
    %1362 = vadd.xlane.f32.xlu0 %v1361
    %v1363 = vpop.xlane.xlu0 %1362
    %v1364 = vsel %vm125, %v1360, 0.0
    %1365 = vadd.xlane.f32.xlu0 %v1364
    %v1366 = vpop.xlane.xlu0 %1365
    %v1367 = vmul.f32 %v1363, %v138
    %v1368 = vmul.f32 %v1366, %v138
    %v1369 = vadd.f32 %v1367, 1e-12
    %v1370 = vadd.f32 %v1368, 1e-12
    %v1371 = vrsqrt.pop %v1369
    %v1372 = vmul.f32 %v1371, %v1369
    %v1373 = vmul.f32 %v1372, %v1371
    %v1374 = vmul.f32 0.5, %v1373
    %v1375 = vsub.f32 1.5, %v1374
    %v1376 = vmul.f32 %v1371, %v1375
    %vm1377 = vweird.f32 %v1369
    %vm1378 = vweird.f32 %v1371
    %vm1379 = vmor %vm1377, %vm1378
    %v1380 = vsel %vm1379, %v1371, %v1376
    %v1381 = vrsqrt.pop %v1370
    %v1382 = vmul.f32 %v1381, %v1370
    %v1383 = vmul.f32 %v1382, %v1381
    %v1384 = vmul.f32 0.5, %v1383
    %v1385 = vsub.f32 1.5, %v1384
    %v1386 = vmul.f32 %v1381, %v1385
    %vm1387 = vweird.f32 %v1370
    %vm1388 = vweird.f32 %v1381
    %vm1389 = vmor %vm1387, %vm1388
    %v1390 = vsel %vm1389, %v1381, %v1386
    %v1391 = vmul.f32 %v1357, %v1380
    %v1392 = vmul.f32 %v1358, %v1390
    %v1394 = vperm.slane %v1346, 0
    %v1396 = vmul.f32 %v1391, %v1394
    %v1397 = vmul.f32 %v1392, %v1394
    %v1399 = vperm.slane %v1348, 0
    %v1401 = vadd.f32 %v1396, %v1399
    %v1402 = vadd.f32 %v1397, %v1399
    %s1403 = scalar_lea.vmem %s11, 32
    %v1404 = vld [vmem:[%s1403] sm:$0xff]
    %v1405 = vld [vmem:[%s1403 + $0x8] sm:$0xff]
    %v1406 = vld [vmem:[%s1403 + $0x10] sm:$0xff]
    %v1407 = vld [vmem:[%s1403 + $0x18] sm:$0xff]
    %s1408 = scalar_lea.vmem %s12, 1
    %v1409 = vld [vmem:[%s1408] sm:$0x1]
    %v1411 = vperm.slane %v1409, 0
    %v1414 = vsel %vm125, %v1401, 0
    %v1417 = vsel %vm125, %v1402, 0
    %1419 = vmatpush.msra.mxu0 0.0
    %1420 = vmatpush.msra.mxu0 0.0
    %1421 = vmatpush.msra.mxu0 0.0
    %1422 = vmatpush.msra.mxu0 0.0
    %1423 = vmatpush.msra.mxu0 0.0
    %1424 = vmatpush.msra.mxu0 0.0
    %1425 = vmatpush.msra.mxu0 0.0
    %1426 = vmatpush.msra.mxu0 0.0
    %1427 = vmatpush.msra.mxu0 0.0
    %1428 = vmatpush.msra.mxu0 0.0
    %1429 = vmatpush.msra.mxu0 0.0
    %1430 = vmatpush.msra.mxu0 0.0
    %1431 = vmatpush.msra.mxu0 %v1407
    %1432 = vmatpush.msra.mxu0 %v1406
    %1433 = vmatpush.msra.mxu0 %v1405
    %1434 = vmatpush.msra.mxu0 %v1404
    %1435 = vmatmul.f32.gmra.mxu0 %v1414
    %v1436 = vpop.f32.mrf.mxu0
    %v1437 = vadd.f32 %v1411, %v1436
    %1438 = vmatmul.f32.gmra.mxu0 %v1417
    %v1439 = vpop.f32.mrf.mxu0
    %v1440 = vadd.f32 %v1411, %v1439
    %1441 = vdwg.mxu0
    %v1442 = vmul.f32 %v1437, 0.5
    %v1443 = vmul.f32 %v1440, 0.5
    %v1444 = vmul.f32 %v1437, 0.70710677
    %v1445 = vmul.f32 %v1440, 0.70710677
    %v1446 = vmul.f32 %v1444, %v1444
    %v1447 = vmin.f32 16.0, %v1446
    %v1448 = vmul.f32 %v1447, 2.1237322e-06
    %v1449 = vadd.f32 %v1448, 0.00028619796
    %v1450 = vmul.f32 %v1447, %v1449
    %v1451 = vadd.f32 %v1450, 0.0036580483
    %v1452 = vmul.f32 %v1447, %v1451
    %v1453 = vadd.f32 %v1452, 0.05243302
    %v1454 = vmul.f32 %v1447, %v1453
    %v1455 = vadd.f32 %v1454, 0.18741608
    %v1456 = vmul.f32 %v1447, %v1455
    %v1457 = vadd.f32 %v1456, 1.1283791
    %v1458 = vmul.f32 %v1444, %v1457
    %v1459 = vmul.f32 %v1447, 3.8918573e-05
    %v1460 = vadd.f32 %v1459, 0.001143296
    %v1461 = vmul.f32 %v1447, %v1460
    %v1462 = vadd.f32 %v1461, 0.014752088
    %v1463 = vmul.f32 %v1447, %v1462
    %v1464 = vadd.f32 %v1463, 0.112945676
    %v1465 = vmul.f32 %v1447, %v1464
    %v1466 = vadd.f32 %v1465, 0.4994258
    %v1467 = vmul.f32 %v1447, %v1466
    %v1468 = vadd.f32 %v1467, 1.0
    %v1469 = vrcp.pop %v1468
    %v1470 = vmul.f32 %v1468, %v1469
    %v1471 = vsub.f32 1.0, %v1470
    %v1472 = vmul.f32 %v1469, %v1471
    %v1473 = vadd.f32 %v1469, %v1472
    %vm1474 = vweird.f32 %v1468
    %vm1475 = vweird.f32 %v1469
    %vm1476 = vmor %vm1474, %vm1475
    %v1477 = vsel %vm1476, %v1469, %v1473
    %v1478 = vand.u32 2147483647, %v1468
    %vm1479 = vcmp.eq.f32.partialorder %v1478, 8.507059e+37
    %v1480 = vand.u32 %v1468, 2147483648
    %v1481 = vor.u32 1.1754944e-38, %v1480
    %v1482 = vsel %vm1479, %v1481, %v1477
    %v1483 = vmul.f32 %v1458, %v1482
    %v1484 = vmin.f32 %v1483, 1.0
    %v1485 = vmax.f32 %v1484, -1.0
    %v1486 = vmul.f32 %v1445, %v1445
    %v1487 = vmin.f32 16.0, %v1486
    %v1488 = vmul.f32 %v1487, 2.1237322e-06
    %v1489 = vadd.f32 %v1488, 0.00028619796
    %v1490 = vmul.f32 %v1487, %v1489
    %v1491 = vadd.f32 %v1490, 0.0036580483
    %v1492 = vmul.f32 %v1487, %v1491
    %v1493 = vadd.f32 %v1492, 0.05243302
    %v1494 = vmul.f32 %v1487, %v1493
    %v1495 = vadd.f32 %v1494, 0.18741608
    %v1496 = vmul.f32 %v1487, %v1495
    %v1497 = vadd.f32 %v1496, 1.1283791
    %v1498 = vmul.f32 %v1445, %v1497
    %v1499 = vmul.f32 %v1487, 3.8918573e-05
    %v1500 = vadd.f32 %v1499, 0.001143296
    %v1501 = vmul.f32 %v1487, %v1500
    %v1502 = vadd.f32 %v1501, 0.014752088
    %v1503 = vmul.f32 %v1487, %v1502
    %v1504 = vadd.f32 %v1503, 0.112945676
    %v1505 = vmul.f32 %v1487, %v1504
    %v1506 = vadd.f32 %v1505, 0.4994258
    %v1507 = vmul.f32 %v1487, %v1506
    %v1508 = vadd.f32 %v1507, 1.0
    %v1509 = vrcp.pop %v1508
    %v1510 = vmul.f32 %v1508, %v1509
    %v1511 = vsub.f32 1.0, %v1510
    %v1512 = vmul.f32 %v1509, %v1511
    %v1513 = vadd.f32 %v1509, %v1512
    %vm1514 = vweird.f32 %v1508
    %vm1515 = vweird.f32 %v1509
    %vm1516 = vmor %vm1514, %vm1515
    %v1517 = vsel %vm1516, %v1509, %v1513
    %v1518 = vand.u32 2147483647, %v1508
    %vm1519 = vcmp.eq.f32.partialorder %v1518, 8.507059e+37
    %v1520 = vand.u32 %v1508, 2147483648
    %v1521 = vor.u32 1.1754944e-38, %v1520
    %v1522 = vsel %vm1519, %v1521, %v1517
    %v1523 = vmul.f32 %v1498, %v1522
    %v1524 = vmin.f32 %v1523, 1.0
    %v1525 = vmax.f32 %v1524, -1.0
    %v1526 = vadd.f32 %v1485, 1.0
    %v1527 = vadd.f32 %v1525, 1.0
    %v1528 = vmul.f32 %v1442, %v1526
    %v1529 = vmul.f32 %v1443, %v1527
    %s1530 = scalar_lea.vmem %s13, 64
    %v1531 = vld [vmem:[%s1530] sm:$0xff]
    %v1532 = vld [vmem:[%s1530 + $0x8] sm:$0xff]
    %v1533 = vld [vmem:[%s1530 + $0x10] sm:$0xff]
    %v1534 = vld [vmem:[%s1530 + $0x18] sm:$0xff]
    %v1535 = vld [vmem:[%s1530 + $0x20] sm:$0xff]
    %v1536 = vld [vmem:[%s1530 + $0x28] sm:$0xff]
    %v1537 = vld [vmem:[%s1530 + $0x30] sm:$0xff]
    %v1538 = vld [vmem:[%s1530 + $0x38] sm:$0xff]
    %s1539 = scalar_lea.vmem %s14, 1
    %v1540 = vld [vmem:[%s1539] sm:$0x1]
    %v1542 = vperm.slane %v1540, 0
    %v1545 = vsel %vm817, %v1528, 0
    %v1548 = vsel %vm817, %v1529, 0
    %1550 = vmatpush.msra.mxu0 0.0
    %1551 = vmatpush.msra.mxu0 0.0
    %1552 = vmatpush.msra.mxu0 0.0
    %1553 = vmatpush.msra.mxu0 0.0
    %1554 = vmatpush.msra.mxu0 0.0
    %1555 = vmatpush.msra.mxu0 0.0
    %1556 = vmatpush.msra.mxu0 0.0
    %1557 = vmatpush.msra.mxu0 0.0
    %1558 = vmatpush.msra.mxu0 %v1538
    %1559 = vmatpush.msra.mxu0 %v1537
    %1560 = vmatpush.msra.mxu0 %v1536
    %1561 = vmatpush.msra.mxu0 %v1535
    %1562 = vmatpush.msra.mxu0 %v1534
    %1563 = vmatpush.msra.mxu0 %v1533
    %1564 = vmatpush.msra.mxu0 %v1532
    %1565 = vmatpush.msra.mxu0 %v1531
    %1566 = vmatmul.f32.gmra.mxu0 %v1545
    %v1567 = vpop.f32.mrf.mxu0
    %v1568 = vadd.f32 %v1542, %v1567
    %1569 = vmatmul.f32.gmra.mxu0 %v1548
    %v1570 = vpop.f32.mrf.mxu0
    %v1571 = vadd.f32 %v1542, %v1570
    %1572 = vdwg.mxu0
    %v1573 = vadd.f32 %v1568, %v1401
    %v1574 = vadd.f32 %v1571, %v1402
    %s1575 = scalar_lea.vmem %s15, 1
    %v1576 = vld [vmem:[%s1575] sm:$0x1]
    %s1577 = scalar_lea.vmem %s16, 1
    %v1578 = vld [vmem:[%s1577] sm:$0x1]
    %v1579 = vsel %vm125, %v1573, 0.0
    %1580 = vadd.xlane.f32.xlu0 %v1579
    %v1581 = vpop.xlane.xlu0 %1580
    %v1582 = vsel %vm125, %v1574, 0.0
    %1583 = vadd.xlane.f32.xlu0 %v1582
    %v1584 = vpop.xlane.xlu0 %1583
    %v1585 = vmul.f32 %v1581, %v138
    %v1586 = vmul.f32 %v1584, %v138
    %v1587 = vsub.f32 %v1573, %v1585
    %v1588 = vsub.f32 %v1574, %v1586
    %v1589 = vmul.f32 %v1587, %v1587
    %v1590 = vmul.f32 %v1588, %v1588
    %v1591 = vsel %vm125, %v1589, 0.0
    %1592 = vadd.xlane.f32.xlu0 %v1591
    %v1593 = vpop.xlane.xlu0 %1592
    %v1594 = vsel %vm125, %v1590, 0.0
    %1595 = vadd.xlane.f32.xlu0 %v1594
    %v1596 = vpop.xlane.xlu0 %1595
    %v1597 = vmul.f32 %v1593, %v138
    %v1598 = vmul.f32 %v1596, %v138
    %v1599 = vadd.f32 %v1597, 1e-12
    %v1600 = vadd.f32 %v1598, 1e-12
    %v1601 = vrsqrt.pop %v1599
    %v1602 = vmul.f32 %v1601, %v1599
    %v1603 = vmul.f32 %v1602, %v1601
    %v1604 = vmul.f32 0.5, %v1603
    %v1605 = vsub.f32 1.5, %v1604
    %v1606 = vmul.f32 %v1601, %v1605
    %vm1607 = vweird.f32 %v1599
    %vm1608 = vweird.f32 %v1601
    %vm1609 = vmor %vm1607, %vm1608
    %v1610 = vsel %vm1609, %v1601, %v1606
    %v1611 = vrsqrt.pop %v1600
    %v1612 = vmul.f32 %v1611, %v1600
    %v1613 = vmul.f32 %v1612, %v1611
    %v1614 = vmul.f32 0.5, %v1613
    %v1615 = vsub.f32 1.5, %v1614
    %v1616 = vmul.f32 %v1611, %v1615
    %vm1617 = vweird.f32 %v1600
    %vm1618 = vweird.f32 %v1611
    %vm1619 = vmor %vm1617, %vm1618
    %v1620 = vsel %vm1619, %v1611, %v1616
    %v1621 = vmul.f32 %v1587, %v1610
    %v1622 = vmul.f32 %v1588, %v1620
    %v1624 = vperm.slane %v1576, 0
    %v1626 = vmul.f32 %v1621, %v1624
    %v1627 = vmul.f32 %v1622, %v1624
    %v1629 = vperm.slane %v1578, 0
    %v1631 = vadd.f32 %v1626, %v1629
    %v1632 = vadd.f32 %v1627, %v1629
    %s1633 = scalar_lea.vmem [#allocation2], 64
    %v1634 = vld [vmem:[%s1633] sm:$0xff]
    %v1635 = vld [vmem:[%s1633 + $0x8] sm:$0xff]
    %v1636 = vld [vmem:[%s1633 + $0x10] sm:$0xff]
    %v1637 = vld [vmem:[%s1633 + $0x18] sm:$0xff]
    %s1638 = scalar_lea.vmem %s6, 2
    %v1639 = vld [vmem:[%s1638] sm:$0x1]
    %v1641 = vperm.slane %v1639, 0
    %v1644 = vsel %vm125, %v1631, 0
    %v1647 = vsel %vm125, %v1632, 0
    %1649 = vmatpush.msra.mxu0 0.0
    %1650 = vmatpush.msra.mxu0 0.0
    %1651 = vmatpush.msra.mxu0 0.0
    %1652 = vmatpush.msra.mxu0 0.0
    %1653 = vmatpush.msra.mxu0 0.0
    %1654 = vmatpush.msra.mxu0 0.0
    %1655 = vmatpush.msra.mxu0 0.0
    %1656 = vmatpush.msra.mxu0 0.0
    %1657 = vmatpush.msra.mxu0 0.0
    %1658 = vmatpush.msra.mxu0 0.0
    %1659 = vmatpush.msra.mxu0 0.0
    %1660 = vmatpush.msra.mxu0 0.0
    %1661 = vmatpush.msra.mxu0 %v1637
    %1662 = vmatpush.msra.mxu0 %v1636
    %1663 = vmatpush.msra.mxu0 %v1635
    %1664 = vmatpush.msra.mxu0 %v1634
    %1665 = vmatmul.f32.gmra.mxu0 %v1644
    %v1666 = vpop.f32.mrf.mxu0
    %v1667 = vadd.f32 %v1641, %v1666
    %1668 = vmatmul.f32.gmra.mxu0 %v1647
    %v1669 = vpop.f32.mrf.mxu0
    %v1670 = vadd.f32 %v1641, %v1669
    %1671 = vdwg.mxu0
    %v1672 = vmul.f32 %v1667, %v111
    %v1673 = vmul.f32 %v1670, %v112
    %v1674 = vmul.f32 %v1667, %v113
    %v1675 = vmul.f32 %v1670, %v114
    %v1676 = vmul.f32 %v1667, %v115
    %v1677 = vmul.f32 %v1670, %v116
    %v1678 = vmul.f32 %v1667, %v117
    %v1679 = vmul.f32 %v1670, %v118
    %1682 = vrot.lane.b32.xlu0 %v1667, 96
    %v1683 = vpop.permute.xlu0 %1682
    %1684 = vrot.lane.b32.xlu0 %v1670, 96
    %v1685 = vpop.permute.xlu0 %1684
    %v1687 = vsel %vm125, %v1672, 0
    %v1690 = vsel %vm125, %v1673, 0
    %v1693 = vsel %vm125, %v1674, 0
    %v1696 = vsel %vm125, %v1675, 0
    %v1699 = vsel %vm125, %v1676, 0
    %v1702 = vsel %vm125, %v1677, 0
    %v1705 = vsel %vm125, %v1678, 0
    %v1708 = vsel %vm125, %v1679, 0
    %v1710 = vsel %vm125, %v1683, 0
    %v1712 = vsel %vm125, %v1685, 0
    %1714 = vmatpush.xpose.msra.mxu0 0.0
    %1715 = vmatpush.xpose.msra.mxu0 0.0
    %1716 = vmatpush.xpose.msra.mxu0 0.0
    %1717 = vmatpush.xpose.msra.mxu0 0.0
    %1718 = vmatpush.xpose.msra.mxu0 0.0
    %1719 = vmatpush.xpose.msra.mxu0 0.0
    %1720 = vmatpush.xpose.msra.mxu0 0.0
    %1721 = vmatpush.xpose.msra.mxu0 0.0
    %1722 = vmatpush.xpose.msra.mxu0 0.0
    %1723 = vmatpush.xpose.msra.mxu0 0.0
    %1724 = vmatpush.xpose.msra.mxu0 0.0
    %1725 = vmatpush.xpose.msra.mxu0 0.0
    %1726 = vmatpush.xpose.msra.mxu0 0.0
    %1727 = vmatpush.xpose.msra.mxu0 0.0
    %1728 = vmatpush.xpose.msra.mxu0 %v1712
    %1729 = vmatpush.xpose.msra.mxu0 %v1710
    %1730 = vmatmul.f32.gmra.mxu0 %v1687
    %v1731 = vpop.f32.mrf.mxu0
    %v1732 = vadd.f32 %v119, %v1731
    %1733 = vmatmul.f32.gmra.mxu0 %v1690
    %v1734 = vpop.f32.mrf.mxu0
    %v1735 = vadd.f32 %v120, %v1734
    %1736 = vmatmul.f32.gmra.mxu0 %v1693
    %v1737 = vpop.f32.mrf.mxu0
    %v1738 = vadd.f32 %v119, %v1737
    %1739 = vmatmul.f32.gmra.mxu0 %v1696
    %v1740 = vpop.f32.mrf.mxu0
    %v1741 = vadd.f32 %v120, %v1740
    %1742 = vmatmul.f32.gmra.mxu0 %v1699
    %v1743 = vpop.f32.mrf.mxu0
    %v1744 = vadd.f32 %v119, %v1743
    %1745 = vmatmul.f32.gmra.mxu0 %v1702
    %v1746 = vpop.f32.mrf.mxu0
    %v1747 = vadd.f32 %v120, %v1746
    %1748 = vmatmul.f32.gmra.mxu0 %v1705
    %v1749 = vpop.f32.mrf.mxu0
    %v1750 = vadd.f32 %v119, %v1749
    %1751 = vmatmul.f32.gmra.mxu0 %v1708
    %v1752 = vpop.f32.mrf.mxu0
    %v1753 = vadd.f32 %v120, %v1752
    %1754 = vdwg.mxu0
    %v1755 = vsel %vm307, %v1732, -inf
    %1756 = vmax.xlane.f32.xlu0 %v1755
    %v1757 = vpop.xlane.xlu0 %1756
    %v1758 = vsel %vm307, %v1735, -inf
    %1759 = vmax.xlane.f32.xlu0 %v1758
    %v1760 = vpop.xlane.xlu0 %1759
    %v1761 = vsel %vm307, %v1738, -inf
    %1762 = vmax.xlane.f32.xlu0 %v1761
    %v1763 = vpop.xlane.xlu0 %1762
    %v1764 = vsel %vm307, %v1741, -inf
    %1765 = vmax.xlane.f32.xlu0 %v1764
    %v1766 = vpop.xlane.xlu0 %1765
    %v1767 = vsel %vm307, %v1744, -inf
    %1768 = vmax.xlane.f32.xlu0 %v1767
    %v1769 = vpop.xlane.xlu0 %1768
    %v1770 = vsel %vm307, %v1747, -inf
    %1771 = vmax.xlane.f32.xlu0 %v1770
    %v1772 = vpop.xlane.xlu0 %1771
    %v1773 = vsel %vm307, %v1750, -inf
    %1774 = vmax.xlane.f32.xlu0 %v1773
    %v1775 = vpop.xlane.xlu0 %1774
    %v1776 = vsel %vm307, %v1753, -inf
    %1777 = vmax.xlane.f32.xlu0 %v1776
    %v1778 = vpop.xlane.xlu0 %1777
    %v1779 = vsub.f32 %v1732, %v1757
    %v1780 = vsub.f32 %v1735, %v1760
    %v1781 = vsub.f32 %v1738, %v1763
    %v1782 = vsub.f32 %v1741, %v1766
    %v1783 = vsub.f32 %v1744, %v1769
    %v1784 = vsub.f32 %v1747, %v1772
    %v1785 = vsub.f32 %v1750, %v1775
    %v1786 = vsub.f32 %v1753, %v1778
    %v1787 = vmul.f32 %v1779, 1.442695
    %v1788 = vpow.pop %v1787
    %v1789 = vmul.f32 %v1780, 1.442695
    %v1790 = vpow.pop %v1789
    %v1791 = vmul.f32 %v1781, 1.442695
    %v1792 = vpow.pop %v1791
    %v1793 = vmul.f32 %v1782, 1.442695
    %v1794 = vpow.pop %v1793
    %v1795 = vmul.f32 %v1783, 1.442695
    %v1796 = vpow.pop %v1795
    %v1797 = vmul.f32 %v1784, 1.442695
    %v1798 = vpow.pop %v1797
    %v1799 = vmul.f32 %v1785, 1.442695
    %v1800 = vpow.pop %v1799
    %v1801 = vmul.f32 %v1786, 1.442695
    %v1802 = vpow.pop %v1801
    %v1803 = vsel %vm307, %v1788, 0.0
    %1804 = vadd.xlane.f32.xlu0 %v1803
    %v1805 = vpop.xlane.xlu0 %1804
    %v1806 = vsel %vm307, %v1790, 0.0
    %1807 = vadd.xlane.f32.xlu0 %v1806
    %v1808 = vpop.xlane.xlu0 %1807
    %v1809 = vsel %vm307, %v1792, 0.0
    %1810 = vadd.xlane.f32.xlu0 %v1809
    %v1811 = vpop.xlane.xlu0 %1810
    %v1812 = vsel %vm307, %v1794, 0.0
    %1813 = vadd.xlane.f32.xlu0 %v1812
    %v1814 = vpop.xlane.xlu0 %1813
    %v1815 = vsel %vm307, %v1796, 0.0
    %1816 = vadd.xlane.f32.xlu0 %v1815
    %v1817 = vpop.xlane.xlu0 %1816
    %v1818 = vsel %vm307, %v1798, 0.0
    %1819 = vadd.xlane.f32.xlu0 %v1818
    %v1820 = vpop.xlane.xlu0 %1819
    %v1821 = vsel %vm307, %v1800, 0.0
    %1822 = vadd.xlane.f32.xlu0 %v1821
    %v1823 = vpop.xlane.xlu0 %1822
    %v1824 = vsel %vm307, %v1802, 0.0
    %1825 = vadd.xlane.f32.xlu0 %v1824
    %v1826 = vpop.xlane.xlu0 %1825
    %v1827 = vrcp.pop %v1805
    %v1828 = vmul.f32 %v1805, %v1827
    %v1829 = vsub.f32 1.0, %v1828
    %v1830 = vmul.f32 %v1827, %v1829
    %v1831 = vadd.f32 %v1827, %v1830
    %vm1832 = vweird.f32 %v1805
    %vm1833 = vweird.f32 %v1827
    %vm1834 = vmor %vm1832, %vm1833
    %v1835 = vsel %vm1834, %v1827, %v1831
    %v1836 = vand.u32 2147483647, %v1805
    %vm1837 = vcmp.eq.f32.partialorder %v1836, 8.507059e+37
    %v1838 = vand.u32 %v1805, 2147483648
    %v1839 = vor.u32 1.1754944e-38, %v1838
    %v1840 = vsel %vm1837, %v1839, %v1835
    %v1841 = vmul.f32 %v1788, %v1840
    %v1842 = vrcp.pop %v1808
    %v1843 = vmul.f32 %v1808, %v1842
    %v1844 = vsub.f32 1.0, %v1843
    %v1845 = vmul.f32 %v1842, %v1844
    %v1846 = vadd.f32 %v1842, %v1845
    %vm1847 = vweird.f32 %v1808
    %vm1848 = vweird.f32 %v1842
    %vm1849 = vmor %vm1847, %vm1848
    %v1850 = vsel %vm1849, %v1842, %v1846
    %v1851 = vand.u32 2147483647, %v1808
    %vm1852 = vcmp.eq.f32.partialorder %v1851, 8.507059e+37
    %v1853 = vand.u32 %v1808, 2147483648
    %v1854 = vor.u32 1.1754944e-38, %v1853
    %v1855 = vsel %vm1852, %v1854, %v1850
    %v1856 = vmul.f32 %v1790, %v1855
    %v1857 = vrcp.pop %v1811
    %v1858 = vmul.f32 %v1811, %v1857
    %v1859 = vsub.f32 1.0, %v1858
    %v1860 = vmul.f32 %v1857, %v1859
    %v1861 = vadd.f32 %v1857, %v1860
    %vm1862 = vweird.f32 %v1811
    %vm1863 = vweird.f32 %v1857
    %vm1864 = vmor %vm1862, %vm1863
    %v1865 = vsel %vm1864, %v1857, %v1861
    %v1866 = vand.u32 2147483647, %v1811
    %vm1867 = vcmp.eq.f32.partialorder %v1866, 8.507059e+37
    %v1868 = vand.u32 %v1811, 2147483648
    %v1869 = vor.u32 1.1754944e-38, %v1868
    %v1870 = vsel %vm1867, %v1869, %v1865
    %v1871 = vmul.f32 %v1792, %v1870
    %v1872 = vrcp.pop %v1814
    %v1873 = vmul.f32 %v1814, %v1872
    %v1874 = vsub.f32 1.0, %v1873
    %v1875 = vmul.f32 %v1872, %v1874
    %v1876 = vadd.f32 %v1872, %v1875
    %vm1877 = vweird.f32 %v1814
    %vm1878 = vweird.f32 %v1872
    %vm1879 = vmor %vm1877, %vm1878
    %v1880 = vsel %vm1879, %v1872, %v1876
    %v1881 = vand.u32 2147483647, %v1814
    %vm1882 = vcmp.eq.f32.partialorder %v1881, 8.507059e+37
    %v1883 = vand.u32 %v1814, 2147483648
    %v1884 = vor.u32 1.1754944e-38, %v1883
    %v1885 = vsel %vm1882, %v1884, %v1880
    %v1886 = vmul.f32 %v1794, %v1885
    %v1887 = vrcp.pop %v1817
    %v1888 = vmul.f32 %v1817, %v1887
    %v1889 = vsub.f32 1.0, %v1888
    %v1890 = vmul.f32 %v1887, %v1889
    %v1891 = vadd.f32 %v1887, %v1890
    %vm1892 = vweird.f32 %v1817
    %vm1893 = vweird.f32 %v1887
    %vm1894 = vmor %vm1892, %vm1893
    %v1895 = vsel %vm1894, %v1887, %v1891
    %v1896 = vand.u32 2147483647, %v1817
    %vm1897 = vcmp.eq.f32.partialorder %v1896, 8.507059e+37
    %v1898 = vand.u32 %v1817, 2147483648
    %v1899 = vor.u32 1.1754944e-38, %v1898
    %v1900 = vsel %vm1897, %v1899, %v1895
    %v1901 = vmul.f32 %v1796, %v1900
    %v1902 = vrcp.pop %v1820
    %v1903 = vmul.f32 %v1820, %v1902
    %v1904 = vsub.f32 1.0, %v1903
    %v1905 = vmul.f32 %v1902, %v1904
    %v1906 = vadd.f32 %v1902, %v1905
    %vm1907 = vweird.f32 %v1820
    %vm1908 = vweird.f32 %v1902
    %vm1909 = vmor %vm1907, %vm1908
    %v1910 = vsel %vm1909, %v1902, %v1906
    %v1911 = vand.u32 2147483647, %v1820
    %vm1912 = vcmp.eq.f32.partialorder %v1911, 8.507059e+37
    %v1913 = vand.u32 %v1820, 2147483648
    %v1914 = vor.u32 1.1754944e-38, %v1913
    %v1915 = vsel %vm1912, %v1914, %v1910
    %v1916 = vmul.f32 %v1798, %v1915
    %v1917 = vrcp.pop %v1823
    %v1918 = vmul.f32 %v1823, %v1917
    %v1919 = vsub.f32 1.0, %v1918
    %v1920 = vmul.f32 %v1917, %v1919
    %v1921 = vadd.f32 %v1917, %v1920
    %vm1922 = vweird.f32 %v1823
    %vm1923 = vweird.f32 %v1917
    %vm1924 = vmor %vm1922, %vm1923
    %v1925 = vsel %vm1924, %v1917, %v1921
    %v1926 = vand.u32 2147483647, %v1823
    %vm1927 = vcmp.eq.f32.partialorder %v1926, 8.507059e+37
    %v1928 = vand.u32 %v1823, 2147483648
    %v1929 = vor.u32 1.1754944e-38, %v1928
    %v1930 = vsel %vm1927, %v1929, %v1925
    %v1931 = vmul.f32 %v1800, %v1930
    %v1932 = vrcp.pop %v1826
    %v1933 = vmul.f32 %v1826, %v1932
    %v1934 = vsub.f32 1.0, %v1933
    %v1935 = vmul.f32 %v1932, %v1934
    %v1936 = vadd.f32 %v1932, %v1935
    %vm1937 = vweird.f32 %v1826
    %vm1938 = vweird.f32 %v1932
    %vm1939 = vmor %vm1937, %vm1938
    %v1940 = vsel %vm1939, %v1932, %v1936
    %v1941 = vand.u32 2147483647, %v1826
    %vm1942 = vcmp.eq.f32.partialorder %v1941, 8.507059e+37
    %v1943 = vand.u32 %v1826, 2147483648
    %v1944 = vor.u32 1.1754944e-38, %v1943
    %v1945 = vsel %vm1942, %v1944, %v1940
    %v1946 = vmul.f32 %v1802, %v1945
    %1947 = vrot.lane.b32.xlu0 %v1667, 64
    %v1948 = vpop.permute.xlu0 %1947
    %1949 = vrot.lane.b32.xlu0 %v1670, 64
    %v1950 = vpop.permute.xlu0 %1949
    %v1954 = vsel %vm307, %v1841, 0
    %v1957 = vsel %vm307, %v1856, 0
    %v1960 = vsel %vm307, %v1871, 0
    %v1963 = vsel %vm307, %v1886, 0
    %v1966 = vsel %vm307, %v1901, 0
    %v1969 = vsel %vm307, %v1916, 0
    %v1972 = vsel %vm307, %v1931, 0
    %v1975 = vsel %vm307, %v1946, 0
    %1977 = vmatpush.msra.mxu0 0.0
    %1978 = vmatpush.msra.mxu0 0.0
    %1979 = vmatpush.msra.mxu0 0.0
    %1980 = vmatpush.msra.mxu0 0.0
    %1981 = vmatpush.msra.mxu0 0.0
    %1982 = vmatpush.msra.mxu0 0.0
    %1983 = vmatpush.msra.mxu0 0.0
    %1984 = vmatpush.msra.mxu0 0.0
    %1985 = vmatpush.msra.mxu0 0.0
    %1986 = vmatpush.msra.mxu0 0.0
    %1987 = vmatpush.msra.mxu0 0.0
    %1988 = vmatpush.msra.mxu0 0.0
    %1989 = vmatpush.msra.mxu0 0.0
    %1990 = vmatpush.msra.mxu0 0.0
    %1991 = vmatpush.msra.mxu0 %v1950
    %1992 = vmatpush.msra.mxu0 %v1948
    %1993 = vmatmul.f32.gmra.mxu0 %v1954
    %v1994 = vpop.f32.mrf.mxu0
    %v1995 = vadd.f32 0.0, %v1994
    %1996 = vmatmul.f32.gmra.mxu0 %v1957
    %v1997 = vpop.f32.mrf.mxu0
    %v1998 = vadd.f32 0.0, %v1997
    %1999 = vmatmul.f32.gmra.mxu0 %v1960
    %v2000 = vpop.f32.mrf.mxu0
    %v2001 = vadd.f32 0.0, %v2000
    %2002 = vmatmul.f32.gmra.mxu0 %v1963
    %v2003 = vpop.f32.mrf.mxu0
    %v2004 = vadd.f32 0.0, %v2003
    %2005 = vmatmul.f32.gmra.mxu0 %v1966
    %v2006 = vpop.f32.mrf.mxu0
    %v2007 = vadd.f32 0.0, %v2006
    %2008 = vmatmul.f32.gmra.mxu0 %v1969
    %v2009 = vpop.f32.mrf.mxu0
    %v2010 = vadd.f32 0.0, %v2009
    %2011 = vmatmul.f32.gmra.mxu0 %v1972
    %v2012 = vpop.f32.mrf.mxu0
    %v2013 = vadd.f32 0.0, %v2012
    %2014 = vmatmul.f32.gmra.mxu0 %v1975
    %v2015 = vpop.f32.mrf.mxu0
    %v2016 = vadd.f32 0.0, %v2015
    %2017 = vdwg.mxu0
    %v2018 = vmul.f32 %v1995, %v103
    %v2019 = vmul.f32 %v1998, %v104
    %v2020 = vmul.f32 %v2001, %v105
    %v2021 = vmul.f32 %v2004, %v106
    %v2022 = vmul.f32 %v2007, %v107
    %v2023 = vmul.f32 %v2010, %v108
    %v2024 = vmul.f32 %v2013, %v109
    %v2025 = vmul.f32 %v2016, %v110
    %v2026 = vadd.f32 %v2018, %v2020
    %v2027 = vadd.f32 %v2019, %v2021
    %v2028 = vadd.f32 %v2026, %v2022
    %v2029 = vadd.f32 %v2027, %v2023
    %v2030 = vadd.f32 %v2028, %v2024
    %v2031 = vadd.f32 %v2029, %v2025
    %s2032 = scalar_lea.vmem [#allocation4], 64
    %v2033 = vld [vmem:[%s2032] sm:$0xff]
    %v2034 = vld [vmem:[%s2032 + $0x8] sm:$0xff]
    %v2035 = vld [vmem:[%s2032 + $0x10] sm:$0xff]
    %v2036 = vld [vmem:[%s2032 + $0x18] sm:$0xff]
    %s2037 = scalar_lea.vmem %s8, 2
    %v2038 = vld [vmem:[%s2037] sm:$0x1]
    %v2040 = vperm.slane %v2038, 0
    %v2043 = vsel %vm125, %v2030, 0
    %v2046 = vsel %vm125, %v2031, 0
    %2048 = vmatpush.msra.mxu0 0.0
    %2049 = vmatpush.msra.mxu0 0.0
    %2050 = vmatpush.msra.mxu0 0.0
    %2051 = vmatpush.msra.mxu0 0.0
    %2052 = vmatpush.msra.mxu0 0.0
    %2053 = vmatpush.msra.mxu0 0.0
    %2054 = vmatpush.msra.mxu0 0.0
    %2055 = vmatpush.msra.mxu0 0.0
    %2056 = vmatpush.msra.mxu0 0.0
    %2057 = vmatpush.msra.mxu0 0.0
    %2058 = vmatpush.msra.mxu0 0.0
    %2059 = vmatpush.msra.mxu0 0.0
    %2060 = vmatpush.msra.mxu0 %v2036
    %2061 = vmatpush.msra.mxu0 %v2035
    %2062 = vmatpush.msra.mxu0 %v2034
    %2063 = vmatpush.msra.mxu0 %v2033
    %2064 = vmatmul.f32.gmra.mxu0 %v2043
    %v2065 = vpop.f32.mrf.mxu0
    %v2066 = vadd.f32 %v2040, %v2065
    %2067 = vmatmul.f32.gmra.mxu0 %v2046
    %v2068 = vpop.f32.mrf.mxu0
    %v2069 = vadd.f32 %v2040, %v2068
    %2070 = vdwg.mxu0
    %v2071 = vadd.f32 %v2066, %v1631
    %v2072 = vadd.f32 %v2069, %v1632
    %s2073 = scalar_lea.vmem %s9, 2
    %v2074 = vld [vmem:[%s2073] sm:$0x1]
    %s2075 = scalar_lea.vmem %s10, 2
    %v2076 = vld [vmem:[%s2075] sm:$0x1]
    %v2077 = vsel %vm125, %v2071, 0.0
    %2078 = vadd.xlane.f32.xlu0 %v2077
    %v2079 = vpop.xlane.xlu0 %2078
    %v2080 = vsel %vm125, %v2072, 0.0
    %2081 = vadd.xlane.f32.xlu0 %v2080
    %v2082 = vpop.xlane.xlu0 %2081
    %v2083 = vmul.f32 %v2079, %v138
    %v2084 = vmul.f32 %v2082, %v138
    %v2085 = vsub.f32 %v2071, %v2083
    %v2086 = vsub.f32 %v2072, %v2084
    %v2087 = vmul.f32 %v2085, %v2085
    %v2088 = vmul.f32 %v2086, %v2086
    %v2089 = vsel %vm125, %v2087, 0.0
    %2090 = vadd.xlane.f32.xlu0 %v2089
    %v2091 = vpop.xlane.xlu0 %2090
    %v2092 = vsel %vm125, %v2088, 0.0
    %2093 = vadd.xlane.f32.xlu0 %v2092
    %v2094 = vpop.xlane.xlu0 %2093
    %v2095 = vmul.f32 %v2091, %v138
    %v2096 = vmul.f32 %v2094, %v138
    %v2097 = vadd.f32 %v2095, 1e-12
    %v2098 = vadd.f32 %v2096, 1e-12
    %v2099 = vrsqrt.pop %v2097
    %v2100 = vmul.f32 %v2099, %v2097
    %v2101 = vmul.f32 %v2100, %v2099
    %v2102 = vmul.f32 0.5, %v2101
    %v2103 = vsub.f32 1.5, %v2102
    %v2104 = vmul.f32 %v2099, %v2103
    %vm2105 = vweird.f32 %v2097
    %vm2106 = vweird.f32 %v2099
    %vm2107 = vmor %vm2105, %vm2106
    %v2108 = vsel %vm2107, %v2099, %v2104
    %v2109 = vrsqrt.pop %v2098
    %v2110 = vmul.f32 %v2109, %v2098
    %v2111 = vmul.f32 %v2110, %v2109
    %v2112 = vmul.f32 0.5, %v2111
    %v2113 = vsub.f32 1.5, %v2112
    %v2114 = vmul.f32 %v2109, %v2113
    %vm2115 = vweird.f32 %v2098
    %vm2116 = vweird.f32 %v2109
    %vm2117 = vmor %vm2115, %vm2116
    %v2118 = vsel %vm2117, %v2109, %v2114
    %v2119 = vmul.f32 %v2085, %v2108
    %v2120 = vmul.f32 %v2086, %v2118
    %v2122 = vperm.slane %v2074, 0
    %v2124 = vmul.f32 %v2119, %v2122
    %v2125 = vmul.f32 %v2120, %v2122
    %v2127 = vperm.slane %v2076, 0
    %v2129 = vadd.f32 %v2124, %v2127
    %v2130 = vadd.f32 %v2125, %v2127
    %s2131 = scalar_lea.vmem %s11, 64
    %v2132 = vld [vmem:[%s2131] sm:$0xff]
    %v2133 = vld [vmem:[%s2131 + $0x8] sm:$0xff]
    %v2134 = vld [vmem:[%s2131 + $0x10] sm:$0xff]
    %v2135 = vld [vmem:[%s2131 + $0x18] sm:$0xff]
    %s2136 = scalar_lea.vmem %s12, 2
    %v2137 = vld [vmem:[%s2136] sm:$0x1]
    %v2139 = vperm.slane %v2137, 0
    %v2142 = vsel %vm125, %v2129, 0
    %v2145 = vsel %vm125, %v2130, 0
    %2147 = vmatpush.msra.mxu0 0.0
    %2148 = vmatpush.msra.mxu0 0.0
    %2149 = vmatpush.msra.mxu0 0.0
    %2150 = vmatpush.msra.mxu0 0.0
    %2151 = vmatpush.msra.mxu0 0.0
    %2152 = vmatpush.msra.mxu0 0.0
    %2153 = vmatpush.msra.mxu0 0.0
    %2154 = vmatpush.msra.mxu0 0.0
    %2155 = vmatpush.msra.mxu0 0.0
    %2156 = vmatpush.msra.mxu0 0.0
    %2157 = vmatpush.msra.mxu0 0.0
    %2158 = vmatpush.msra.mxu0 0.0
    %2159 = vmatpush.msra.mxu0 %v2135
    %2160 = vmatpush.msra.mxu0 %v2134
    %2161 = vmatpush.msra.mxu0 %v2133
    %2162 = vmatpush.msra.mxu0 %v2132
    %2163 = vmatmul.f32.gmra.mxu0 %v2142
    %v2164 = vpop.f32.mrf.mxu0
    %v2165 = vadd.f32 %v2139, %v2164
    %2166 = vmatmul.f32.gmra.mxu0 %v2145
    %v2167 = vpop.f32.mrf.mxu0
    %v2168 = vadd.f32 %v2139, %v2167
    %2169 = vdwg.mxu0
    %v2170 = vmul.f32 %v2165, 0.5
    %v2171 = vmul.f32 %v2168, 0.5
    %v2172 = vmul.f32 %v2165, 0.70710677
    %v2173 = vmul.f32 %v2168, 0.70710677
    %v2174 = vmul.f32 %v2172, %v2172
    %v2175 = vmin.f32 16.0, %v2174
    %v2176 = vmul.f32 %v2175, 2.1237322e-06
    %v2177 = vadd.f32 %v2176, 0.00028619796
    %v2178 = vmul.f32 %v2175, %v2177
    %v2179 = vadd.f32 %v2178, 0.0036580483
    %v2180 = vmul.f32 %v2175, %v2179
    %v2181 = vadd.f32 %v2180, 0.05243302
    %v2182 = vmul.f32 %v2175, %v2181
    %v2183 = vadd.f32 %v2182, 0.18741608
    %v2184 = vmul.f32 %v2175, %v2183
    %v2185 = vadd.f32 %v2184, 1.1283791
    %v2186 = vmul.f32 %v2172, %v2185
    %v2187 = vmul.f32 %v2175, 3.8918573e-05
    %v2188 = vadd.f32 %v2187, 0.001143296
    %v2189 = vmul.f32 %v2175, %v2188
    %v2190 = vadd.f32 %v2189, 0.014752088
    %v2191 = vmul.f32 %v2175, %v2190
    %v2192 = vadd.f32 %v2191, 0.112945676
    %v2193 = vmul.f32 %v2175, %v2192
    %v2194 = vadd.f32 %v2193, 0.4994258
    %v2195 = vmul.f32 %v2175, %v2194
    %v2196 = vadd.f32 %v2195, 1.0
    %v2197 = vrcp.pop %v2196
    %v2198 = vmul.f32 %v2196, %v2197
    %v2199 = vsub.f32 1.0, %v2198
    %v2200 = vmul.f32 %v2197, %v2199
    %v2201 = vadd.f32 %v2197, %v2200
    %vm2202 = vweird.f32 %v2196
    %vm2203 = vweird.f32 %v2197
    %vm2204 = vmor %vm2202, %vm2203
    %v2205 = vsel %vm2204, %v2197, %v2201
    %v2206 = vand.u32 2147483647, %v2196
    %vm2207 = vcmp.eq.f32.partialorder %v2206, 8.507059e+37
    %v2208 = vand.u32 %v2196, 2147483648
    %v2209 = vor.u32 1.1754944e-38, %v2208
    %v2210 = vsel %vm2207, %v2209, %v2205
    %v2211 = vmul.f32 %v2186, %v2210
    %v2212 = vmin.f32 %v2211, 1.0
    %v2213 = vmax.f32 %v2212, -1.0
    %v2214 = vmul.f32 %v2173, %v2173
    %v2215 = vmin.f32 16.0, %v2214
    %v2216 = vmul.f32 %v2215, 2.1237322e-06
    %v2217 = vadd.f32 %v2216, 0.00028619796
    %v2218 = vmul.f32 %v2215, %v2217
    %v2219 = vadd.f32 %v2218, 0.0036580483
    %v2220 = vmul.f32 %v2215, %v2219
    %v2221 = vadd.f32 %v2220, 0.05243302
    %v2222 = vmul.f32 %v2215, %v2221
    %v2223 = vadd.f32 %v2222, 0.18741608
    %v2224 = vmul.f32 %v2215, %v2223
    %v2225 = vadd.f32 %v2224, 1.1283791
    %v2226 = vmul.f32 %v2173, %v2225
    %v2227 = vmul.f32 %v2215, 3.8918573e-05
    %v2228 = vadd.f32 %v2227, 0.001143296
    %v2229 = vmul.f32 %v2215, %v2228
    %v2230 = vadd.f32 %v2229, 0.014752088
    %v2231 = vmul.f32 %v2215, %v2230
    %v2232 = vadd.f32 %v2231, 0.112945676
    %v2233 = vmul.f32 %v2215, %v2232
    %v2234 = vadd.f32 %v2233, 0.4994258
    %v2235 = vmul.f32 %v2215, %v2234
    %v2236 = vadd.f32 %v2235, 1.0
    %v2237 = vrcp.pop %v2236
    %v2238 = vmul.f32 %v2236, %v2237
    %v2239 = vsub.f32 1.0, %v2238
    %v2240 = vmul.f32 %v2237, %v2239
    %v2241 = vadd.f32 %v2237, %v2240
    %vm2242 = vweird.f32 %v2236
    %vm2243 = vweird.f32 %v2237
    %vm2244 = vmor %vm2242, %vm2243
    %v2245 = vsel %vm2244, %v2237, %v2241
    %v2246 = vand.u32 2147483647, %v2236
    %vm2247 = vcmp.eq.f32.partialorder %v2246, 8.507059e+37
    %v2248 = vand.u32 %v2236, 2147483648
    %v2249 = vor.u32 1.1754944e-38, %v2248
    %v2250 = vsel %vm2247, %v2249, %v2245
    %v2251 = vmul.f32 %v2226, %v2250
    %v2252 = vmin.f32 %v2251, 1.0
    %v2253 = vmax.f32 %v2252, -1.0
    %v2254 = vadd.f32 %v2213, 1.0
    %v2255 = vadd.f32 %v2253, 1.0
    %v2256 = vmul.f32 %v2170, %v2254
    %v2257 = vmul.f32 %v2171, %v2255
    %s2258 = scalar_lea.vmem %s13, 128
    %v2259 = vld [vmem:[%s2258] sm:$0xff]
    %v2260 = vld [vmem:[%s2258 + $0x8] sm:$0xff]
    %v2261 = vld [vmem:[%s2258 + $0x10] sm:$0xff]
    %v2262 = vld [vmem:[%s2258 + $0x18] sm:$0xff]
    %v2263 = vld [vmem:[%s2258 + $0x20] sm:$0xff]
    %v2264 = vld [vmem:[%s2258 + $0x28] sm:$0xff]
    %v2265 = vld [vmem:[%s2258 + $0x30] sm:$0xff]
    %v2266 = vld [vmem:[%s2258 + $0x38] sm:$0xff]
    %s2267 = scalar_lea.vmem %s14, 2
    %v2268 = vld [vmem:[%s2267] sm:$0x1]
    %v2270 = vperm.slane %v2268, 0
    %v2273 = vsel %vm817, %v2256, 0
    %v2276 = vsel %vm817, %v2257, 0
    %2278 = vmatpush.msra.mxu0 0.0
    %2279 = vmatpush.msra.mxu0 0.0
    %2280 = vmatpush.msra.mxu0 0.0
    %2281 = vmatpush.msra.mxu0 0.0
    %2282 = vmatpush.msra.mxu0 0.0
    %2283 = vmatpush.msra.mxu0 0.0
    %2284 = vmatpush.msra.mxu0 0.0
    %2285 = vmatpush.msra.mxu0 0.0
    %2286 = vmatpush.msra.mxu0 %v2266
    %2287 = vmatpush.msra.mxu0 %v2265
    %2288 = vmatpush.msra.mxu0 %v2264
    %2289 = vmatpush.msra.mxu0 %v2263
    %2290 = vmatpush.msra.mxu0 %v2262
    %2291 = vmatpush.msra.mxu0 %v2261
    %2292 = vmatpush.msra.mxu0 %v2260
    %2293 = vmatpush.msra.mxu0 %v2259
    %2294 = vmatmul.f32.gmra.mxu0 %v2273
    %v2295 = vpop.f32.mrf.mxu0
    %v2296 = vadd.f32 %v2270, %v2295
    %2297 = vmatmul.f32.gmra.mxu0 %v2276
    %v2298 = vpop.f32.mrf.mxu0
    %v2299 = vadd.f32 %v2270, %v2298
    %2300 = vdwg.mxu0
    %v2301 = vadd.f32 %v2296, %v2129
    %v2302 = vadd.f32 %v2299, %v2130
    %s2303 = scalar_lea.vmem %s15, 2
    %v2304 = vld [vmem:[%s2303] sm:$0x1]
    %s2305 = scalar_lea.vmem %s16, 2
    %v2306 = vld [vmem:[%s2305] sm:$0x1]
    %v2307 = vsel %vm125, %v2301, 0.0
    %2308 = vadd.xlane.f32.xlu0 %v2307
    %v2309 = vpop.xlane.xlu0 %2308
    %v2310 = vsel %vm125, %v2302, 0.0
    %2311 = vadd.xlane.f32.xlu0 %v2310
    %v2312 = vpop.xlane.xlu0 %2311
    %v2313 = vmul.f32 %v2309, %v138
    %v2314 = vmul.f32 %v2312, %v138
    %v2315 = vsub.f32 %v2301, %v2313
    %v2316 = vsub.f32 %v2302, %v2314
    %v2317 = vmul.f32 %v2315, %v2315
    %v2318 = vmul.f32 %v2316, %v2316
    %v2319 = vsel %vm125, %v2317, 0.0
    %2320 = vadd.xlane.f32.xlu0 %v2319
    %v2321 = vpop.xlane.xlu0 %2320
    %v2322 = vsel %vm125, %v2318, 0.0
    %2323 = vadd.xlane.f32.xlu0 %v2322
    %v2324 = vpop.xlane.xlu0 %2323
    %v2325 = vmul.f32 %v2321, %v138
    %v2326 = vmul.f32 %v2324, %v138
    %v2327 = vadd.f32 %v2325, 1e-12
    %v2328 = vadd.f32 %v2326, 1e-12
    %v2329 = vrsqrt.pop %v2327
    %v2330 = vmul.f32 %v2329, %v2327
    %v2331 = vmul.f32 %v2330, %v2329
    %v2332 = vmul.f32 0.5, %v2331
    %v2333 = vsub.f32 1.5, %v2332
    %v2334 = vmul.f32 %v2329, %v2333
    %vm2335 = vweird.f32 %v2327
    %vm2336 = vweird.f32 %v2329
    %vm2337 = vmor %vm2335, %vm2336
    %v2338 = vsel %vm2337, %v2329, %v2334
    %v2339 = vrsqrt.pop %v2328
    %v2340 = vmul.f32 %v2339, %v2328
    %v2341 = vmul.f32 %v2340, %v2339
    %v2342 = vmul.f32 0.5, %v2341
    %v2343 = vsub.f32 1.5, %v2342
    %v2344 = vmul.f32 %v2339, %v2343
    %vm2345 = vweird.f32 %v2328
    %vm2346 = vweird.f32 %v2339
    %vm2347 = vmor %vm2345, %vm2346
    %v2348 = vsel %vm2347, %v2339, %v2344
    %v2349 = vmul.f32 %v2315, %v2338
    %v2350 = vmul.f32 %v2316, %v2348
    %v2352 = vperm.slane %v2304, 0
    %v2354 = vmul.f32 %v2349, %v2352
    %v2355 = vmul.f32 %v2350, %v2352
    %v2357 = vperm.slane %v2306, 0
    %v2359 = vadd.f32 %v2354, %v2357
    %v2360 = vadd.f32 %v2355, %v2357
    %s2361 = scalar_lea.vmem [#allocation2], 96
    %v2362 = vld [vmem:[%s2361] sm:$0xff]
    %v2363 = vld [vmem:[%s2361 + $0x8] sm:$0xff]
    %v2364 = vld [vmem:[%s2361 + $0x10] sm:$0xff]
    %v2365 = vld [vmem:[%s2361 + $0x18] sm:$0xff]
    %s2366 = scalar_lea.vmem %s6, 3
    %v2367 = vld [vmem:[%s2366] sm:$0x1]
    %v2369 = vperm.slane %v2367, 0
    %v2372 = vsel %vm125, %v2359, 0
    %v2375 = vsel %vm125, %v2360, 0
    %2377 = vmatpush.msra.mxu0 0.0
    %2378 = vmatpush.msra.mxu0 0.0
    %2379 = vmatpush.msra.mxu0 0.0
    %2380 = vmatpush.msra.mxu0 0.0
    %2381 = vmatpush.msra.mxu0 0.0
    %2382 = vmatpush.msra.mxu0 0.0
    %2383 = vmatpush.msra.mxu0 0.0
    %2384 = vmatpush.msra.mxu0 0.0
    %2385 = vmatpush.msra.mxu0 0.0
    %2386 = vmatpush.msra.mxu0 0.0
    %2387 = vmatpush.msra.mxu0 0.0
    %2388 = vmatpush.msra.mxu0 0.0
    %2389 = vmatpush.msra.mxu0 %v2365
    %2390 = vmatpush.msra.mxu0 %v2364
    %2391 = vmatpush.msra.mxu0 %v2363
    %2392 = vmatpush.msra.mxu0 %v2362
    %2393 = vmatmul.f32.gmra.mxu0 %v2372
    %v2394 = vpop.f32.mrf.mxu0
    %v2395 = vadd.f32 %v2369, %v2394
    %2396 = vmatmul.f32.gmra.mxu0 %v2375
    %v2397 = vpop.f32.mrf.mxu0
    %v2398 = vadd.f32 %v2369, %v2397
    %2399 = vdwg.mxu0
    %v2400 = vmul.f32 %v2395, %v111
    %v2401 = vmul.f32 %v2398, %v112
    %v2402 = vmul.f32 %v2395, %v113
    %v2403 = vmul.f32 %v2398, %v114
    %v2404 = vmul.f32 %v2395, %v115
    %v2405 = vmul.f32 %v2398, %v116
    %v2406 = vmul.f32 %v2395, %v117
    %v2407 = vmul.f32 %v2398, %v118
    %2410 = vrot.lane.b32.xlu0 %v2395, 96
    %v2411 = vpop.permute.xlu0 %2410
    %2412 = vrot.lane.b32.xlu0 %v2398, 96
    %v2413 = vpop.permute.xlu0 %2412
    %v2415 = vsel %vm125, %v2400, 0
    %v2418 = vsel %vm125, %v2401, 0
    %v2421 = vsel %vm125, %v2402, 0
    %v2424 = vsel %vm125, %v2403, 0
    %v2427 = vsel %vm125, %v2404, 0
    %v2430 = vsel %vm125, %v2405, 0
    %v2433 = vsel %vm125, %v2406, 0
    %v2436 = vsel %vm125, %v2407, 0
    %v2438 = vsel %vm125, %v2411, 0
    %v2440 = vsel %vm125, %v2413, 0
    %2442 = vmatpush.xpose.msra.mxu0 0.0
    %2443 = vmatpush.xpose.msra.mxu0 0.0
    %2444 = vmatpush.xpose.msra.mxu0 0.0
    %2445 = vmatpush.xpose.msra.mxu0 0.0
    %2446 = vmatpush.xpose.msra.mxu0 0.0
    %2447 = vmatpush.xpose.msra.mxu0 0.0
    %2448 = vmatpush.xpose.msra.mxu0 0.0
    %2449 = vmatpush.xpose.msra.mxu0 0.0
    %2450 = vmatpush.xpose.msra.mxu0 0.0
    %2451 = vmatpush.xpose.msra.mxu0 0.0
    %2452 = vmatpush.xpose.msra.mxu0 0.0
    %2453 = vmatpush.xpose.msra.mxu0 0.0
    %2454 = vmatpush.xpose.msra.mxu0 0.0
    %2455 = vmatpush.xpose.msra.mxu0 0.0
    %2456 = vmatpush.xpose.msra.mxu0 %v2440
    %2457 = vmatpush.xpose.msra.mxu0 %v2438
    %2458 = vmatmul.f32.gmra.mxu0 %v2415
    %v2459 = vpop.f32.mrf.mxu0
    %v2460 = vadd.f32 %v119, %v2459
    %2461 = vmatmul.f32.gmra.mxu0 %v2418
    %v2462 = vpop.f32.mrf.mxu0
    %v2463 = vadd.f32 %v120, %v2462
    %2464 = vmatmul.f32.gmra.mxu0 %v2421
    %v2465 = vpop.f32.mrf.mxu0
    %v2466 = vadd.f32 %v119, %v2465
    %2467 = vmatmul.f32.gmra.mxu0 %v2424
    %v2468 = vpop.f32.mrf.mxu0
    %v2469 = vadd.f32 %v120, %v2468
    %2470 = vmatmul.f32.gmra.mxu0 %v2427
    %v2471 = vpop.f32.mrf.mxu0
    %v2472 = vadd.f32 %v119, %v2471
    %2473 = vmatmul.f32.gmra.mxu0 %v2430
    %v2474 = vpop.f32.mrf.mxu0
    %v2475 = vadd.f32 %v120, %v2474
    %2476 = vmatmul.f32.gmra.mxu0 %v2433
    %v2477 = vpop.f32.mrf.mxu0
    %v2478 = vadd.f32 %v119, %v2477
    %2479 = vmatmul.f32.gmra.mxu0 %v2436
    %v2480 = vpop.f32.mrf.mxu0
    %v2481 = vadd.f32 %v120, %v2480
    %2482 = vdwg.mxu0
    %v2483 = vsel %vm307, %v2460, -inf
    %2484 = vmax.xlane.f32.xlu0 %v2483
    %v2485 = vpop.xlane.xlu0 %2484
    %v2486 = vsel %vm307, %v2463, -inf
    %2487 = vmax.xlane.f32.xlu0 %v2486
    %v2488 = vpop.xlane.xlu0 %2487
    %v2489 = vsel %vm307, %v2466, -inf
    %2490 = vmax.xlane.f32.xlu0 %v2489
    %v2491 = vpop.xlane.xlu0 %2490
    %v2492 = vsel %vm307, %v2469, -inf
    %2493 = vmax.xlane.f32.xlu0 %v2492
    %v2494 = vpop.xlane.xlu0 %2493
    %v2495 = vsel %vm307, %v2472, -inf
    %2496 = vmax.xlane.f32.xlu0 %v2495
    %v2497 = vpop.xlane.xlu0 %2496
    %v2498 = vsel %vm307, %v2475, -inf
    %2499 = vmax.xlane.f32.xlu0 %v2498
    %v2500 = vpop.xlane.xlu0 %2499
    %v2501 = vsel %vm307, %v2478, -inf
    %2502 = vmax.xlane.f32.xlu0 %v2501
    %v2503 = vpop.xlane.xlu0 %2502
    %v2504 = vsel %vm307, %v2481, -inf
    %2505 = vmax.xlane.f32.xlu0 %v2504
    %v2506 = vpop.xlane.xlu0 %2505
    %v2507 = vsub.f32 %v2460, %v2485
    %v2508 = vsub.f32 %v2463, %v2488
    %v2509 = vsub.f32 %v2466, %v2491
    %v2510 = vsub.f32 %v2469, %v2494
    %v2511 = vsub.f32 %v2472, %v2497
    %v2512 = vsub.f32 %v2475, %v2500
    %v2513 = vsub.f32 %v2478, %v2503
    %v2514 = vsub.f32 %v2481, %v2506
    %v2515 = vmul.f32 %v2507, 1.442695
    %v2516 = vpow.pop %v2515
    %v2517 = vmul.f32 %v2508, 1.442695
    %v2518 = vpow.pop %v2517
    %v2519 = vmul.f32 %v2509, 1.442695
    %v2520 = vpow.pop %v2519
    %v2521 = vmul.f32 %v2510, 1.442695
    %v2522 = vpow.pop %v2521
    %v2523 = vmul.f32 %v2511, 1.442695
    %v2524 = vpow.pop %v2523
    %v2525 = vmul.f32 %v2512, 1.442695
    %v2526 = vpow.pop %v2525
    %v2527 = vmul.f32 %v2513, 1.442695
    %v2528 = vpow.pop %v2527
    %v2529 = vmul.f32 %v2514, 1.442695
    %v2530 = vpow.pop %v2529
    %v2531 = vsel %vm307, %v2516, 0.0
    %2532 = vadd.xlane.f32.xlu0 %v2531
    %v2533 = vpop.xlane.xlu0 %2532
    %v2534 = vsel %vm307, %v2518, 0.0
    %2535 = vadd.xlane.f32.xlu0 %v2534
    %v2536 = vpop.xlane.xlu0 %2535
    %v2537 = vsel %vm307, %v2520, 0.0
    %2538 = vadd.xlane.f32.xlu0 %v2537
    %v2539 = vpop.xlane.xlu0 %2538
    %v2540 = vsel %vm307, %v2522, 0.0
    %2541 = vadd.xlane.f32.xlu0 %v2540
    %v2542 = vpop.xlane.xlu0 %2541
    %v2543 = vsel %vm307, %v2524, 0.0
    %2544 = vadd.xlane.f32.xlu0 %v2543
    %v2545 = vpop.xlane.xlu0 %2544
    %v2546 = vsel %vm307, %v2526, 0.0
    %2547 = vadd.xlane.f32.xlu0 %v2546
    %v2548 = vpop.xlane.xlu0 %2547
    %v2549 = vsel %vm307, %v2528, 0.0
    %2550 = vadd.xlane.f32.xlu0 %v2549
    %v2551 = vpop.xlane.xlu0 %2550
    %v2552 = vsel %vm307, %v2530, 0.0
    %2553 = vadd.xlane.f32.xlu0 %v2552
    %v2554 = vpop.xlane.xlu0 %2553
    %v2555 = vrcp.pop %v2533
    %v2556 = vmul.f32 %v2533, %v2555
    %v2557 = vsub.f32 1.0, %v2556
    %v2558 = vmul.f32 %v2555, %v2557
    %v2559 = vadd.f32 %v2555, %v2558
    %vm2560 = vweird.f32 %v2533
    %vm2561 = vweird.f32 %v2555
    %vm2562 = vmor %vm2560, %vm2561
    %v2563 = vsel %vm2562, %v2555, %v2559
    %v2564 = vand.u32 2147483647, %v2533
    %vm2565 = vcmp.eq.f32.partialorder %v2564, 8.507059e+37
    %v2566 = vand.u32 %v2533, 2147483648
    %v2567 = vor.u32 1.1754944e-38, %v2566
    %v2568 = vsel %vm2565, %v2567, %v2563
    %v2569 = vmul.f32 %v2516, %v2568
    %v2570 = vrcp.pop %v2536
    %v2571 = vmul.f32 %v2536, %v2570
    %v2572 = vsub.f32 1.0, %v2571
    %v2573 = vmul.f32 %v2570, %v2572
    %v2574 = vadd.f32 %v2570, %v2573
    %vm2575 = vweird.f32 %v2536
    %vm2576 = vweird.f32 %v2570
    %vm2577 = vmor %vm2575, %vm2576
    %v2578 = vsel %vm2577, %v2570, %v2574
    %v2579 = vand.u32 2147483647, %v2536
    %vm2580 = vcmp.eq.f32.partialorder %v2579, 8.507059e+37
    %v2581 = vand.u32 %v2536, 2147483648
    %v2582 = vor.u32 1.1754944e-38, %v2581
    %v2583 = vsel %vm2580, %v2582, %v2578
    %v2584 = vmul.f32 %v2518, %v2583
    %v2585 = vrcp.pop %v2539
    %v2586 = vmul.f32 %v2539, %v2585
    %v2587 = vsub.f32 1.0, %v2586
    %v2588 = vmul.f32 %v2585, %v2587
    %v2589 = vadd.f32 %v2585, %v2588
    %vm2590 = vweird.f32 %v2539
    %vm2591 = vweird.f32 %v2585
    %vm2592 = vmor %vm2590, %vm2591
    %v2593 = vsel %vm2592, %v2585, %v2589
    %v2594 = vand.u32 2147483647, %v2539
    %vm2595 = vcmp.eq.f32.partialorder %v2594, 8.507059e+37
    %v2596 = vand.u32 %v2539, 2147483648
    %v2597 = vor.u32 1.1754944e-38, %v2596
    %v2598 = vsel %vm2595, %v2597, %v2593
    %v2599 = vmul.f32 %v2520, %v2598
    %v2600 = vrcp.pop %v2542
    %v2601 = vmul.f32 %v2542, %v2600
    %v2602 = vsub.f32 1.0, %v2601
    %v2603 = vmul.f32 %v2600, %v2602
    %v2604 = vadd.f32 %v2600, %v2603
    %vm2605 = vweird.f32 %v2542
    %vm2606 = vweird.f32 %v2600
    %vm2607 = vmor %vm2605, %vm2606
    %v2608 = vsel %vm2607, %v2600, %v2604
    %v2609 = vand.u32 2147483647, %v2542
    %vm2610 = vcmp.eq.f32.partialorder %v2609, 8.507059e+37
    %v2611 = vand.u32 %v2542, 2147483648
    %v2612 = vor.u32 1.1754944e-38, %v2611
    %v2613 = vsel %vm2610, %v2612, %v2608
    %v2614 = vmul.f32 %v2522, %v2613
    %v2615 = vrcp.pop %v2545
    %v2616 = vmul.f32 %v2545, %v2615
    %v2617 = vsub.f32 1.0, %v2616
    %v2618 = vmul.f32 %v2615, %v2617
    %v2619 = vadd.f32 %v2615, %v2618
    %vm2620 = vweird.f32 %v2545
    %vm2621 = vweird.f32 %v2615
    %vm2622 = vmor %vm2620, %vm2621
    %v2623 = vsel %vm2622, %v2615, %v2619
    %v2624 = vand.u32 2147483647, %v2545
    %vm2625 = vcmp.eq.f32.partialorder %v2624, 8.507059e+37
    %v2626 = vand.u32 %v2545, 2147483648
    %v2627 = vor.u32 1.1754944e-38, %v2626
    %v2628 = vsel %vm2625, %v2627, %v2623
    %v2629 = vmul.f32 %v2524, %v2628
    %v2630 = vrcp.pop %v2548
    %v2631 = vmul.f32 %v2548, %v2630
    %v2632 = vsub.f32 1.0, %v2631
    %v2633 = vmul.f32 %v2630, %v2632
    %v2634 = vadd.f32 %v2630, %v2633
    %vm2635 = vweird.f32 %v2548
    %vm2636 = vweird.f32 %v2630
    %vm2637 = vmor %vm2635, %vm2636
    %v2638 = vsel %vm2637, %v2630, %v2634
    %v2639 = vand.u32 2147483647, %v2548
    %vm2640 = vcmp.eq.f32.partialorder %v2639, 8.507059e+37
    %v2641 = vand.u32 %v2548, 2147483648
    %v2642 = vor.u32 1.1754944e-38, %v2641
    %v2643 = vsel %vm2640, %v2642, %v2638
    %v2644 = vmul.f32 %v2526, %v2643
    %v2645 = vrcp.pop %v2551
    %v2646 = vmul.f32 %v2551, %v2645
    %v2647 = vsub.f32 1.0, %v2646
    %v2648 = vmul.f32 %v2645, %v2647
    %v2649 = vadd.f32 %v2645, %v2648
    %vm2650 = vweird.f32 %v2551
    %vm2651 = vweird.f32 %v2645
    %vm2652 = vmor %vm2650, %vm2651
    %v2653 = vsel %vm2652, %v2645, %v2649
    %v2654 = vand.u32 2147483647, %v2551
    %vm2655 = vcmp.eq.f32.partialorder %v2654, 8.507059e+37
    %v2656 = vand.u32 %v2551, 2147483648
    %v2657 = vor.u32 1.1754944e-38, %v2656
    %v2658 = vsel %vm2655, %v2657, %v2653
    %v2659 = vmul.f32 %v2528, %v2658
    %v2660 = vrcp.pop %v2554
    %v2661 = vmul.f32 %v2554, %v2660
    %v2662 = vsub.f32 1.0, %v2661
    %v2663 = vmul.f32 %v2660, %v2662
    %v2664 = vadd.f32 %v2660, %v2663
    %vm2665 = vweird.f32 %v2554
    %vm2666 = vweird.f32 %v2660
    %vm2667 = vmor %vm2665, %vm2666
    %v2668 = vsel %vm2667, %v2660, %v2664
    %v2669 = vand.u32 2147483647, %v2554
    %vm2670 = vcmp.eq.f32.partialorder %v2669, 8.507059e+37
    %v2671 = vand.u32 %v2554, 2147483648
    %v2672 = vor.u32 1.1754944e-38, %v2671
    %v2673 = vsel %vm2670, %v2672, %v2668
    %v2674 = vmul.f32 %v2530, %v2673
    %2675 = vrot.lane.b32.xlu0 %v2395, 64
    %v2676 = vpop.permute.xlu0 %2675
    %2677 = vrot.lane.b32.xlu0 %v2398, 64
    %v2678 = vpop.permute.xlu0 %2677
    %v2682 = vsel %vm307, %v2569, 0
    %v2685 = vsel %vm307, %v2584, 0
    %v2688 = vsel %vm307, %v2599, 0
    %v2691 = vsel %vm307, %v2614, 0
    %v2694 = vsel %vm307, %v2629, 0
    %v2697 = vsel %vm307, %v2644, 0
    %v2700 = vsel %vm307, %v2659, 0
    %v2703 = vsel %vm307, %v2674, 0
    %2705 = vmatpush.msra.mxu0 0.0
    %2706 = vmatpush.msra.mxu0 0.0
    %2707 = vmatpush.msra.mxu0 0.0
    %2708 = vmatpush.msra.mxu0 0.0
    %2709 = vmatpush.msra.mxu0 0.0
    %2710 = vmatpush.msra.mxu0 0.0
    %2711 = vmatpush.msra.mxu0 0.0
    %2712 = vmatpush.msra.mxu0 0.0
    %2713 = vmatpush.msra.mxu0 0.0
    %2714 = vmatpush.msra.mxu0 0.0
    %2715 = vmatpush.msra.mxu0 0.0
    %2716 = vmatpush.msra.mxu0 0.0
    %2717 = vmatpush.msra.mxu0 0.0
    %2718 = vmatpush.msra.mxu0 0.0
    %2719 = vmatpush.msra.mxu0 %v2678
    %2720 = vmatpush.msra.mxu0 %v2676
    %2721 = vmatmul.f32.gmra.mxu0 %v2682
    %v2722 = vpop.f32.mrf.mxu0
    %v2723 = vadd.f32 0.0, %v2722
    %2724 = vmatmul.f32.gmra.mxu0 %v2685
    %v2725 = vpop.f32.mrf.mxu0
    %v2726 = vadd.f32 0.0, %v2725
    %2727 = vmatmul.f32.gmra.mxu0 %v2688
    %v2728 = vpop.f32.mrf.mxu0
    %v2729 = vadd.f32 0.0, %v2728
    %2730 = vmatmul.f32.gmra.mxu0 %v2691
    %v2731 = vpop.f32.mrf.mxu0
    %v2732 = vadd.f32 0.0, %v2731
    %2733 = vmatmul.f32.gmra.mxu0 %v2694
    %v2734 = vpop.f32.mrf.mxu0
    %v2735 = vadd.f32 0.0, %v2734
    %2736 = vmatmul.f32.gmra.mxu0 %v2697
    %v2737 = vpop.f32.mrf.mxu0
    %v2738 = vadd.f32 0.0, %v2737
    %2739 = vmatmul.f32.gmra.mxu0 %v2700
    %v2740 = vpop.f32.mrf.mxu0
    %v2741 = vadd.f32 0.0, %v2740
    %2742 = vmatmul.f32.gmra.mxu0 %v2703
    %v2743 = vpop.f32.mrf.mxu0
    %v2744 = vadd.f32 0.0, %v2743
    %2745 = vdwg.mxu0
    %v2746 = vmul.f32 %v2723, %v103
    %v2747 = vmul.f32 %v2726, %v104
    %v2748 = vmul.f32 %v2729, %v105
    %v2749 = vmul.f32 %v2732, %v106
    %v2750 = vmul.f32 %v2735, %v107
    %v2751 = vmul.f32 %v2738, %v108
    %v2752 = vmul.f32 %v2741, %v109
    %v2753 = vmul.f32 %v2744, %v110
    %v2754 = vadd.f32 %v2746, %v2748
    %v2755 = vadd.f32 %v2747, %v2749
    %v2756 = vadd.f32 %v2754, %v2750
    %v2757 = vadd.f32 %v2755, %v2751
    %v2758 = vadd.f32 %v2756, %v2752
    %v2759 = vadd.f32 %v2757, %v2753
    %s2760 = scalar_lea.vmem [#allocation4], 96
    %v2761 = vld [vmem:[%s2760] sm:$0xff]
    %v2762 = vld [vmem:[%s2760 + $0x8] sm:$0xff]
    %v2763 = vld [vmem:[%s2760 + $0x10] sm:$0xff]
    %v2764 = vld [vmem:[%s2760 + $0x18] sm:$0xff]
    %s2765 = scalar_lea.vmem %s8, 3
    %v2766 = vld [vmem:[%s2765] sm:$0x1]
    %v2768 = vperm.slane %v2766, 0
    %v2771 = vsel %vm125, %v2758, 0
    %v2774 = vsel %vm125, %v2759, 0
    %2776 = vmatpush.msra.mxu0 0.0
    %2777 = vmatpush.msra.mxu0 0.0
    %2778 = vmatpush.msra.mxu0 0.0
    %2779 = vmatpush.msra.mxu0 0.0
    %2780 = vmatpush.msra.mxu0 0.0
    %2781 = vmatpush.msra.mxu0 0.0
    %2782 = vmatpush.msra.mxu0 0.0
    %2783 = vmatpush.msra.mxu0 0.0
    %2784 = vmatpush.msra.mxu0 0.0
    %2785 = vmatpush.msra.mxu0 0.0
    %2786 = vmatpush.msra.mxu0 0.0
    %2787 = vmatpush.msra.mxu0 0.0
    %2788 = vmatpush.msra.mxu0 %v2764
    %2789 = vmatpush.msra.mxu0 %v2763
    %2790 = vmatpush.msra.mxu0 %v2762
    %2791 = vmatpush.msra.mxu0 %v2761
    %2792 = vmatmul.f32.gmra.mxu0 %v2771
    %v2793 = vpop.f32.mrf.mxu0
    %v2794 = vadd.f32 %v2768, %v2793
    %2795 = vmatmul.f32.gmra.mxu0 %v2774
    %v2796 = vpop.f32.mrf.mxu0
    %v2797 = vadd.f32 %v2768, %v2796
    %2798 = vdwg.mxu0
    %v2799 = vadd.f32 %v2794, %v2359
    %v2800 = vadd.f32 %v2797, %v2360
    %s2801 = scalar_lea.vmem %s9, 3
    %v2802 = vld [vmem:[%s2801] sm:$0x1]
    %s2803 = scalar_lea.vmem %s10, 3
    %v2804 = vld [vmem:[%s2803] sm:$0x1]
    %v2805 = vsel %vm125, %v2799, 0.0
    %2806 = vadd.xlane.f32.xlu0 %v2805
    %v2807 = vpop.xlane.xlu0 %2806
    %v2808 = vsel %vm125, %v2800, 0.0
    %2809 = vadd.xlane.f32.xlu0 %v2808
    %v2810 = vpop.xlane.xlu0 %2809
    %v2811 = vmul.f32 %v2807, %v138
    %v2812 = vmul.f32 %v2810, %v138
    %v2813 = vsub.f32 %v2799, %v2811
    %v2814 = vsub.f32 %v2800, %v2812
    %v2815 = vmul.f32 %v2813, %v2813
    %v2816 = vmul.f32 %v2814, %v2814
    %v2817 = vsel %vm125, %v2815, 0.0
    %2818 = vadd.xlane.f32.xlu0 %v2817
    %v2819 = vpop.xlane.xlu0 %2818
    %v2820 = vsel %vm125, %v2816, 0.0
    %2821 = vadd.xlane.f32.xlu0 %v2820
    %v2822 = vpop.xlane.xlu0 %2821
    %v2823 = vmul.f32 %v2819, %v138
    %v2824 = vmul.f32 %v2822, %v138
    %v2825 = vadd.f32 %v2823, 1e-12
    %v2826 = vadd.f32 %v2824, 1e-12
    %v2827 = vrsqrt.pop %v2825
    %v2828 = vmul.f32 %v2827, %v2825
    %v2829 = vmul.f32 %v2828, %v2827
    %v2830 = vmul.f32 0.5, %v2829
    %v2831 = vsub.f32 1.5, %v2830
    %v2832 = vmul.f32 %v2827, %v2831
    %vm2833 = vweird.f32 %v2825
    %vm2834 = vweird.f32 %v2827
    %vm2835 = vmor %vm2833, %vm2834
    %v2836 = vsel %vm2835, %v2827, %v2832
    %v2837 = vrsqrt.pop %v2826
    %v2838 = vmul.f32 %v2837, %v2826
    %v2839 = vmul.f32 %v2838, %v2837
    %v2840 = vmul.f32 0.5, %v2839
    %v2841 = vsub.f32 1.5, %v2840
    %v2842 = vmul.f32 %v2837, %v2841
    %vm2843 = vweird.f32 %v2826
    %vm2844 = vweird.f32 %v2837
    %vm2845 = vmor %vm2843, %vm2844
    %v2846 = vsel %vm2845, %v2837, %v2842
    %v2847 = vmul.f32 %v2813, %v2836
    %v2848 = vmul.f32 %v2814, %v2846
    %v2850 = vperm.slane %v2802, 0
    %v2852 = vmul.f32 %v2847, %v2850
    %v2853 = vmul.f32 %v2848, %v2850
    %v2855 = vperm.slane %v2804, 0
    %v2857 = vadd.f32 %v2852, %v2855
    %v2858 = vadd.f32 %v2853, %v2855
    %s2859 = scalar_lea.vmem %s11, 96
    %v2860 = vld [vmem:[%s2859] sm:$0xff]
    %v2861 = vld [vmem:[%s2859 + $0x8] sm:$0xff]
    %v2862 = vld [vmem:[%s2859 + $0x10] sm:$0xff]
    %v2863 = vld [vmem:[%s2859 + $0x18] sm:$0xff]
    %s2864 = scalar_lea.vmem %s12, 3
    %v2865 = vld [vmem:[%s2864] sm:$0x1]
    %v2867 = vperm.slane %v2865, 0
    %v2870 = vsel %vm125, %v2857, 0
    %v2873 = vsel %vm125, %v2858, 0
    %2875 = vmatpush.msra.mxu0 0.0
    %2876 = vmatpush.msra.mxu0 0.0
    %2877 = vmatpush.msra.mxu0 0.0
    %2878 = vmatpush.msra.mxu0 0.0
    %2879 = vmatpush.msra.mxu0 0.0
    %2880 = vmatpush.msra.mxu0 0.0
    %2881 = vmatpush.msra.mxu0 0.0
    %2882 = vmatpush.msra.mxu0 0.0
    %2883 = vmatpush.msra.mxu0 0.0
    %2884 = vmatpush.msra.mxu0 0.0
    %2885 = vmatpush.msra.mxu0 0.0
    %2886 = vmatpush.msra.mxu0 0.0
    %2887 = vmatpush.msra.mxu0 %v2863
    %2888 = vmatpush.msra.mxu0 %v2862
    %2889 = vmatpush.msra.mxu0 %v2861
    %2890 = vmatpush.msra.mxu0 %v2860
    %2891 = vmatmul.f32.gmra.mxu0 %v2870
    %v2892 = vpop.f32.mrf.mxu0
    %v2893 = vadd.f32 %v2867, %v2892
    %2894 = vmatmul.f32.gmra.mxu0 %v2873
    %v2895 = vpop.f32.mrf.mxu0
    %v2896 = vadd.f32 %v2867, %v2895
    %2897 = vdwg.mxu0
    %v2898 = vmul.f32 %v2893, 0.5
    %v2899 = vmul.f32 %v2896, 0.5
    %v2900 = vmul.f32 %v2893, 0.70710677
    %v2901 = vmul.f32 %v2896, 0.70710677
    %v2902 = vmul.f32 %v2900, %v2900
    %v2903 = vmin.f32 16.0, %v2902
    %v2904 = vmul.f32 %v2903, 2.1237322e-06
    %v2905 = vadd.f32 %v2904, 0.00028619796
    %v2906 = vmul.f32 %v2903, %v2905
    %v2907 = vadd.f32 %v2906, 0.0036580483
    %v2908 = vmul.f32 %v2903, %v2907
    %v2909 = vadd.f32 %v2908, 0.05243302
    %v2910 = vmul.f32 %v2903, %v2909
    %v2911 = vadd.f32 %v2910, 0.18741608
    %v2912 = vmul.f32 %v2903, %v2911
    %v2913 = vadd.f32 %v2912, 1.1283791
    %v2914 = vmul.f32 %v2900, %v2913
    %v2915 = vmul.f32 %v2903, 3.8918573e-05
    %v2916 = vadd.f32 %v2915, 0.001143296
    %v2917 = vmul.f32 %v2903, %v2916
    %v2918 = vadd.f32 %v2917, 0.014752088
    %v2919 = vmul.f32 %v2903, %v2918
    %v2920 = vadd.f32 %v2919, 0.112945676
    %v2921 = vmul.f32 %v2903, %v2920
    %v2922 = vadd.f32 %v2921, 0.4994258
    %v2923 = vmul.f32 %v2903, %v2922
    %v2924 = vadd.f32 %v2923, 1.0
    %v2925 = vrcp.pop %v2924
    %v2926 = vmul.f32 %v2924, %v2925
    %v2927 = vsub.f32 1.0, %v2926
    %v2928 = vmul.f32 %v2925, %v2927
    %v2929 = vadd.f32 %v2925, %v2928
    %vm2930 = vweird.f32 %v2924
    %vm2931 = vweird.f32 %v2925
    %vm2932 = vmor %vm2930, %vm2931
    %v2933 = vsel %vm2932, %v2925, %v2929
    %v2934 = vand.u32 2147483647, %v2924
    %vm2935 = vcmp.eq.f32.partialorder %v2934, 8.507059e+37
    %v2936 = vand.u32 %v2924, 2147483648
    %v2937 = vor.u32 1.1754944e-38, %v2936
    %v2938 = vsel %vm2935, %v2937, %v2933
    %v2939 = vmul.f32 %v2914, %v2938
    %v2940 = vmin.f32 %v2939, 1.0
    %v2941 = vmax.f32 %v2940, -1.0
    %v2942 = vmul.f32 %v2901, %v2901
    %v2943 = vmin.f32 16.0, %v2942
    %v2944 = vmul.f32 %v2943, 2.1237322e-06
    %v2945 = vadd.f32 %v2944, 0.00028619796
    %v2946 = vmul.f32 %v2943, %v2945
    %v2947 = vadd.f32 %v2946, 0.0036580483
    %v2948 = vmul.f32 %v2943, %v2947
    %v2949 = vadd.f32 %v2948, 0.05243302
    %v2950 = vmul.f32 %v2943, %v2949
    %v2951 = vadd.f32 %v2950, 0.18741608
    %v2952 = vmul.f32 %v2943, %v2951
    %v2953 = vadd.f32 %v2952, 1.1283791
    %v2954 = vmul.f32 %v2901, %v2953
    %v2955 = vmul.f32 %v2943, 3.8918573e-05
    %v2956 = vadd.f32 %v2955, 0.001143296
    %v2957 = vmul.f32 %v2943, %v2956
    %v2958 = vadd.f32 %v2957, 0.014752088
    %v2959 = vmul.f32 %v2943, %v2958
    %v2960 = vadd.f32 %v2959, 0.112945676
    %v2961 = vmul.f32 %v2943, %v2960
    %v2962 = vadd.f32 %v2961, 0.4994258
    %v2963 = vmul.f32 %v2943, %v2962
    %v2964 = vadd.f32 %v2963, 1.0
    %v2965 = vrcp.pop %v2964
    %v2966 = vmul.f32 %v2964, %v2965
    %v2967 = vsub.f32 1.0, %v2966
    %v2968 = vmul.f32 %v2965, %v2967
    %v2969 = vadd.f32 %v2965, %v2968
    %vm2970 = vweird.f32 %v2964
    %vm2971 = vweird.f32 %v2965
    %vm2972 = vmor %vm2970, %vm2971
    %v2973 = vsel %vm2972, %v2965, %v2969
    %v2974 = vand.u32 2147483647, %v2964
    %vm2975 = vcmp.eq.f32.partialorder %v2974, 8.507059e+37
    %v2976 = vand.u32 %v2964, 2147483648
    %v2977 = vor.u32 1.1754944e-38, %v2976
    %v2978 = vsel %vm2975, %v2977, %v2973
    %v2979 = vmul.f32 %v2954, %v2978
    %v2980 = vmin.f32 %v2979, 1.0
    %v2981 = vmax.f32 %v2980, -1.0
    %v2982 = vadd.f32 %v2941, 1.0
    %v2983 = vadd.f32 %v2981, 1.0
    %v2984 = vmul.f32 %v2898, %v2982
    %v2985 = vmul.f32 %v2899, %v2983
    %s2986 = scalar_lea.vmem %s13, 192
    %v2987 = vld [vmem:[%s2986] sm:$0xff]
    %v2988 = vld [vmem:[%s2986 + $0x8] sm:$0xff]
    %v2989 = vld [vmem:[%s2986 + $0x10] sm:$0xff]
    %v2990 = vld [vmem:[%s2986 + $0x18] sm:$0xff]
    %v2991 = vld [vmem:[%s2986 + $0x20] sm:$0xff]
    %v2992 = vld [vmem:[%s2986 + $0x28] sm:$0xff]
    %v2993 = vld [vmem:[%s2986 + $0x30] sm:$0xff]
    %v2994 = vld [vmem:[%s2986 + $0x38] sm:$0xff]
    %s2995 = scalar_lea.vmem %s14, 3
    %v2996 = vld [vmem:[%s2995] sm:$0x1]
    %v2998 = vperm.slane %v2996, 0
    %v3001 = vsel %vm817, %v2984, 0
    %v3004 = vsel %vm817, %v2985, 0
    %3006 = vmatpush.msra.mxu0 0.0
    %3007 = vmatpush.msra.mxu0 0.0
    %3008 = vmatpush.msra.mxu0 0.0
    %3009 = vmatpush.msra.mxu0 0.0
    %3010 = vmatpush.msra.mxu0 0.0
    %3011 = vmatpush.msra.mxu0 0.0
    %3012 = vmatpush.msra.mxu0 0.0
    %3013 = vmatpush.msra.mxu0 0.0
    %3014 = vmatpush.msra.mxu0 %v2994
    %3015 = vmatpush.msra.mxu0 %v2993
    %3016 = vmatpush.msra.mxu0 %v2992
    %3017 = vmatpush.msra.mxu0 %v2991
    %3018 = vmatpush.msra.mxu0 %v2990
    %3019 = vmatpush.msra.mxu0 %v2989
    %3020 = vmatpush.msra.mxu0 %v2988
    %3021 = vmatpush.msra.mxu0 %v2987
    %3022 = vmatmul.f32.gmra.mxu0 %v3001
    %v3023 = vpop.f32.mrf.mxu0
    %v3024 = vadd.f32 %v2998, %v3023
    %3025 = vmatmul.f32.gmra.mxu0 %v3004
    %v3026 = vpop.f32.mrf.mxu0
    %v3027 = vadd.f32 %v2998, %v3026
    %3028 = vdwg.mxu0
    %v3029 = vadd.f32 %v3024, %v2857
    %v3030 = vadd.f32 %v3027, %v2858
    %s3031 = scalar_lea.vmem %s15, 3
    %v3032 = vld [vmem:[%s3031] sm:$0x1]
    %s3033 = scalar_lea.vmem %s16, 3
    %v3034 = vld [vmem:[%s3033] sm:$0x1]
    %v3035 = vsel %vm125, %v3029, 0.0
    %3036 = vadd.xlane.f32.xlu0 %v3035
    %v3037 = vpop.xlane.xlu0 %3036
    %v3038 = vsel %vm125, %v3030, 0.0
    %3039 = vadd.xlane.f32.xlu0 %v3038
    %v3040 = vpop.xlane.xlu0 %3039
    %v3041 = vmul.f32 %v3037, %v138
    %v3042 = vmul.f32 %v3040, %v138
    %v3043 = vsub.f32 %v3029, %v3041
    %v3044 = vsub.f32 %v3030, %v3042
    %v3045 = vmul.f32 %v3043, %v3043
    %v3046 = vmul.f32 %v3044, %v3044
    %v3047 = vsel %vm125, %v3045, 0.0
    %3048 = vadd.xlane.f32.xlu0 %v3047
    %v3049 = vpop.xlane.xlu0 %3048
    %v3050 = vsel %vm125, %v3046, 0.0
    %3051 = vadd.xlane.f32.xlu0 %v3050
    %v3052 = vpop.xlane.xlu0 %3051
    %v3053 = vmul.f32 %v3049, %v138
    %v3054 = vmul.f32 %v3052, %v138
    %v3055 = vadd.f32 %v3053, 1e-12
    %v3056 = vadd.f32 %v3054, 1e-12
    %v3057 = vrsqrt.pop %v3055
    %v3058 = vmul.f32 %v3057, %v3055
    %v3059 = vmul.f32 %v3058, %v3057
    %v3060 = vmul.f32 0.5, %v3059
    %v3061 = vsub.f32 1.5, %v3060
    %v3062 = vmul.f32 %v3057, %v3061
    %vm3063 = vweird.f32 %v3055
    %vm3064 = vweird.f32 %v3057
    %vm3065 = vmor %vm3063, %vm3064
    %v3066 = vsel %vm3065, %v3057, %v3062
    %v3067 = vrsqrt.pop %v3056
    %v3068 = vmul.f32 %v3067, %v3056
    %v3069 = vmul.f32 %v3068, %v3067
    %v3070 = vmul.f32 0.5, %v3069
    %v3071 = vsub.f32 1.5, %v3070
    %v3072 = vmul.f32 %v3067, %v3071
    %vm3073 = vweird.f32 %v3056
    %vm3074 = vweird.f32 %v3067
    %vm3075 = vmor %vm3073, %vm3074
    %v3076 = vsel %vm3075, %v3067, %v3072
    %v3077 = vmul.f32 %v3043, %v3066
    %v3078 = vmul.f32 %v3044, %v3076
    %v3080 = vperm.slane %v3032, 0
    %v3082 = vmul.f32 %v3077, %v3080
    %v3083 = vmul.f32 %v3078, %v3080
    %v3085 = vperm.slane %v3034, 0
    %v3087 = vadd.f32 %v3082, %v3085
    %v3088 = vadd.f32 %v3083, %v3085
    %v3089 = vld [vmem:[%s17] sm:$0xff]
    %v3090 = vld [vmem:[%s17 + $0x8] sm:$0xff]
    %v3091 = vld [vmem:[%s17 + $0x10] sm:$0xff]
    %v3092 = vld [vmem:[%s17 + $0x18] sm:$0xff]
    %v3093 = vld [vmem:[%s18] sm:$0xff]
    %v3094 = vld [vmem:[%s18 + $0x8] sm:$0xff]
    %v3095 = vld [vmem:[%s18 + $0x10] sm:$0xff]
    %v3096 = vld [vmem:[%s18 + $0x18] sm:$0xff]
    %3097 = vmatpush.msra.mxu0 0.0
    %3098 = vmatpush.msra.mxu0 0.0
    %3099 = vmatpush.msra.mxu0 0.0
    %3100 = vmatpush.msra.mxu0 0.0
    %3101 = vmatpush.msra.mxu0 0.0
    %3102 = vmatpush.msra.mxu0 0.0
    %3103 = vmatpush.msra.mxu0 0.0
    %3104 = vmatpush.msra.mxu0 0.0
    %3105 = vmatpush.msra.mxu0 0.0
    %3106 = vmatpush.msra.mxu0 0.0
    %3107 = vmatpush.msra.mxu0 0.0
    %3108 = vmatpush.msra.mxu0 0.0
    %3109 = vmatpush.msra.mxu0 %v3096
    %3110 = vmatpush.msra.mxu0 %v3095
    %3111 = vmatpush.msra.mxu0 %v3094
    %3112 = vmatpush.msra.mxu0 %v3093
    %3113 = vmatmul.f32.gmra.mxu0 %v1644
    %v3114 = vpop.f32.mrf.mxu0
    %v3115 = vadd.f32 0.0, %v3114
    %3116 = vmatmul.f32.gmra.mxu0 %v1647
    %v3117 = vpop.f32.mrf.mxu0
    %v3118 = vadd.f32 0.0, %v3117
    %3119 = vdwg.mxu0
    %v3121 = vsel %vm125, %v3087, 0
    %v3124 = vsel %vm125, %v3088, 0
    %3126 = vmatpush.msra.mxu0 0.0
    %3127 = vmatpush.msra.mxu0 0.0
    %3128 = vmatpush.msra.mxu0 0.0
    %3129 = vmatpush.msra.mxu0 0.0
    %3130 = vmatpush.msra.mxu0 0.0
    %3131 = vmatpush.msra.mxu0 0.0
    %3132 = vmatpush.msra.mxu0 0.0
    %3133 = vmatpush.msra.mxu0 0.0
    %3134 = vmatpush.msra.mxu0 0.0
    %3135 = vmatpush.msra.mxu0 0.0
    %3136 = vmatpush.msra.mxu0 0.0
    %3137 = vmatpush.msra.mxu0 0.0
    %3138 = vmatpush.msra.mxu0 %v3092
    %3139 = vmatpush.msra.mxu0 %v3091
    %3140 = vmatpush.msra.mxu0 %v3090
    %3141 = vmatpush.msra.mxu0 %v3089
    %3142 = vmatmul.f32.gmra.mxu0 %v3121
    %v3143 = vpop.f32.mrf.mxu0
    %v3144 = vadd.f32 %v3115, %v3143
    %3145 = vmatmul.f32.gmra.mxu0 %v3124
    %v3146 = vpop.f32.mrf.mxu0
    %v3147 = vadd.f32 %v3118, %v3146
    %3148 = vdwg.mxu0
    %v3149 = vld [vmem:[%s19] sm:$0x1]
    %v3151 = vperm.slane %v3149, 0
    %v3153 = vadd.f32 %v3144, %v3151
    %v3154 = vadd.f32 %v3147, %v3151
    %vm3155 = vcmp.ge.f32.partialorder %v3153, 0.0
    %vm3156 = vcmp.ge.f32.partialorder %v3154, 0.0
    %v3157 = vmul.f32 %v3153, 0.01
    %v3158 = vmul.f32 %v3154, 0.01
    %v3159 = vsel %vm3155, %v3153, %v3157
    %v3160 = vsel %vm3156, %v3154, %v3158
    %v3161 = vld [vmem:[%s20] sm:$0x3]
    %v3162 = vld [vmem:[%s21] sm:$0x3]
    %3164 = vset.pattern.permute.xlu0 0
    %3165 = vperm.xlu0 %3164, %v3162
    %v3166 = vpop.permute.xlu0 %3165
    %v3169 = vsel %vm817, %v3161, 0
    %v3172 = vsel %vm817, %v3159, 0
    %v3175 = vsel %vm817, %v3160, 0
    %3177 = vmatpush.xpose.msra.mxu0 0.0
    %3178 = vmatpush.xpose.msra.mxu0 0.0
    %3179 = vmatpush.xpose.msra.mxu0 0.0
    %3180 = vmatpush.xpose.msra.mxu0 0.0
    %3181 = vmatpush.xpose.msra.mxu0 0.0
    %3182 = vmatpush.xpose.msra.mxu0 0.0
    %3183 = vmatpush.xpose.msra.mxu0 0.0
    %3184 = vmatpush.xpose.msra.mxu0 0.0
    %3185 = vmatpush.xpose.msra.mxu0 0.0
    %3186 = vmatpush.xpose.msra.mxu0 0.0
    %3187 = vmatpush.xpose.msra.mxu0 0.0
    %3188 = vmatpush.xpose.msra.mxu0 0.0
    %3189 = vmatpush.xpose.msra.mxu0 0.0
    %3190 = vmatpush.xpose.msra.mxu0 0.0
    %3191 = vmatpush.xpose.msra.mxu0 %v3175
    %3192 = vmatpush.xpose.msra.mxu0 %v3172
    %3193 = vmatmul.f32.gmra.mxu0 %v3169
    %v3194 = vpop.f32.mrf.mxu0
    %v3195 = vadd.f32 %v3166, %v3194
    %3196 = vdwg.mxu0
    %vm3197 = vcmask 123904
    %3198 = vst.msk [vmem:[%s22] sm:$0x3] %vm3197, %v3195
    // Predicated region
    $region98: #{bert_qa_forward.1} parent=1 // pred_check
      _
    $region99: #{bert_qa_forward.1} parent=1 // pred_check_branch
      %3200 = sbr.rel (0) target = $region101
    $region100: #{bert_qa_forward.1} parent=1 // pred_region
      _
    $region101: #{bert_qa_forward.1} parent=1 // pred_fallthru
      _
    // Predicated region
    $region102: #{bert_qa_forward.1} parent=1 // pred_check
      _
    $region103: #{bert_qa_forward.1} parent=1 // pred_check_branch
      %3202 = sbr.rel (0) target = $region105
    $region104: #{bert_qa_forward.1} parent=1 // pred_region
      _
    $region105: #{bert_qa_forward.1} parent=1 // pred_fallthru
      _
    %3203 = vsyncpa [#allocation3], 1
    %3204 = vsyncpa [#allocation5], 1

</llo_original>
